<compile_context>
chip_gen: v5e
topology: v5e:2x2
jax: 0.10.0
libtpu: 0.0.40
codegen_flags: <defaults>
</compile_context>

<pallas_src>
import functools
import math

import jax
import jax.numpy as jnp
from jax import lax
from jax.experimental import pallas as pl
from jax.experimental.pallas import tpu as pltpu

LRELU_SLOPE = 0.2
ACT_SCALE = math.sqrt(2.0)  # FusedLeakyReLU scale
LANE = 128


def _round_up(x, m):
    return ((x + m - 1) // m) * m


# ----------------------------------------------------------------------------
# Kernel 1: first layer (1x1 EqualConv2d + FusedLeakyReLU) as a channel matmul.
#   y = (x @ w) * w_scale + b ; y = leaky_relu(y, 0.2) * sqrt(2)
# Scale is applied to the (tm, coutp) result, output channels are lane-dense.
# ----------------------------------------------------------------------------
def _mm_bias_lrelu_kernel(x_ref, w_ref, b_ref, o_ref, *, w_scale):
    y = jnp.dot(x_ref[...], w_ref[...], preferred_element_type=jnp.float32)
    y = y * w_scale + b_ref[...]
    y = jnp.where(y >= 0.0, y, y * LRELU_SLOPE) * ACT_SCALE
    o_ref[...] = y.astype(o_ref.dtype)


def first_layer(x2d, w2d_p, bias_p, w_scale):
    M, K = x2d.shape
    _, coutp = w2d_p.shape
    tm = next((t for t in (512, 256, 128, 64, 32, 16, 8) if M % t == 0), None)
    if tm is None:  # generic fallback (not hit for this module's shapes)
        tm = 256
        m_pad = _round_up(M, tm)
        x2d = jnp.pad(x2d, ((0, m_pad - M), (0, 0)))
    else:
        m_pad = M

    out = pl.pallas_call(
        functools.partial(_mm_bias_lrelu_kernel, w_scale=float(w_scale)),
        out_shape=jax.ShapeDtypeStruct((m_pad, coutp), jnp.bfloat16),
        grid=(m_pad // tm,),
        in_specs=[
            pl.BlockSpec((tm, K), lambda i: (i, 0)),
            pl.BlockSpec((K, coutp), lambda i: (0, 0)),
            pl.BlockSpec((1, coutp), lambda i: (0, 0)),
        ],
        out_specs=pl.BlockSpec((tm, coutp), lambda i: (i, 0)),
        compiler_params=pltpu.CompilerParams(dimension_semantics=("parallel",)),
    )(x2d.astype(jnp.float32), w2d_p.astype(jnp.float32),
      bias_p.reshape(1, coutp).astype(jnp.float32))
    return out[:M] if m_pad != M else out


# ----------------------------------------------------------------------------
# Kernel 2: fused downsample stage.
# Input is the blur-padded activation split into 4 polyphase (row/col parity)
# fields:  xq[b, 2a+c, r, m, ch] = pad(x)[b, 2r+a, 2m+c, ch].
# Per grid step (batch b, row-tile t) the kernel:
#   * loads T parity-rows (+ a 2-row halo block) of all 4 fields,
#   * separable [1,3,3,1]/8 blur (horizontal then vertical) entirely on
#     unit-stride slices,
#   * stride-2 3x3 conv as 9 MXU dots accumulated in f32,
#   * scale + bias + leaky_relu*sqrt(2), bf16 lane-dense store.
# ----------------------------------------------------------------------------
def _down_kernel(xm_ref, xh_ref, w_ref, b_ref, o_ref, *, T, wo, w_scale, taps):
    k0, k1, k2, k3 = taps

    def field(a, c):
        p = 2 * a + c
        main = xm_ref[0, p]          # (T, wo+2, C)
        halo = xh_ref[0, p]          # (2, wo+2, C)
        return jnp.concatenate([main, halo], axis=0).astype(jnp.float32)

    x_ee = field(0, 0)   # even padded rows, even padded cols
    x_eo = field(0, 1)
    x_oe = field(1, 0)
    x_oo = field(1, 1)

    def hblur(xe, xo):
        # blur along width; outputs at even (wo+1) and odd (wo) blurred columns
        he = (k0 * xe[:, 0:wo + 1] + k1 * xo[:, 0:wo + 1]
              + k2 * xe[:, 1:wo + 2] + k3 * xo[:, 1:wo + 2])
        hod = (k0 * xo[:, 0:wo] + k1 * xe[:, 1:wo + 1]
               + k2 * xo[:, 1:wo + 1] + k3 * xe[:, 2:wo + 2])
        return he, hod

    h_ee, h_eo = hblur(x_ee, x_eo)   # even input rows
    h_oe, h_oo = hblur(x_oe, x_oo)   # odd input rows

    # blur along height; outputs at even (T+1) and odd (T) blurred rows
    v_ee = k0 * h_ee[0:T + 1] + k1 * h_oe[0:T + 1] + k2 * h_ee[1:T + 2] + k3 * h_oe[1:T + 2]
    v_eo = k0 * h_eo[0:T + 1] + k1 * h_oo[0:T + 1] + k2 * h_eo[1:T + 2] + k3 * h_oo[1:T + 2]
    v_oe = k0 * h_oe[0:T] + k1 * h_ee[1:T + 1] + k2 * h_oe[1:T + 1] + k3 * h_ee[2:T + 2]
    v_oo = k0 * h_oo[0:T] + k1 * h_eo[1:T + 1] + k2 * h_oo[1:T + 1] + k3 * h_eo[2:T + 2]

    C = x_ee.shape[-1]
    coutp = o_ref.shape[-1]

    def tap_dot(v, idx):
        p = v.reshape(T * wo, C).astype(jnp.bfloat16)
        return jnp.dot(p, w_ref[idx], preferred_element_type=jnp.float32)

    # conv taps (dy, dx): dy/dx = 0 -> even, 1 -> odd, 2 -> even shifted by 1
    acc = tap_dot(v_ee[0:T, 0:wo], 0)
    acc = acc + tap_dot(v_eo[0:T, 0:wo], 1)
    acc = acc + tap_dot(v_ee[0:T, 1:wo + 1], 2)
    acc = acc + tap_dot(v_oe[:, 0:wo], 3)
    acc = acc + tap_dot(v_oo, 4)
    acc = acc + tap_dot(v_oe[:, 1:wo + 1], 5)
    acc = acc + tap_dot(v_ee[1:T + 1, 0:wo], 6)
    acc = acc + tap_dot(v_eo[1:T + 1, 0:wo], 7)
    acc = acc + tap_dot(v_ee[1:T + 1, 1:wo + 1], 8)

    y = acc * w_scale + b_ref[...]
    y = jnp.where(y >= 0.0, y, y * LRELU_SLOPE) * ACT_SCALE
    o_ref[0] = y.reshape(T, wo, coutp).astype(o_ref.dtype)


def _pick_tile_rows(ho, wo, cin_p, cout_p, budget=6 * 1024 * 1024):
    cands = [t for t in (8, 4, 2) if ho % t == 0]
    assert cands, f"unsupported output height {ho}"
    for t in cands:
        est = (10 * (t + 2) * (wo + 2) * cin_p * 4      # parity/blur f32 intermediates
               + 2 * t * wo * cout_p * 4                # accumulator
               + 9 * cin_p * cout_p * 2)                # resident bf16 weights
        if est <= budget:
            return t
    return cands[-1]


def downsample_stage(a, w, bias, cin_true, blur_1d=(1.0, 3.0, 3.0, 1.0)):
    n, H, W, Cp = a.shape
    assert H % 2 == 0 and W % 2 == 0
    ho, wo = H // 2, W // 2
    Hp2, Wp2 = ho + 2, wo + 2
    cout, cin = w.shape[0], w.shape[1]
    coutp = _round_up(cout, LANE)

    # pad + polyphase split: xq[b, 2a+c, r, m, ch] = pad(a)[b, 2r+a, 2m+c, ch]
    xp = jnp.pad(a, ((0, 0), (2, 2), (2, 2), (0, 0)))
    xq = (xp.reshape(n, Hp2, 2, Wp2, 2, Cp)
            .transpose(0, 2, 4, 1, 3, 5)
            .reshape(n, 4, Hp2, Wp2, Cp)
            .astype(jnp.bfloat16))

    # weights -> (9, Cp, coutp) bf16 (zero-padded in/out channels), f32 bias
    w_t = jnp.transpose(w, (2, 3, 1, 0))                         # (3,3,cin,cout)
    w_t = jnp.pad(w_t, ((0, 0), (0, 0), (0, Cp - cin), (0, coutp - cout)))
    w9 = w_t.reshape(9, Cp, coutp).astype(jnp.bfloat16)
    b_p = jnp.pad(bias, (0, coutp - cout)).reshape(1, coutp).astype(jnp.float32)

    s = float(sum(blur_1d))
    taps = tuple(float(v) / s for v in blur_1d)                  # separable /8 taps

    T = _pick_tile_rows(ho, wo, Cp, coutp)
    kernel = functools.partial(
        _down_kernel, T=T, wo=wo,
        w_scale=1.0 / math.sqrt(cin_true * 9), taps=taps)

    return pl.pallas_call(
        kernel,
        out_shape=jax.ShapeDtypeStruct((n, ho, wo, coutp), jnp.bfloat16),
        grid=(n, ho // T),
        in_specs=[
            # main row tile: parity-field rows [t*T, t*T+T)
            pl.BlockSpec((1, 4, T, Wp2, Cp), lambda b, t: (b, 0, t, 0, 0)),
            # 2-row halo: parity-field rows [t*T+T, t*T+T+2)
            pl.BlockSpec((1, 4, 2, Wp2, Cp),
                         lambda b, t: (b, 0, (T // 2) * (t + 1), 0, 0)),
            pl.BlockSpec((9, Cp, coutp), lambda b, t: (0, 0, 0)),
            pl.BlockSpec((1, coutp), lambda b, t: (0, 0)),
        ],
        out_specs=pl.BlockSpec((1, T, wo, coutp), lambda b, t: (b, t, 0, 0)),
        compiler_params=pltpu.CompilerParams(
            dimension_semantics=("parallel", "parallel")),
    )(xq, xq, w9, b_p)


# ----------------------------------------------------------------------------
# Parameters (deterministic synthetic init, PyTorch-style shapes).
# EqualConv2d: weight ~ N(0,1), no conv bias (activate=True).
# FusedLeakyReLU: per-channel bias (zeros in PyTorch; small random here).
# ----------------------------------------------------------------------------
def init_params(key, size, input_dim, channels):
    log_size = int(math.log(size, 2))
    n_convs = max(log_size - 4, 0)
    keys = jax.random.split(key, 2 + 2 * n_convs)
    ki = iter(keys)
    c0 = channels[size]
    params = {
        "first": (
            jax.random.normal(next(ki), (c0, input_dim, 1, 1), jnp.float32),
            0.1 * jax.random.normal(next(ki), (c0,), jnp.float32),
        )
    }
    convs = []
    in_ch = c0
    for i in range(log_size - 1, 3, -1):
        out_ch = channels[2 ** i]
        convs.append((
            jax.random.normal(next(ki), (out_ch, in_ch, 3, 3), jnp.float32),
            0.1 * jax.random.normal(next(ki), (out_ch,), jnp.float32),
        ))
        in_ch = out_ch
    params["convs"] = convs
    return params


# ----------------------------------------------------------------------------
# Encoder_wiflow forward (recoder=None path).
# Channels are carried padded to a multiple of 128 (padded channels are exact
# zeros) and sliced back once at the end.
# ----------------------------------------------------------------------------
def encoder_wiflow_forward(x_nchw, params):
    x = jnp.transpose(x_nchw, (0, 2, 3, 1)).astype(jnp.float32)  # NCHW -> NHWC
    n, h, wd, cin = x.shape

    # first: 1x1 EqualConv2d + FusedLeakyReLU (channel matmul)
    w, b = params["first"]
    cout = w.shape[0]
    coutp = _round_up(cout, LANE)
    w2d = jnp.pad(w[:, :, 0, 0].T, ((0, 0), (0, coutp - cout)))  # (cin, coutp)
    b_p = jnp.pad(b, (0, coutp - cout))
    y2d = first_layer(x.reshape(n * h * wd, cin), w2d, b_p,
                      w_scale=1.0 / math.sqrt(cin))
    out = y2d.reshape(n, h, wd, coutp)
    true_c = cout

    # downsample stages: fused Blur -> 3x3/s2 EqualConv2d -> FusedLeakyReLU
    for (w, b) in params["convs"]:
        out = downsample_stage(out, w, b, cin_true=w.shape[1])
        true_c = w.shape[0]

    out = out[..., :true_c].astype(jnp.float32)
    return jnp.transpose(out, (0, 3, 1, 2))  # back to NCHW


# ----------------------------------------------------------------------------
# Plain-JAX f32 reference (lax.conv) for correctness checking.
# ----------------------------------------------------------------------------
def reference_forward(x_nchw, params):
    x = jnp.transpose(x_nchw, (0, 2, 3, 1)).astype(jnp.float32)

    def act(y, b):
        y = y + b.reshape(1, 1, 1, -1)
        return jnp.where(y >= 0, y, LRELU_SLOPE * y) * ACT_SCALE

    w, b = params["first"]
    y = lax.conv_general_dilated(
        x, jnp.transpose(w, (2, 3, 1, 0)) * (1.0 / math.sqrt(w.shape[1])),
        (1, 1), "VALID", dimension_numbers=("NHWC", "HWIO", "NHWC"))
    y = act(y, b)

    k1 = jnp.array([1.0, 3.0, 3.0, 1.0], jnp.float32)
    bk = jnp.outer(k1, k1)
    bk = bk / jnp.sum(bk)
    for (w, b) in params["convs"]:
        c = y.shape[-1]
        dw = jnp.tile(bk[:, :, None, None], (1, 1, 1, c))
        y = lax.conv_general_dilated(
            y, dw, (1, 1), ((2, 2), (2, 2)),
            dimension_numbers=("NHWC", "HWIO", "NHWC"), feature_group_count=c)
        y = lax.conv_general_dilated(
            y, jnp.transpose(w, (2, 3, 1, 0)) * (1.0 / math.sqrt(w.shape[1] * 9)),
            (2, 2), "VALID", dimension_numbers=("NHWC", "HWIO", "NHWC"))
        y = act(y, b)
    return jnp.transpose(y, (0, 3, 1, 2))


if __name__ == "__main__":
    # Small shapes consistent with the module: size=32 => one downsample stage.
    size = 32
    input_dim = 4
    channels = {32: 16, 16: 32}

    key = jax.random.PRNGKey(0)
    kx, kp = jax.random.split(key)
    x = jax.random.normal(kx, (2, input_dim, size, size), jnp.float32)  # NCHW
    params = init_params(kp, size, input_dim, channels)

    fwd = jax.jit(encoder_wiflow_forward)
    out = jax.block_until_ready(fwd(x, params))
    assert out.shape == (2, channels[16], 16, 16), out.shape

    ref = reference_forward(x, params)
    max_err = float(jnp.max(jnp.abs(out - ref)))
    denom = max(1.0, float(jnp.max(jnp.abs(ref))))
    # bf16 activations/weights with f32 accumulation => relative-to-max tolerance
    assert max_err < 3e-2 * denom, f"max abs err {max_err} (ref max {denom})"

    print("KERNEL_OK")
</pallas_src>

<mosaic_0001>
module attributes {stable_mosaic.version = 11 : i64} {
  func.func @_mm_bias_lrelu_kernel(%arg0: i32, %arg1: memref<512x4xf32, #tpu.memory_space<vmem>>, %arg2: memref<4x128xf32, #tpu.memory_space<vmem>>, %arg3: memref<1x128xf32, #tpu.memory_space<vmem>>, %arg4: memref<512x128xbf16, #tpu.memory_space<vmem>>) attributes {dimension_semantics = [#tpu.dimension_semantics<parallel>], iteration_bounds = array<i64: 4>, scalar_prefetch = 0 : i64, scratch_operands = 0 : i64, tpu.core_type = #tpu.core_type<tc>, window_params = [{transform_indices = @transform_0, window_bounds = array<i64: 512, 4>}, {pipeline_mode = #tpu.pipeline_mode<synchronous>, transform_indices = @transform_1, window_bounds = array<i64: 4, 128>}, {pipeline_mode = #tpu.pipeline_mode<synchronous>, transform_indices = @transform_2, window_bounds = array<i64: 1, 128>}, {transform_indices = @transform_3, window_bounds = array<i64: 512, 128>}]} {
    %c0 = arith.constant 0 : index
    %c0_0 = arith.constant 0 : index
    %0 = vector.load %arg1[%c0, %c0_0] : memref<512x4xf32, #tpu.memory_space<vmem>>, vector<512x4xf32>
    %c0_1 = arith.constant 0 : index
    %c0_2 = arith.constant 0 : index
    %1 = vector.load %arg2[%c0_1, %c0_2] : memref<4x128xf32, #tpu.memory_space<vmem>>, vector<4x128xf32>
    %cst = arith.constant dense<0.000000e+00> : vector<512x128xf32>
    %2 = tpu.matmul %0, %1, %cst {dimension_numbers = #tpu.dot_dimension_numbers<[1], [0], [0], [1], [0, 0, 1, 1], [], []>} : vector<512x4xf32>, vector<4x128xf32>, vector<512x128xf32> -> vector<512x128xf32>
    %cst_3 = arith.constant 5.000000e-01 : f32
    %3 = vector.broadcast %cst_3 : f32 to vector<512x128xf32>
    %4 = arith.mulf %2, %3 : vector<512x128xf32>
    %c0_4 = arith.constant 0 : index
    %c0_5 = arith.constant 0 : index
    %5 = vector.load %arg3[%c0_4, %c0_5] : memref<1x128xf32, #tpu.memory_space<vmem>>, vector<1x128xf32>
    %6 = vector.broadcast %5 : vector<1x128xf32> to vector<512x128xf32>
    %7 = arith.addf %4, %6 : vector<512x128xf32>
    %cst_6 = arith.constant 0.000000e+00 : f32
    %8 = vector.broadcast %cst_6 : f32 to vector<512x128xf32>
    %9 = arith.cmpf oge, %7, %8 : vector<512x128xf32>
    %cst_7 = arith.constant 2.000000e-01 : f32
    %10 = vector.broadcast %cst_7 : f32 to vector<512x128xf32>
    %11 = arith.mulf %7, %10 : vector<512x128xf32>
    %12 = arith.select %9, %7, %11 : vector<512x128xi1>, vector<512x128xf32>
    %cst_8 = arith.constant 1.41421354 : f32
    %13 = vector.broadcast %cst_8 : f32 to vector<512x128xf32>
    %14 = arith.mulf %12, %13 : vector<512x128xf32>
    %15 = arith.truncf %14 : vector<512x128xf32> to vector<512x128xbf16>
    %c0_9 = arith.constant 0 : index
    %c0_10 = arith.constant 0 : index
    %16 = vector.load %arg4[%c0_9, %c0_10] : memref<512x128xbf16, #tpu.memory_space<vmem>>, vector<512x128xbf16>
    tpu.vector_store %arg4[%c0_9, %c0_10], %15 {strides = array<i32>} : memref<512x128xbf16, #tpu.memory_space<vmem>>, vector<512x128xbf16>,
    return
  }
  func.func @transform_0(%arg0: i32) -> (i32, i32) {
    %c0_i32 = arith.constant 0 : i32
    %c0_i32_0 = arith.constant 0 : i32
    return %arg0, %c0_i32 : i32, i32
  }
  func.func @transform_1(%arg0: i32) -> (i32, i32) {
    %c0_i32 = arith.constant 0 : i32
    %c0_i32_0 = arith.constant 0 : i32
    %c0_i32_1 = arith.constant 0 : i32
    return %c0_i32, %c0_i32_0 : i32, i32
  }
  func.func @transform_2(%arg0: i32) -> (i32, i32) {
    %c0_i32 = arith.constant 0 : i32
    %c0_i32_0 = arith.constant 0 : i32
    %c0_i32_1 = arith.constant 0 : i32
    return %c0_i32, %c0_i32_0 : i32, i32
  }
  func.func @transform_3(%arg0: i32) -> (i32, i32) {
    %c0_i32 = arith.constant 0 : i32
    %c0_i32_0 = arith.constant 0 : i32
    return %arg0, %c0_i32 : i32, i32
  }
}

module attributes {stable_mosaic.version = 11 : i64} {
  func.func @_down_kernel(%arg0: i32, %arg1: i32, %arg2: memref<1x4x8x18x128xbf16, #tpu.memory_space<vmem>>, %arg3: memref<1x4x2x18x128xbf16, #tpu.memory_space<vmem>>, %arg4: memref<9x128x128xbf16, #tpu.memory_space<vmem>>, %arg5: memref<1x128xf32, #tpu.memory_space<vmem>>, %arg6: memref<1x8x16x128xbf16, #tpu.memory_space<vmem>>) attributes {dimension_semantics = [#tpu.dimension_semantics<parallel>, #tpu.dimension_semantics<parallel>], iteration_bounds = array<i64: 2, 2>, scalar_prefetch = 0 : i64, scratch_operands = 0 : i64, tpu.core_type = #tpu.core_type<tc>, window_params = [{transform_indices = @transform_0, window_bounds = array<i64: 1, 4, 8, 18, 128>}, {transform_indices = @transform_1, window_bounds = array<i64: 1, 4, 2, 18, 128>}, {pipeline_mode = #tpu.pipeline_mode<synchronous>, transform_indices = @transform_2, window_bounds = array<i64: 9, 128, 128>}, {pipeline_mode = #tpu.pipeline_mode<synchronous>, transform_indices = @transform_3, window_bounds = array<i64: 1, 128>}, {transform_indices = @transform_4, window_bounds = array<i64: 1, 8, 16, 128>}]} {
    %c0 = arith.constant 0 : index
    %c0_0 = arith.constant 0 : index
    %c0_1 = arith.constant 0 : index
    %c0_2 = arith.constant 0 : index
    %c0_3 = arith.constant 0 : index
    %0 = vector.load %arg2[%c0, %c0_0, %c0_1, %c0_2, %c0_3] : memref<1x4x8x18x128xbf16, #tpu.memory_space<vmem>>, vector<1x1x8x18x128xbf16>
    %1 = vector.shape_cast %0 : vector<1x1x8x18x128xbf16> to vector<8x18x128xbf16>
    %c0_4 = arith.constant 0 : index
    %c0_5 = arith.constant 0 : index
    %c0_6 = arith.constant 0 : index
    %c0_7 = arith.constant 0 : index
    %c0_8 = arith.constant 0 : index
    %2 = vector.load %arg3[%c0_4, %c0_5, %c0_6, %c0_7, %c0_8] : memref<1x4x2x18x128xbf16, #tpu.memory_space<vmem>>, vector<1x1x2x18x128xbf16>
    %3 = vector.shape_cast %2 : vector<1x1x2x18x128xbf16> to vector<2x18x128xbf16>
    %4 = tpu.concatenate %1, %3 in 0 : vector<8x18x128xbf16>, vector<2x18x128xbf16> -> vector<10x18x128xbf16>
    %5 = arith.extf %4 : vector<10x18x128xbf16> to vector<10x18x128xf32>
    %c0_9 = arith.constant 0 : index
    %c1 = arith.constant 1 : index
    %c0_10 = arith.constant 0 : index
    %c0_11 = arith.constant 0 : index
    %c0_12 = arith.constant 0 : index
    %6 = vector.load %arg2[%c0_9, %c1, %c0_10, %c0_11, %c0_12] : memref<1x4x8x18x128xbf16, #tpu.memory_space<vmem>>, vector<1x1x8x18x128xbf16>
    %7 = vector.shape_cast %6 : vector<1x1x8x18x128xbf16> to vector<8x18x128xbf16>
    %c0_13 = arith.constant 0 : index
    %c1_14 = arith.constant 1 : index
    %c0_15 = arith.constant 0 : index
    %c0_16 = arith.constant 0 : index
    %c0_17 = arith.constant 0 : index
    %8 = vector.load %arg3[%c0_13, %c1_14, %c0_15, %c0_16, %c0_17] : memref<1x4x2x18x128xbf16, #tpu.memory_space<vmem>>, vector<1x1x2x18x128xbf16>
    %9 = vector.shape_cast %8 : vector<1x1x2x18x128xbf16> to vector<2x18x128xbf16>
    %10 = tpu.concatenate %7, %9 in 0 : vector<8x18x128xbf16>, vector<2x18x128xbf16> -> vector<10x18x128xbf16>
    %11 = arith.extf %10 : vector<10x18x128xbf16> to vector<10x18x128xf32>
    %c0_18 = arith.constant 0 : index
    %c2 = arith.constant 2 : index
    %c0_19 = arith.constant 0 : index
    %c0_20 = arith.constant 0 : index
    %c0_21 = arith.constant 0 : index
    %12 = vector.load %arg2[%c0_18, %c2, %c0_19, %c0_20, %c0_21] : memref<1x4x8x18x128xbf16, #tpu.memory_space<vmem>>, vector<1x1x8x18x128xbf16>
    %13 = vector.shape_cast %12 : vector<1x1x8x18x128xbf16> to vector<8x18x128xbf16>
    %c0_22 = arith.constant 0 : index
    %c2_23 = arith.constant 2 : index
    %c0_24 = arith.constant 0 : index
    %c0_25 = arith.constant 0 : index
    %c0_26 = arith.constant 0 : index
    %14 = vector.load %arg3[%c0_22, %c2_23, %c0_24, %c0_25, %c0_26] : memref<1x4x2x18x128xbf16, #tpu.memory_space<vmem>>, vector<1x1x2x18x128xbf16>
    %15 = vector.shape_cast %14 : vector<1x1x2x18x128xbf16> to vector<2x18x128xbf16>
    %16 = tpu.concatenate %13, %15 in 0 : vector<8x18x128xbf16>, vector<2x18x128xbf16> -> vector<10x18x128xbf16>
    %17 = arith.extf %16 : vector<10x18x128xbf16> to vector<10x18x128xf32>
    %c0_27 = arith.constant 0 : index
    %c3 = arith.constant 3 : index
    %c0_28 = arith.constant 0 : index
    %c0_29 = arith.constant 0 : index
    %c0_30 = arith.constant 0 : index
    %18 = vector.load %arg2[%c0_27, %c3, %c0_28, %c0_29, %c0_30] : memref<1x4x8x18x128xbf16, #tpu.memory_space<vmem>>, vector<1x1x8x18x128xbf16>
    %19 = vector.shape_cast %18 : vector<1x1x8x18x128xbf16> to vector<8x18x128xbf16>
    %c0_31 = arith.constant 0 : index
    %c3_32 = arith.constant 3 : index
    %c0_33 = arith.constant 0 : index
    %c0_34 = arith.constant 0 : index
    %c0_35 = arith.constant 0 : index
    %20 = vector.load %arg3[%c0_31, %c3_32, %c0_33, %c0_34, %c0_35] : memref<1x4x2x18x128xbf16, #tpu.memory_space<vmem>>, vector<1x1x2x18x128xbf16>
    %21 = vector.shape_cast %20 : vector<1x1x2x18x128xbf16> to vector<2x18x128xbf16>
    %22 = tpu.concatenate %19, %21 in 0 : vector<8x18x128xbf16>, vector<2x18x128xbf16> -> vector<10x18x128xbf16>
    %23 = arith.extf %22 : vector<10x18x128xbf16> to vector<10x18x128xf32>
    %24 = vector.extract_strided_slice %5 {offsets = [0, 0, 0], sizes = [10, 17, 128], strides = [1, 1, 1]} : vector<10x18x128xf32> to vector<10x17x128xf32>
    %cst = arith.constant 1.250000e-01 : f32
    %25 = vector.broadcast %cst : f32 to vector<10x17x128xf32>
    %26 = arith.mulf %25, %24 : vector<10x17x128xf32>
    %27 = vector.extract_strided_slice %11 {offsets = [0, 0, 0], sizes = [10, 17, 128], strides = [1, 1, 1]} : vector<10x18x128xf32> to vector<10x17x128xf32>
    %cst_36 = arith.constant 3.750000e-01 : f32
    %28 = vector.broadcast %cst_36 : f32 to vector<10x17x128xf32>
    %29 = arith.mulf %28, %27 : vector<10x17x128xf32>
    %30 = arith.addf %26, %29 : vector<10x17x128xf32>
    %31 = vector.extract_strided_slice %5 {offsets = [0, 1, 0], sizes = [10, 17, 128], strides = [1, 1, 1]} : vector<10x18x128xf32> to vector<10x17x128xf32>
    %cst_37 = arith.constant 3.750000e-01 : f32
    %32 = vector.broadcast %cst_37 : f32 to vector<10x17x128xf32>
    %33 = arith.mulf %32, %31 : vector<10x17x128xf32>
    %34 = arith.addf %30, %33 : vector<10x17x128xf32>
    %35 = vector.extract_strided_slice %11 {offsets = [0, 1, 0], sizes = [10, 17, 128], strides = [1, 1, 1]} : vector<10x18x128xf32> to vector<10x17x128xf32>
    %cst_38 = arith.constant 1.250000e-01 : f32
    %36 = vector.broadcast %cst_38 : f32 to vector<10x17x128xf32>
    %37 = arith.mulf %36, %35 : vector<10x17x128xf32>
    %38 = arith.addf %34, %37 : vector<10x17x128xf32>
    %39 = vector.extract_strided_slice %11 {offsets = [0, 0, 0], sizes = [10, 16, 128], strides = [1, 1, 1]} : vector<10x18x128xf32> to vector<10x16x128xf32>
    %cst_39 = arith.constant 1.250000e-01 : f32
    %40 = vector.broadcast %cst_39 : f32 to vector<10x16x128xf32>
    %41 = arith.mulf %40, %39 : vector<10x16x128xf32>
    %42 = vector.extract_strided_slice %5 {offsets = [0, 1, 0], sizes = [10, 16, 128], strides = [1, 1, 1]} : vector<10x18x128xf32> to vector<10x16x128xf32>
    %cst_40 = arith.constant 3.750000e-01 : f32
    %43 = vector.broadcast %cst_40 : f32 to vector<10x16x128xf32>
    %44 = arith.mulf %43, %42 : vector<10x16x128xf32>
    %45 = arith.addf %41, %44 : vector<10x16x128xf32>
    %46 = vector.extract_strided_slice %11 {offsets = [0, 1, 0], sizes = [10, 16, 128], strides = [1, 1, 1]} : vector<10x18x128xf32> to vector<10x16x128xf32>
    %cst_41 = arith.constant 3.750000e-01 : f32
    %47 = vector.broadcast %cst_41 : f32 to vector<10x16x128xf32>
    %48 = arith.mulf %47, %46 : vector<10x16x128xf32>
    %49 = arith.addf %45, %48 : vector<10x16x128xf32>
    %50 = vector.extract_strided_slice %5 {offsets = [0, 2, 0], sizes = [10, 16, 128], strides = [1, 1, 1]} : vector<10x18x128xf32> to vector<10x16x128xf32>
    %cst_42 = arith.constant 1.250000e-01 : f32
    %51 = vector.broadcast %cst_42 : f32 to vector<10x16x128xf32>
    %52 = arith.mulf %51, %50 : vector<10x16x128xf32>
    %53 = arith.addf %49, %52 : vector<10x16x128xf32>
    %54 = vector.extract_strided_slice %17 {offsets = [0, 0, 0], sizes = [10, 17, 128], strides = [1, 1, 1]} : vector<10x18x128xf32> to vector<10x17x128xf32>
    %cst_43 = arith.constant 1.250000e-01 : f32
    %55 = vector.broadcast %cst_43 : f32 to vector<10x17x128xf32>
    %56 = arith.mulf %55, %54 : vector<10x17x128xf32>
    %57 = vector.extract_strided_slice %23 {offsets = [0, 0, 0], sizes = [10, 17, 128], strides = [1, 1, 1]} : vector<10x18x128xf32> to vector<10x17x128xf32>
    %cst_44 = arith.constant 3.750000e-01 : f32
    %58 = vector.broadcast %cst_44 : f32 to vector<10x17x128xf32>
    %59 = arith.mulf %58, %57 : vector<10x17x128xf32>
    %60 = arith.addf %56, %59 : vector<10x17x128xf32>
    %61 = vector.extract_strided_slice %17 {offsets = [0, 1, 0], sizes = [10, 17, 128], strides = [1, 1, 1]} : vector<10x18x128xf32> to vector<10x17x128xf32>
    %cst_45 = arith.constant 3.750000e-01 : f32
    %62 = vector.broadcast %cst_45 : f32 to vector<10x17x128xf32>
    %63 = arith.mulf %62, %61 : vector<10x17x128xf32>
    %64 = arith.addf %60, %63 : vector<10x17x128xf32>
    %65 = vector.extract_strided_slice %23 {offsets = [0, 1, 0], sizes = [10, 17, 128], strides = [1, 1, 1]} : vector<10x18x128xf32> to vector<10x17x128xf32>
    %cst_46 = arith.constant 1.250000e-01 : f32
    %66 = vector.broadcast %cst_46 : f32 to vector<10x17x128xf32>
    %67 = arith.mulf %66, %65 : vector<10x17x128xf32>
    %68 = arith.addf %64, %67 : vector<10x17x128xf32>
    %69 = vector.extract_strided_slice %23 {offsets = [0, 0, 0], sizes = [10, 16, 128], strides = [1, 1, 1]} : vector<10x18x128xf32> to vector<10x16x128xf32>
    %cst_47 = arith.constant 1.250000e-01 : f32
    %70 = vector.broadcast %cst_47 : f32 to vector<10x16x128xf32>
    %71 = arith.mulf %70, %69 : vector<10x16x128xf32>
    %72 = vector.extract_strided_slice %17 {offsets = [0, 1, 0], sizes = [10, 16, 128], strides = [1, 1, 1]} : vector<10x18x128xf32> to vector<10x16x128xf32>
    %cst_48 = arith.constant 3.750000e-01 : f32
    %73 = vector.broadcast %cst_48 : f32 to vector<10x16x128xf32>
    %74 = arith.mulf %73, %72 : vector<10x16x128xf32>
    %75 = arith.addf %71, %74 : vector<10x16x128xf32>
    %76 = vector.extract_strided_slice %23 {offsets = [0, 1, 0], sizes = [10, 16, 128], strides = [1, 1, 1]} : vector<10x18x128xf32> to vector<10x16x128xf32>
    %cst_49 = arith.constant 3.750000e-01 : f32
    %77 = vector.broadcast %cst_49 : f32 to vector<10x16x128xf32>
    %78 = arith.mulf %77, %76 : vector<10x16x128xf32>
    %79 = arith.addf %75, %78 : vector<10x16x128xf32>
    %80 = vector.extract_strided_slice %17 {offsets = [0, 2, 0], sizes = [10, 16, 128], strides = [1, 1, 1]} : vector<10x18x128xf32> to vector<10x16x128xf32>
    %cst_50 = arith.constant 1.250000e-01 : f32
    %81 = vector.broadcast %cst_50 : f32 to vector<10x16x128xf32>
    %82 = arith.mulf %81, %80 : vector<10x16x128xf32>
    %83 = arith.addf %79, %82 : vector<10x16x128xf32>
    %84 = vector.extract_strided_slice %38 {offsets = [0, 0, 0], sizes = [9, 17, 128], strides = [1, 1, 1]} : vector<10x17x128xf32> to vector<9x17x128xf32>
    %cst_51 = arith.constant 1.250000e-01 : f32
    %85 = vector.broadcast %cst_51 : f32 to vector<9x17x128xf32>
    %86 = arith.mulf %85, %84 : vector<9x17x128xf32>
    %87 = vector.extract_strided_slice %68 {offsets = [0, 0, 0], sizes = [9, 17, 128], strides = [1, 1, 1]} : vector<10x17x128xf32> to vector<9x17x128xf32>
    %cst_52 = arith.constant 3.750000e-01 : f32
    %88 = vector.broadcast %cst_52 : f32 to vector<9x17x128xf32>
    %89 = arith.mulf %88, %87 : vector<9x17x128xf32>
    %90 = arith.addf %86, %89 : vector<9x17x128xf32>
    %91 = vector.extract_strided_slice %38 {offsets = [1, 0, 0], sizes = [9, 17, 128], strides = [1, 1, 1]} : vector<10x17x128xf32> to vector<9x17x128xf32>
    %cst_53 = arith.constant 3.750000e-01 : f32
    %92 = vector.broadcast %cst_53 : f32 to vector<9x17x128xf32>
    %93 = arith.mulf %92, %91 : vector<9x17x128xf32>
    %94 = arith.addf %90, %93 : vector<9x17x128xf32>
    %95 = vector.extract_strided_slice %68 {offsets = [1, 0, 0], sizes = [9, 17, 128], strides = [1, 1, 1]} : vector<10x17x128xf32> to vector<9x17x128xf32>
    %cst_54 = arith.constant 1.250000e-01 : f32
    %96 = vector.broadcast %cst_54 : f32 to vector<9x17x128xf32>
    %97 = arith.mulf %96, %95 : vector<9x17x128xf32>
    %98 = arith.addf %94, %97 : vector<9x17x128xf32>
    %99 = vector.extract_strided_slice %53 {offsets = [0, 0, 0], sizes = [9, 16, 128], strides = [1, 1, 1]} : vector<10x16x128xf32> to vector<9x16x128xf32>
    %cst_55 = arith.constant 1.250000e-01 : f32
    %100 = vector.broadcast %cst_55 : f32 to vector<9x16x128xf32>
    %101 = arith.mulf %100, %99 : vector<9x16x128xf32>
    %102 = vector.extract_strided_slice %83 {offsets = [0, 0, 0], sizes = [9, 16, 128], strides = [1, 1, 1]} : vector<10x16x128xf32> to vector<9x16x128xf32>
    %cst_56 = arith.constant 3.750000e-01 : f32
    %103 = vector.broadcast %cst_56 : f32 to vector<9x16x128xf32>
    %104 = arith.mulf %103, %102 : vector<9x16x128xf32>
    %105 = arith.addf %101, %104 : vector<9x16x128xf32>
    %106 = vector.extract_strided_slice %53 {offsets = [1, 0, 0], sizes = [9, 16, 128], strides = [1, 1, 1]} : vector<10x16x128xf32> to vector<9x16x128xf32>
    %cst_57 = arith.constant 3.750000e-01 : f32
    %107 = vector.broadcast %cst_57 : f32 to vector<9x16x128xf32>
    %108 = arith.mulf %107, %106 : vector<9x16x128xf32>
    %109 = arith.addf %105, %108 : vector<9x16x128xf32>
    %110 = vector.extract_strided_slice %83 {offsets = [1, 0, 0], sizes = [9, 16, 128], strides = [1, 1, 1]} : vector<10x16x128xf32> to vector<9x16x128xf32>
    %cst_58 = arith.constant 1.250000e-01 : f32
    %111 = vector.broadcast %cst_58 : f32 to vector<9x16x128xf32>
    %112 = arith.mulf %111, %110 : vector<9x16x128xf32>
    %113 = arith.addf %109, %112 : vector<9x16x128xf32>
    %114 = vector.extract_strided_slice %68 {offsets = [0, 0, 0], sizes = [8, 17, 128], strides = [1, 1, 1]} : vector<10x17x128xf32> to vector<8x17x128xf32>
    %cst_59 = arith.constant 1.250000e-01 : f32
    %115 = vector.broadcast %cst_59 : f32 to vector<8x17x128xf32>
    %116 = arith.mulf %115, %114 : vector<8x17x128xf32>
    %117 = vector.extract_strided_slice %38 {offsets = [1, 0, 0], sizes = [8, 17, 128], strides = [1, 1, 1]} : vector<10x17x128xf32> to vector<8x17x128xf32>
    %cst_60 = arith.constant 3.750000e-01 : f32
    %118 = vector.broadcast %cst_60 : f32 to vector<8x17x128xf32>
    %119 = arith.mulf %118, %117 : vector<8x17x128xf32>
    %120 = arith.addf %116, %119 : vector<8x17x128xf32>
    %121 = vector.extract_strided_slice %68 {offsets = [1, 0, 0], sizes = [8, 17, 128], strides = [1, 1, 1]} : vector<10x17x128xf32> to vector<8x17x128xf32>
    %cst_61 = arith.constant 3.750000e-01 : f32
    %122 = vector.broadcast %cst_61 : f32 to vector<8x17x128xf32>
    %123 = arith.mulf %122, %121 : vector<8x17x128xf32>
    %124 = arith.addf %120, %123 : vector<8x17x128xf32>
    %125 = vector.extract_strided_slice %38 {offsets = [2, 0, 0], sizes = [8, 17, 128], strides = [1, 1, 1]} : vector<10x17x128xf32> to vector<8x17x128xf32>
    %cst_62 = arith.constant 1.250000e-01 : f32
    %126 = vector.broadcast %cst_62 : f32 to vector<8x17x128xf32>
    %127 = arith.mulf %126, %125 : vector<8x17x128xf32>
    %128 = arith.addf %124, %127 : vector<8x17x128xf32>
    %129 = vector.extract_strided_slice %83 {offsets = [0, 0, 0], sizes = [8, 16, 128], strides = [1, 1, 1]} : vector<10x16x128xf32> to vector<8x16x128xf32>
    %cst_63 = arith.constant 1.250000e-01 : f32
    %130 = vector.broadcast %cst_63 : f32 to vector<8x16x128xf32>
    %131 = arith.mulf %130, %129 : vector<8x16x128xf32>
    %132 = vector.extract_strided_slice %53 {offsets = [1, 0, 0], sizes = [8, 16, 128], strides = [1, 1, 1]} : vector<10x16x128xf32> to vector<8x16x128xf32>
    %cst_64 = arith.constant 3.750000e-01 : f32
    %133 = vector.broadcast %cst_64 : f32 to vector<8x16x128xf32>
    %134 = arith.mulf %133, %132 : vector<8x16x128xf32>
    %135 = arith.addf %131, %134 : vector<8x16x128xf32>
    %136 = vector.extract_strided_slice %83 {offsets = [1, 0, 0], sizes = [8, 16, 128], strides = [1, 1, 1]} : vector<10x16x128xf32> to vector<8x16x128xf32>
    %cst_65 = arith.constant 3.750000e-01 : f32
    %137 = vector.broadcast %cst_65 : f32 to vector<8x16x128xf32>
    %138 = arith.mulf %137, %136 : vector<8x16x128xf32>
    %139 = arith.addf %135, %138 : vector<8x16x128xf32>
    %140 = vector.extract_strided_slice %53 {offsets = [2, 0, 0], sizes = [8, 16, 128], strides = [1, 1, 1]} : vector<10x16x128xf32> to vector<8x16x128xf32>
    %cst_66 = arith.constant 1.250000e-01 : f32
    %141 = vector.broadcast %cst_66 : f32 to vector<8x16x128xf32>
    %142 = arith.mulf %141, %140 : vector<8x16x128xf32>
    %143 = arith.addf %139, %142 : vector<8x16x128xf32>
    %144 = vector.extract_strided_slice %98 {offsets = [0, 0, 0], sizes = [8, 16, 128], strides = [1, 1, 1]} : vector<9x17x128xf32> to vector<8x16x128xf32>
    %145 = vector.shape_cast %144 : vector<8x16x128xf32> to vector<128x128xf32>
    %146 = arith.truncf %145 : vector<128x128xf32> to vector<128x128xbf16>
    %c0_67 = arith.constant 0 : index
    %c0_68 = arith.constant 0 : index
    %c0_69 = arith.constant 0 : index
    %147 = vector.load %arg4[%c0_67, %c0_68, %c0_69] : memref<9x128x128xbf16, #tpu.memory_space<vmem>>, vector<1x128x128xbf16>
    %148 = vector.shape_cast %147 : vector<1x128x128xbf16> to vector<128x128xbf16>
    %cst_70 = arith.constant dense<0.000000e+00> : vector<128x128xf32>
    %149 = tpu.matmul %146, %148, %cst_70 {dimension_numbers = #tpu.dot_dimension_numbers<[1], [0], [0], [1], [0, 0, 1, 1], [], []>} : vector<128x128xbf16>, vector<128x128xbf16>, vector<128x128xf32> -> vector<128x128xf32>
    %150 = vector.extract_strided_slice %113 {offsets = [0, 0, 0], sizes = [8, 16, 128], strides = [1, 1, 1]} : vector<9x16x128xf32> to vector<8x16x128xf32>
    %151 = vector.shape_cast %150 : vector<8x16x128xf32> to vector<128x128xf32>
    %152 = arith.truncf %151 : vector<128x128xf32> to vector<128x128xbf16>
    %c1_71 = arith.constant 1 : index
    %c0_72 = arith.constant 0 : index
    %c0_73 = arith.constant 0 : index
    %153 = vector.load %arg4[%c1_71, %c0_72, %c0_73] : memref<9x128x128xbf16, #tpu.memory_space<vmem>>, vector<1x128x128xbf16>
    %154 = vector.shape_cast %153 : vector<1x128x128xbf16> to vector<128x128xbf16>
    %cst_74 = arith.constant dense<0.000000e+00> : vector<128x128xf32>
    %155 = tpu.matmul %152, %154, %cst_74 {dimension_numbers = #tpu.dot_dimension_numbers<[1], [0], [0], [1], [0, 0, 1, 1], [], []>} : vector<128x128xbf16>, vector<128x128xbf16>, vector<128x128xf32> -> vector<128x128xf32>
    %156 = arith.addf %149, %155 : vector<128x128xf32>
    %157 = vector.extract_strided_slice %98 {offsets = [0, 1, 0], sizes = [8, 16, 128], strides = [1, 1, 1]} : vector<9x17x128xf32> to vector<8x16x128xf32>
    %158 = vector.shape_cast %157 : vector<8x16x128xf32> to vector<128x128xf32>
    %159 = arith.truncf %158 : vector<128x128xf32> to vector<128x128xbf16>
    %c2_75 = arith.constant 2 : index
    %c0_76 = arith.constant 0 : index
    %c0_77 = arith.constant 0 : index
    %160 = vector.load %arg4[%c2_75, %c0_76, %c0_77] : memref<9x128x128xbf16, #tpu.memory_space<vmem>>, vector<1x128x128xbf16>
    %161 = vector.shape_cast %160 : vector<1x128x128xbf16> to vector<128x128xbf16>
    %cst_78 = arith.constant dense<0.000000e+00> : vector<128x128xf32>
    %162 = tpu.matmul %159, %161, %cst_78 {dimension_numbers = #tpu.dot_dimension_numbers<[1], [0], [0], [1], [0, 0, 1, 1], [], []>} : vector<128x128xbf16>, vector<128x128xbf16>, vector<128x128xf32> -> vector<128x128xf32>
    %163 = arith.addf %156, %162 : vector<128x128xf32>
    %164 = vector.extract_strided_slice %128 {offsets = [0, 0, 0], sizes = [8, 16, 128], strides = [1, 1, 1]} : vector<8x17x128xf32> to vector<8x16x128xf32>
    %165 = vector.shape_cast %164 : vector<8x16x128xf32> to vector<128x128xf32>
    %166 = arith.truncf %165 : vector<128x128xf32> to vector<128x128xbf16>
    %c3_79 = arith.constant 3 : index
    %c0_80 = arith.constant 0 : index
    %c0_81 = arith.constant 0 : index
    %167 = vector.load %arg4[%c3_79, %c0_80, %c0_81] : memref<9x128x128xbf16, #tpu.memory_space<vmem>>, vector<1x128x128xbf16>
    %168 = vector.shape_cast %167 : vector<1x128x128xbf16> to vector<128x128xbf16>
    %cst_82 = arith.constant dense<0.000000e+00> : vector<128x128xf32>
    %169 = tpu.matmul %166, %168, %cst_82 {dimension_numbers = #tpu.dot_dimension_numbers<[1], [0], [0], [1], [0, 0, 1, 1], [], []>} : vector<128x128xbf16>, vector<128x128xbf16>, vector<128x128xf32> -> vector<128x128xf32>
    %170 = arith.addf %163, %169 : vector<128x128xf32>
    %171 = vector.shape_cast %143 : vector<8x16x128xf32> to vector<128x128xf32>
    %172 = arith.truncf %171 : vector<128x128xf32> to vector<128x128xbf16>
    %c4 = arith.constant 4 : index
    %c0_83 = arith.constant 0 : index
    %c0_84 = arith.constant 0 : index
    %173 = vector.load %arg4[%c4, %c0_83, %c0_84] : memref<9x128x128xbf16, #tpu.memory_space<vmem>>, vector<1x128x128xbf16>
    %174 = vector.shape_cast %173 : vector<1x128x128xbf16> to vector<128x128xbf16>
    %cst_85 = arith.constant dense<0.000000e+00> : vector<128x128xf32>
    %175 = tpu.matmul %172, %174, %cst_85 {dimension_numbers = #tpu.dot_dimension_numbers<[1], [0], [0], [1], [0, 0, 1, 1], [], []>} : vector<128x128xbf16>, vector<128x128xbf16>, vector<128x128xf32> -> vector<128x128xf32>
    %176 = arith.addf %170, %175 : vector<128x128xf32>
    %177 = vector.extract_strided_slice %128 {offsets = [0, 1, 0], sizes = [8, 16, 128], strides = [1, 1, 1]} : vector<8x17x128xf32> to vector<8x16x128xf32>
    %178 = vector.shape_cast %177 : vector<8x16x128xf32> to vector<128x128xf32>
    %179 = arith.truncf %178 : vector<128x128xf32> to vector<128x128xbf16>
    %c5 = arith.constant 5 : index
    %c0_86 = arith.constant 0 : index
    %c0_87 = arith.constant 0 : index
    %180 = vector.load %arg4[%c5, %c0_86, %c0_87] : memref<9x128x128xbf16, #tpu.memory_space<vmem>>, vector<1x128x128xbf16>
    %181 = vector.shape_cast %180 : vector<1x128x128xbf16> to vector<128x128xbf16>
    %cst_88 = arith.constant dense<0.000000e+00> : vector<128x128xf32>
    %182 = tpu.matmul %179, %181, %cst_88 {dimension_numbers = #tpu.dot_dimension_numbers<[1], [0], [0], [1], [0, 0, 1, 1], [], []>} : vector<128x128xbf16>, vector<128x128xbf16>, vector<128x128xf32> -> vector<128x128xf32>
    %183 = arith.addf %176, %182 : vector<128x128xf32>
    %184 = vector.extract_strided_slice %98 {offsets = [1, 0, 0], sizes = [8, 16, 128], strides = [1, 1, 1]} : vector<9x17x128xf32> to vector<8x16x128xf32>
    %185 = vector.shape_cast %184 : vector<8x16x128xf32> to vector<128x128xf32>
    %186 = arith.truncf %185 : vector<128x128xf32> to vector<128x128xbf16>
    %c6 = arith.constant 6 : index
    %c0_89 = arith.constant 0 : index
    %c0_90 = arith.constant 0 : index
    %187 = vector.load %arg4[%c6, %c0_89, %c0_90] : memref<9x128x128xbf16, #tpu.memory_space<vmem>>, vector<1x128x128xbf16>
    %188 = vector.shape_cast %187 : vector<1x128x128xbf16> to vector<128x128xbf16>
    %cst_91 = arith.constant dense<0.000000e+00> : vector<128x128xf32>
    %189 = tpu.matmul %186, %188, %cst_91 {dimension_numbers = #tpu.dot_dimension_numbers<[1], [0], [0], [1], [0, 0, 1, 1], [], []>} : vector<128x128xbf16>, vector<128x128xbf16>, vector<128x128xf32> -> vector<128x128xf32>
    %190 = arith.addf %183, %189 : vector<128x128xf32>
    %191 = vector.extract_strided_slice %113 {offsets = [1, 0, 0], sizes = [8, 16, 128], strides = [1, 1, 1]} : vector<9x16x128xf32> to vector<8x16x128xf32>
    %192 = vector.shape_cast %191 : vector<8x16x128xf32> to vector<128x128xf32>
    %193 = arith.truncf %192 : vector<128x128xf32> to vector<128x128xbf16>
    %c7 = arith.constant 7 : index
    %c0_92 = arith.constant 0 : index
    %c0_93 = arith.constant 0 : index
    %194 = vector.load %arg4[%c7, %c0_92, %c0_93] : memref<9x128x128xbf16, #tpu.memory_space<vmem>>, vector<1x128x128xbf16>
    %195 = vector.shape_cast %194 : vector<1x128x128xbf16> to vector<128x128xbf16>
    %cst_94 = arith.constant dense<0.000000e+00> : vector<128x128xf32>
    %196 = tpu.matmul %193, %195, %cst_94 {dimension_numbers = #tpu.dot_dimension_numbers<[1], [0], [0], [1], [0, 0, 1, 1], [], []>} : vector<128x128xbf16>, vector<128x128xbf16>, vector<128x128xf32> -> vector<128x128xf32>
    %197 = arith.addf %190, %196 : vector<128x128xf32>
    %198 = vector.extract_strided_slice %98 {offsets = [1, 1, 0], sizes = [8, 16, 128], strides = [1, 1, 1]} : vector<9x17x128xf32> to vector<8x16x128xf32>
    %199 = vector.shape_cast %198 : vector<8x16x128xf32> to vector<128x128xf32>
    %200 = arith.truncf %199 : vector<128x128xf32> to vector<128x128xbf16>
    %c8 = arith.constant 8 : index
    %c0_95 = arith.constant 0 : index
    %c0_96 = arith.constant 0 : index
    %201 = vector.load %arg4[%c8, %c0_95, %c0_96] : memref<9x128x128xbf16, #tpu.memory_space<vmem>>, vector<1x128x128xbf16>
    %202 = vector.shape_cast %201 : vector<1x128x128xbf16> to vector<128x128xbf16>
    %cst_97 = arith.constant dense<0.000000e+00> : vector<128x128xf32>
    %203 = tpu.matmul %200, %202, %cst_97 {dimension_numbers = #tpu.dot_dimension_numbers<[1], [0], [0], [1], [0, 0, 1, 1], [], []>} : vector<128x128xbf16>, vector<128x128xbf16>, vector<128x128xf32> -> vector<128x128xf32>
    %204 = arith.addf %197, %203 : vector<128x128xf32>
    %cst_98 = arith.constant 0.0833333358 : f32
    %205 = vector.broadcast %cst_98 : f32 to vector<128x128xf32>
    %206 = arith.mulf %204, %205 : vector<128x128xf32>
    %c0_99 = arith.constant 0 : index
    %c0_100 = arith.constant 0 : index
    %207 = vector.load %arg5[%c0_99, %c0_100] : memref<1x128xf32, #tpu.memory_space<vmem>>, vector<1x128xf32>
    %208 = vector.broadcast %207 : vector<1x128xf32> to vector<128x128xf32>
    %209 = arith.addf %206, %208 : vector<128x128xf32>
    %cst_101 = arith.constant 0.000000e+00 : f32
    %210 = vector.broadcast %cst_101 : f32 to vector<128x128xf32>
    %211 = arith.cmpf oge, %209, %210 : vector<128x128xf32>
    %cst_102 = arith.constant 2.000000e-01 : f32
    %212 = vector.broadcast %cst_102 : f32 to vector<128x128xf32>
    %213 = arith.mulf %209, %212 : vector<128x128xf32>
    %214 = arith.select %211, %209, %213 : vector<128x128xi1>, vector<128x128xf32>
    %cst_103 = arith.constant 1.41421354 : f32
    %215 = vector.broadcast %cst_103 : f32 to vector<128x128xf32>
    %216 = arith.mulf %214, %215 : vector<128x128xf32>
    %217 = vector.shape_cast %216 : vector<128x128xf32> to vector<8x16x128xf32>
    %218 = arith.truncf %217 : vector<8x16x128xf32> to vector<8x16x128xbf16>
    %c0_104 = arith.constant 0 : index
    %c0_105 = arith.constant 0 : index
    %c0_106 = arith.constant 0 : index
    %c0_107 = arith.constant 0 : index
    %219 = vector.load %arg6[%c0_104, %c0_105, %c0_106, %c0_107] : memref<1x8x16x128xbf16, #tpu.memory_space<vmem>>, vector<1x8x16x128xbf16>
    %220 = vector.shape_cast %219 : vector<1x8x16x128xbf16> to vector<8x16x128xbf16>
    %221 = vector.shape_cast %218 : vector<8x16x128xbf16> to vector<1x8x16x128xbf16>
    tpu.vector_store %arg6[%c0_104, %c0_105, %c0_106, %c0_107], %221 {strides = array<i32>} : memref<1x8x16x128xbf16, #tpu.memory_space<vmem>>, vector<1x8x16x128xbf16>,
    return
  }
  func.func @transform_0(%arg0: i32, %arg1: i32) -> (i32, i32, i32, i32, i32) {
    %c0_i32 = arith.constant 0 : i32
    %c0_i32_0 = arith.constant 0 : i32
    %c0_i32_1 = arith.constant 0 : i32
    %c0_i32_2 = arith.constant 0 : i32
    return %arg0, %c0_i32, %arg1, %c0_i32_0, %c0_i32_1 : i32, i32, i32, i32, i32
  }
  func.func @transform_1(%arg0: i32, %arg1: i32) -> (i32, i32, i32, i32, i32) {
    %c1_i32 = arith.constant 1 : i32
    %0 = arith.addi %arg1, %c1_i32 : i32
    %c4_i32 = arith.constant 4 : i32
    %1 = arith.muli %c4_i32, %0 : i32
    %c0_i32 = arith.constant 0 : i32
    %c0_i32_0 = arith.constant 0 : i32
    %c0_i32_1 = arith.constant 0 : i32
    %c0_i32_2 = arith.constant 0 : i32
    return %arg0, %c0_i32, %1, %c0_i32_0, %c0_i32_1 : i32, i32, i32, i32, i32
  }
  func.func @transform_2(%arg0: i32, %arg1: i32) -> (i32, i32, i32) {
    %c0_i32 = arith.constant 0 : i32
    %c0_i32_0 = arith.constant 0 : i32
    %c0_i32_1 = arith.constant 0 : i32
    %c0_i32_2 = arith.constant 0 : i32
    return %c0_i32, %c0_i32_0, %c0_i32_1 : i32, i32, i32
  }
  func.func @transform_3(%arg0: i32, %arg1: i32) -> (i32, i32) {
    %c0_i32 = arith.constant 0 : i32
    %c0_i32_0 = arith.constant 0 : i32
    %c0_i32_1 = arith.constant 0 : i32
    return %c0_i32, %c0_i32_0 : i32, i32
  }
  func.func @transform_4(%arg0: i32, %arg1: i32) -> (i32, i32, i32, i32) {
    %c0_i32 = arith.constant 0 : i32
    %c0_i32_0 = arith.constant 0 : i32
    %c0_i32_1 = arith.constant 0 : i32
    return %arg0, %arg1, %c0_i32, %c0_i32_0 : i32, i32, i32, i32
  }
}

</mosaic_0001>

<llo_original>
// kernel: encoder_wiflow_forward.2
$region0: #{encoder_wiflow_forward.2}
  #allocation0 [shape = 'u32[]', space=smem, size = 0x4, offset = 0x4, fixed_abs, tag = 'smem constant byte address 0x4 - core index']
  #allocation1 [shape = 'u32[72,128]{1,0:T(1,128)}', space=vmem, size = 0x9000, scoped, tag = 'internal scratch']
  %s0 = inlined_call_operand.vmem [shape: f32[2048,4], index: 0, kind: input, shape index: {}]
  %s1 = inlined_call_operand.vmem [shape: f32[4,128], index: 1, kind: input, shape index: {}]
  %s2 = inlined_call_operand.vmem [shape: f32[1,128], index: 2, kind: input, shape index: {}]
  %s3 = inlined_call_operand.vmem [shape: bf16[2048,128], index: 3, kind: output, shape index: {}]
  %s4 = sld [smem:[#allocation0]]
  $region45: #{encoder_wiflow_forward.2} parent=0
    _
  %s6 = ssub.s32 1, %s4
  %s7 = scalar_select 0, %s6, %s4
  loop: start=0, step=1, limit=6
  $region2: #{encoder_wiflow_forward.2} parent=0 // loop_pre_header
    _
  $region3: #{encoder_wiflow_forward.2} parent=0 // loop_header
    %s9 = sphi 0, %s13
    %p10 = scmp.ge.s32.totalorder %s9, 6
    %s19 = sphi 0, %s21
    %s22 = sphi 0, %s19
    %s23 = sphi 0, %s22
    %s39 = sphi 0, %s23
    %s43 = sphi 0, %s43
    %s45 = sphi 0, %s43
    %s46 = sphi 0, %s45
    %s60 = sphi 0, %s46
    %s64 = sphi 0, %s64
    %s66 = sphi 0, %s64
    %s67 = sphi 0, %s66
    %s81 = sphi 0, %s67
    %s87 = sphi 0, %s89
    %s90 = sphi 0, %s87
    %s91 = sphi 0, %s90
    %s107 = sphi 0, %s91
  $region4: #{encoder_wiflow_forward.2} parent=0 // loop_header_branch
    %12 = sbr.rel (%p10) target = $region8
  $region5: #{encoder_wiflow_forward.2} parent=0 // loop_body
    %s14 = ssub.s32 %s9, 1
    %s15 = ssub.s32 %s9, 2
    %s16 = sadd.s32 %s9, 1
    %s17 = ssub.s32 %s9, %s16
    %p18 = scmp.eq.s32.totalorder %s17, 0
    %s20 = sadd.s32 %s19, 1
    %s21 = scalar_select %p18, %s19, %s20
    %p24 = pneg %p18
    %p25 = scmp.eq.s32.totalorder %s9, 3
    %p26 = por %p24, %p25
    %p27 = scmp.ne.s32.totalorder %s19, %s22
    %p28 = scmp.eq.s32.totalorder %s9, 0
    %p29 = por %p27, %p28
    %p30 = scmp.ne.s32.totalorder %s19, %s22
    %p31 = scmp.eq.s32.totalorder %s14, 3
    %p32 = por %p30, %p31
    %p33 = scmp.ne.s32.totalorder %s22, %s23
    %p34 = scmp.eq.s32.totalorder %s14, 0
    %p35 = por %p33, %p34
    %p36 = scmp.ne.s32.totalorder %s22, %s23
    %p37 = scmp.eq.s32.totalorder %s15, 3
    %p38 = por %p36, %p37
    %p40 = scmp.ne.s32.totalorder %s23, %s39
    %p41 = scmp.eq.s32.totalorder %s15, 0
    %p42 = por %p40, %p41
    %s44 = sadd.s32 %s43, 1
    %p47 = scmp.eq.s32.totalorder %s9, 3
    %p48 = scmp.ne.s32.totalorder %s43, %s45
    %p49 = scmp.eq.s32.totalorder %s9, 0
    %p50 = por %p48, %p49
    %p51 = scmp.ne.s32.totalorder %s43, %s45
    %p52 = scmp.eq.s32.totalorder %s14, 3
    %p53 = por %p51, %p52
    %p54 = scmp.ne.s32.totalorder %s45, %s46
    %p55 = scmp.eq.s32.totalorder %s14, 0
    %p56 = por %p54, %p55
    %p57 = scmp.ne.s32.totalorder %s45, %s46
    %p58 = scmp.eq.s32.totalorder %s15, 3
    %p59 = por %p57, %p58
    %p61 = scmp.ne.s32.totalorder %s46, %s60
    %p62 = scmp.eq.s32.totalorder %s15, 0
    %p63 = por %p61, %p62
    %s65 = sadd.s32 %s64, 1
    %p68 = scmp.eq.s32.totalorder %s9, 3
    %p69 = scmp.ne.s32.totalorder %s64, %s66
    %p70 = scmp.eq.s32.totalorder %s9, 0
    %p71 = por %p69, %p70
    %p72 = scmp.ne.s32.totalorder %s64, %s66
    %p73 = scmp.eq.s32.totalorder %s14, 3
    %p74 = por %p72, %p73
    %p75 = scmp.ne.s32.totalorder %s66, %s67
    %p76 = scmp.eq.s32.totalorder %s14, 0
    %p77 = por %p75, %p76
    %p78 = scmp.ne.s32.totalorder %s66, %s67
    %p79 = scmp.eq.s32.totalorder %s15, 3
    %p80 = por %p78, %p79
    %p82 = scmp.ne.s32.totalorder %s67, %s81
    %p83 = scmp.eq.s32.totalorder %s15, 0
    %p84 = por %p82, %p83
    %s85 = ssub.s32 %s9, %s16
    %p86 = scmp.eq.s32.totalorder %s85, 0
    %s88 = sadd.s32 %s87, 1
    %s89 = scalar_select %p86, %s87, %s88
    %p92 = pneg %p86
    %p93 = scmp.eq.s32.totalorder %s9, 3
    %p94 = por %p92, %p93
    %p95 = scmp.ne.s32.totalorder %s87, %s90
    %p96 = scmp.eq.s32.totalorder %s9, 0
    %p97 = por %p95, %p96
    %p98 = scmp.ne.s32.totalorder %s87, %s90
    %p99 = scmp.eq.s32.totalorder %s14, 3
    %p100 = por %p98, %p99
    %p101 = scmp.ne.s32.totalorder %s90, %s91
    %p102 = scmp.eq.s32.totalorder %s14, 0
    %p103 = por %p101, %p102
    %p104 = scmp.ne.s32.totalorder %s90, %s91
    %p105 = scmp.eq.s32.totalorder %s15, 3
    %p106 = por %p104, %p105
    %p108 = scmp.ne.s32.totalorder %s91, %s107
    %p109 = scmp.eq.s32.totalorder %s15, 0
    %p110 = por %p108, %p109
    %p111 = scmp.le.s32.totalorder 1, %s9
    %p112 = scmp.lt.s32.totalorder %s9, 5
    %p113 = pnand %p111, %p112
    %p114 = pneg %p113
    // Predicated region
    $region9: #{encoder_wiflow_forward.2} parent=5 // pred_check
      _
    $region10: #{encoder_wiflow_forward.2} parent=5 // pred_check_branch
      %116 = sbr.rel (%p113) target = $region12
    $region11: #{encoder_wiflow_forward.2} parent=5 // pred_region
      %s117 = ssub.s32 %s9, 1
      // Predicated region
      $region13: #{encoder_wiflow_forward.2} parent=11 // pred_check
        %p118 = pneg %p56
      $region14: #{encoder_wiflow_forward.2} parent=11 // pred_check_branch
        %120 = sbr.rel (%p118) target = $region16
      $region15: #{encoder_wiflow_forward.2} parent=11 // pred_region
        _
      $region16: #{encoder_wiflow_forward.2} parent=11 // pred_fallthru
        _
      // Predicated region
      $region17: #{encoder_wiflow_forward.2} parent=11 // pred_check
        %p121 = pneg %p77
      $region18: #{encoder_wiflow_forward.2} parent=11 // pred_check_branch
        %123 = sbr.rel (%p121) target = $region20
      $region19: #{encoder_wiflow_forward.2} parent=11 // pred_region
        _
      $region20: #{encoder_wiflow_forward.2} parent=11 // pred_fallthru
        _
    $region12: #{encoder_wiflow_forward.2} parent=5 // pred_fallthru
      _
    %p124 = scmp.lt.s32.totalorder %s9, 4
    // Predicated region
    $region21: #{encoder_wiflow_forward.2} parent=5 // pred_check
      %p125 = pneg %p124
    $region22: #{encoder_wiflow_forward.2} parent=5 // pred_check_branch
      %127 = sbr.rel (%p125) target = $region24
    $region23: #{encoder_wiflow_forward.2} parent=5 // pred_region
      // Predicated region
      $region25: #{encoder_wiflow_forward.2} parent=23 // pred_check
        %p128 = pneg %p29
      $region26: #{encoder_wiflow_forward.2} parent=23 // pred_check_branch
        %130 = sbr.rel (%p128) target = $region28
      $region27: #{encoder_wiflow_forward.2} parent=23 // pred_region
        %s131 = smul.u32 64, %s9
        %p132 = scmp.lt.s32.totalorder %s131, 255
        %s133 = scalar_select %p132, %s131, 255
        %s134 = smul.addr %s133, 8
        %s135 = scalar_lea.vmem %s0, %s134
        %s136 = smul.u32 64, %s9
      $region28: #{encoder_wiflow_forward.2} parent=23 // pred_fallthru
        _
    $region24: #{encoder_wiflow_forward.2} parent=5 // pred_fallthru
      _
    %p137 = scmp.le.s32.totalorder 1, %s9
    %p138 = scmp.lt.s32.totalorder %s9, 5
    %p139 = pnand %p137, %p138
    %p140 = pneg %p139
    // Predicated region
    $region29: #{encoder_wiflow_forward.2} parent=5 // pred_check
      _
    $region30: #{encoder_wiflow_forward.2} parent=5 // pred_check_branch
      %142 = sbr.rel (%p139) target = $region32
    $region31: #{encoder_wiflow_forward.2} parent=5 // pred_region
      %s143 = ssub.s32 %s9, 1
      %s144 = smul.u32 64, %s14
      %p145 = scmp.lt.s32.totalorder %s144, 255
      %s146 = scalar_select %p145, %s144, 255
      %s147 = smul.addr %s146, 8
      %s148 = scalar_lea.vmem %s0, %s147
      %p149 = pneg %p35
      %p150 = pneg %p32
      %p151 = pneg %p56
      %p152 = pneg %p53
      %p153 = pneg %p77
      %p154 = pneg %p74
      %p155 = pneg %p103
      %p156 = pneg %p100
      %s157 = smul.u32 64, %s14
      %p158 = scmp.lt.s32.totalorder %s157, 255
      %s159 = scalar_select %p158, %s157, 255
      %s160 = smul.addr %s159, 4
      %s161 = scalar_lea.vmem %s3, %s160
      %s162 = smul.u32 64, %s14
      %p163 = scmp.lt.s32.totalorder %s162, 255
      %s164 = scalar_select %p163, %s162, 255
      %s165 = smul.addr %s164, 8
      %s166 = scalar_lea.vmem %s0, %s165
      %s167 = smul.u32 64, %s14
      %s168 = smul.u32 64, %s14
      %p169 = scmp.lt.s32.totalorder %s168, 255
      %s170 = scalar_select %p169, %s168, 255
      %s171 = smul.addr %s170, 4
      %s172 = scalar_lea.vmem %s3, %s171
      %s173 = smul.u32 64, %s14
      %v174 = vld [vmem:[%s166] sm:$0xff]
      %v175 = vld [vmem:[%s166 + $0x8] sm:$0xff]
      %v176 = vld [vmem:[%s166 + $0x10] sm:$0xff]
      %v177 = vld [vmem:[%s166 + $0x18] sm:$0xff]
      %v178 = vld [vmem:[%s166 + $0x20] sm:$0xff]
      %v179 = vld [vmem:[%s166 + $0x28] sm:$0xff]
      %v180 = vld [vmem:[%s166 + $0x30] sm:$0xff]
      %v181 = vld [vmem:[%s166 + $0x38] sm:$0xff]
      %v182 = vld [vmem:[%s166 + $0x40] sm:$0xff]
      %v183 = vld [vmem:[%s166 + $0x48] sm:$0xff]
      %v184 = vld [vmem:[%s166 + $0x50] sm:$0xff]
      %v185 = vld [vmem:[%s166 + $0x58] sm:$0xff]
      %v186 = vld [vmem:[%s166 + $0x60] sm:$0xff]
      %v187 = vld [vmem:[%s166 + $0x68] sm:$0xff]
      %v188 = vld [vmem:[%s166 + $0x70] sm:$0xff]
      %v189 = vld [vmem:[%s166 + $0x78] sm:$0xff]
      %v190 = vld [vmem:[%s166 + $0x80] sm:$0xff]
      %v191 = vld [vmem:[%s166 + $0x88] sm:$0xff]
      %v192 = vld [vmem:[%s166 + $0x90] sm:$0xff]
      %v193 = vld [vmem:[%s166 + $0x98] sm:$0xff]
      %v194 = vld [vmem:[%s166 + $0xa0] sm:$0xff]
      %v195 = vld [vmem:[%s166 + $0xa8] sm:$0xff]
      %v196 = vld [vmem:[%s166 + $0xb0] sm:$0xff]
      %v197 = vld [vmem:[%s166 + $0xb8] sm:$0xff]
      %v198 = vld [vmem:[%s166 + $0xc0] sm:$0xff]
      %v199 = vld [vmem:[%s166 + $0xc8] sm:$0xff]
      %v200 = vld [vmem:[%s166 + $0xd0] sm:$0xff]
      %v201 = vld [vmem:[%s166 + $0xd8] sm:$0xff]
      %v202 = vld [vmem:[%s166 + $0xe0] sm:$0xff]
      %v203 = vld [vmem:[%s166 + $0xe8] sm:$0xff]
      %v204 = vld [vmem:[%s166 + $0xf0] sm:$0xff]
      %v205 = vld [vmem:[%s166 + $0xf8] sm:$0xff]
      %v206 = vld [vmem:[%s166 + $0x100] sm:$0xff]
      %v207 = vld [vmem:[%s166 + $0x108] sm:$0xff]
      %v208 = vld [vmem:[%s166 + $0x110] sm:$0xff]
      %v209 = vld [vmem:[%s166 + $0x118] sm:$0xff]
      %v210 = vld [vmem:[%s166 + $0x120] sm:$0xff]
      %v211 = vld [vmem:[%s166 + $0x128] sm:$0xff]
      %v212 = vld [vmem:[%s166 + $0x130] sm:$0xff]
      %v213 = vld [vmem:[%s166 + $0x138] sm:$0xff]
      %v214 = vld [vmem:[%s166 + $0x140] sm:$0xff]
      %v215 = vld [vmem:[%s166 + $0x148] sm:$0xff]
      %v216 = vld [vmem:[%s166 + $0x150] sm:$0xff]
      %v217 = vld [vmem:[%s166 + $0x158] sm:$0xff]
      %v218 = vld [vmem:[%s166 + $0x160] sm:$0xff]
      %v219 = vld [vmem:[%s166 + $0x168] sm:$0xff]
      %v220 = vld [vmem:[%s166 + $0x170] sm:$0xff]
      %v221 = vld [vmem:[%s166 + $0x178] sm:$0xff]
      %v222 = vld [vmem:[%s166 + $0x180] sm:$0xff]
      %v223 = vld [vmem:[%s166 + $0x188] sm:$0xff]
      %v224 = vld [vmem:[%s166 + $0x190] sm:$0xff]
      %v225 = vld [vmem:[%s166 + $0x198] sm:$0xff]
      %v226 = vld [vmem:[%s166 + $0x1a0] sm:$0xff]
      %v227 = vld [vmem:[%s166 + $0x1a8] sm:$0xff]
      %v228 = vld [vmem:[%s166 + $0x1b0] sm:$0xff]
      %v229 = vld [vmem:[%s166 + $0x1b8] sm:$0xff]
      %v230 = vld [vmem:[%s166 + $0x1c0] sm:$0xff]
      %v231 = vld [vmem:[%s166 + $0x1c8] sm:$0xff]
      %v232 = vld [vmem:[%s166 + $0x1d0] sm:$0xff]
      %v233 = vld [vmem:[%s166 + $0x1d8] sm:$0xff]
      %v234 = vld [vmem:[%s166 + $0x1e0] sm:$0xff]
      %v235 = vld [vmem:[%s166 + $0x1e8] sm:$0xff]
      %v236 = vld [vmem:[%s166 + $0x1f0] sm:$0xff]
      %v237 = vld [vmem:[%s166 + $0x1f8] sm:$0xff]
      %v238 = vld [vmem:[%s1] sm:$0xf]
      %vm239 = vcmask 31744
      %v241 = vsel %vm239, %v174, 0
      %v244 = vsel %vm239, %v175, 0
      %v247 = vsel %vm239, %v176, 0
      %v250 = vsel %vm239, %v177, 0
      %v253 = vsel %vm239, %v178, 0
      %v256 = vsel %vm239, %v179, 0
      %v259 = vsel %vm239, %v180, 0
      %v262 = vsel %vm239, %v181, 0
      %v265 = vsel %vm239, %v182, 0
      %v268 = vsel %vm239, %v183, 0
      %v271 = vsel %vm239, %v184, 0
      %v274 = vsel %vm239, %v185, 0
      %v277 = vsel %vm239, %v186, 0
      %v280 = vsel %vm239, %v187, 0
      %v283 = vsel %vm239, %v188, 0
      %v286 = vsel %vm239, %v189, 0
      %v289 = vsel %vm239, %v190, 0
      %v292 = vsel %vm239, %v191, 0
      %v295 = vsel %vm239, %v192, 0
      %v298 = vsel %vm239, %v193, 0
      %v301 = vsel %vm239, %v194, 0
      %v304 = vsel %vm239, %v195, 0
      %v307 = vsel %vm239, %v196, 0
      %v310 = vsel %vm239, %v197, 0
      %v313 = vsel %vm239, %v198, 0
      %v316 = vsel %vm239, %v199, 0
      %v319 = vsel %vm239, %v200, 0
      %v322 = vsel %vm239, %v201, 0
      %v325 = vsel %vm239, %v202, 0
      %v328 = vsel %vm239, %v203, 0
      %v331 = vsel %vm239, %v204, 0
      %v334 = vsel %vm239, %v205, 0
      %v337 = vsel %vm239, %v206, 0
      %v340 = vsel %vm239, %v207, 0
      %v343 = vsel %vm239, %v208, 0
      %v346 = vsel %vm239, %v209, 0
      %v349 = vsel %vm239, %v210, 0
      %v352 = vsel %vm239, %v211, 0
      %v355 = vsel %vm239, %v212, 0
      %v358 = vsel %vm239, %v213, 0
      %v361 = vsel %vm239, %v214, 0
      %v364 = vsel %vm239, %v215, 0
      %v367 = vsel %vm239, %v216, 0
      %v370 = vsel %vm239, %v217, 0
      %v373 = vsel %vm239, %v218, 0
      %v376 = vsel %vm239, %v219, 0
      %v379 = vsel %vm239, %v220, 0
      %v382 = vsel %vm239, %v221, 0
      %v385 = vsel %vm239, %v222, 0
      %v388 = vsel %vm239, %v223, 0
      %v391 = vsel %vm239, %v224, 0
      %v394 = vsel %vm239, %v225, 0
      %v397 = vsel %vm239, %v226, 0
      %v400 = vsel %vm239, %v227, 0
      %v403 = vsel %vm239, %v228, 0
      %v406 = vsel %vm239, %v229, 0
      %v409 = vsel %vm239, %v230, 0
      %v412 = vsel %vm239, %v231, 0
      %v415 = vsel %vm239, %v232, 0
      %v418 = vsel %vm239, %v233, 0
      %v421 = vsel %vm239, %v234, 0
      %v424 = vsel %vm239, %v235, 0
      %v427 = vsel %vm239, %v236, 0
      %v430 = vsel %vm239, %v237, 0
      %vm432 = vcmask 1043456
      %v434 = vsel %vm432, %v238, 0
      %436 = vmatpush.msra.mxu0 0.0
      %437 = vmatpush.msra.mxu0 0.0
      %438 = vmatpush.msra.mxu0 0.0
      %439 = vmatpush.msra.mxu0 0.0
      %440 = vmatpush.msra.mxu0 0.0
      %441 = vmatpush.msra.mxu0 0.0
      %442 = vmatpush.msra.mxu0 0.0
      %443 = vmatpush.msra.mxu0 0.0
      %444 = vmatpush.msra.mxu0 0.0
      %445 = vmatpush.msra.mxu0 0.0
      %446 = vmatpush.msra.mxu0 0.0
      %447 = vmatpush.msra.mxu0 0.0
      %448 = vmatpush.msra.mxu0 0.0
      %449 = vmatpush.msra.mxu0 0.0
      %450 = vmatpush.msra.mxu0 0.0
      %451 = vmatpush.msra.mxu0 %v434
      %452 = vmatmul.f32.gmra.mxu0 %v241
      %v453 = vpop.f32.mrf.mxu0
      %v454 = vadd.f32 0.0, %v453
      %455 = vmatmul.f32.gmra.mxu0 %v244
      %v456 = vpop.f32.mrf.mxu0
      %v457 = vadd.f32 0.0, %v456
      %458 = vmatmul.f32.gmra.mxu0 %v247
      %v459 = vpop.f32.mrf.mxu0
      %v460 = vadd.f32 0.0, %v459
      %461 = vmatmul.f32.gmra.mxu0 %v250
      %v462 = vpop.f32.mrf.mxu0
      %v463 = vadd.f32 0.0, %v462
      %464 = vmatmul.f32.gmra.mxu0 %v253
      %v465 = vpop.f32.mrf.mxu0
      %v466 = vadd.f32 0.0, %v465
      %467 = vmatmul.f32.gmra.mxu0 %v256
      %v468 = vpop.f32.mrf.mxu0
      %v469 = vadd.f32 0.0, %v468
      %470 = vmatmul.f32.gmra.mxu0 %v259
      %v471 = vpop.f32.mrf.mxu0
      %v472 = vadd.f32 0.0, %v471
      %473 = vmatmul.f32.gmra.mxu0 %v262
      %v474 = vpop.f32.mrf.mxu0
      %v475 = vadd.f32 0.0, %v474
      %476 = vmatmul.f32.gmra.mxu0 %v265
      %v477 = vpop.f32.mrf.mxu0
      %v478 = vadd.f32 0.0, %v477
      %479 = vmatmul.f32.gmra.mxu0 %v268
      %v480 = vpop.f32.mrf.mxu0
      %v481 = vadd.f32 0.0, %v480
      %482 = vmatmul.f32.gmra.mxu0 %v271
      %v483 = vpop.f32.mrf.mxu0
      %v484 = vadd.f32 0.0, %v483
      %485 = vmatmul.f32.gmra.mxu0 %v274
      %v486 = vpop.f32.mrf.mxu0
      %v487 = vadd.f32 0.0, %v486
      %488 = vmatmul.f32.gmra.mxu0 %v277
      %v489 = vpop.f32.mrf.mxu0
      %v490 = vadd.f32 0.0, %v489
      %491 = vmatmul.f32.gmra.mxu0 %v280
      %v492 = vpop.f32.mrf.mxu0
      %v493 = vadd.f32 0.0, %v492
      %494 = vmatmul.f32.gmra.mxu0 %v283
      %v495 = vpop.f32.mrf.mxu0
      %v496 = vadd.f32 0.0, %v495
      %497 = vmatmul.f32.gmra.mxu0 %v286
      %v498 = vpop.f32.mrf.mxu0
      %v499 = vadd.f32 0.0, %v498
      %500 = vmatmul.f32.gmra.mxu0 %v289
      %v501 = vpop.f32.mrf.mxu0
      %v502 = vadd.f32 0.0, %v501
      %503 = vmatmul.f32.gmra.mxu0 %v292
      %v504 = vpop.f32.mrf.mxu0
      %v505 = vadd.f32 0.0, %v504
      %506 = vmatmul.f32.gmra.mxu0 %v295
      %v507 = vpop.f32.mrf.mxu0
      %v508 = vadd.f32 0.0, %v507
      %509 = vmatmul.f32.gmra.mxu0 %v298
      %v510 = vpop.f32.mrf.mxu0
      %v511 = vadd.f32 0.0, %v510
      %512 = vmatmul.f32.gmra.mxu0 %v301
      %v513 = vpop.f32.mrf.mxu0
      %v514 = vadd.f32 0.0, %v513
      %515 = vmatmul.f32.gmra.mxu0 %v304
      %v516 = vpop.f32.mrf.mxu0
      %v517 = vadd.f32 0.0, %v516
      %518 = vmatmul.f32.gmra.mxu0 %v307
      %v519 = vpop.f32.mrf.mxu0
      %v520 = vadd.f32 0.0, %v519
      %521 = vmatmul.f32.gmra.mxu0 %v310
      %v522 = vpop.f32.mrf.mxu0
      %v523 = vadd.f32 0.0, %v522
      %524 = vmatmul.f32.gmra.mxu0 %v313
      %v525 = vpop.f32.mrf.mxu0
      %v526 = vadd.f32 0.0, %v525
      %527 = vmatmul.f32.gmra.mxu0 %v316
      %v528 = vpop.f32.mrf.mxu0
      %v529 = vadd.f32 0.0, %v528
      %530 = vmatmul.f32.gmra.mxu0 %v319
      %v531 = vpop.f32.mrf.mxu0
      %v532 = vadd.f32 0.0, %v531
      %533 = vmatmul.f32.gmra.mxu0 %v322
      %v534 = vpop.f32.mrf.mxu0
      %v535 = vadd.f32 0.0, %v534
      %536 = vmatmul.f32.gmra.mxu0 %v325
      %v537 = vpop.f32.mrf.mxu0
      %v538 = vadd.f32 0.0, %v537
      %539 = vmatmul.f32.gmra.mxu0 %v328
      %v540 = vpop.f32.mrf.mxu0
      %v541 = vadd.f32 0.0, %v540
      %542 = vmatmul.f32.gmra.mxu0 %v331
      %v543 = vpop.f32.mrf.mxu0
      %v544 = vadd.f32 0.0, %v543
      %545 = vmatmul.f32.gmra.mxu0 %v334
      %v546 = vpop.f32.mrf.mxu0
      %v547 = vadd.f32 0.0, %v546
      %548 = vmatmul.f32.gmra.mxu0 %v337
      %v549 = vpop.f32.mrf.mxu0
      %v550 = vadd.f32 0.0, %v549
      %551 = vmatmul.f32.gmra.mxu0 %v340
      %v552 = vpop.f32.mrf.mxu0
      %v553 = vadd.f32 0.0, %v552
      %554 = vmatmul.f32.gmra.mxu0 %v343
      %v555 = vpop.f32.mrf.mxu0
      %v556 = vadd.f32 0.0, %v555
      %557 = vmatmul.f32.gmra.mxu0 %v346
      %v558 = vpop.f32.mrf.mxu0
      %v559 = vadd.f32 0.0, %v558
      %560 = vmatmul.f32.gmra.mxu0 %v349
      %v561 = vpop.f32.mrf.mxu0
      %v562 = vadd.f32 0.0, %v561
      %563 = vmatmul.f32.gmra.mxu0 %v352
      %v564 = vpop.f32.mrf.mxu0
      %v565 = vadd.f32 0.0, %v564
      %566 = vmatmul.f32.gmra.mxu0 %v355
      %v567 = vpop.f32.mrf.mxu0
      %v568 = vadd.f32 0.0, %v567
      %569 = vmatmul.f32.gmra.mxu0 %v358
      %v570 = vpop.f32.mrf.mxu0
      %v571 = vadd.f32 0.0, %v570
      %572 = vmatmul.f32.gmra.mxu0 %v361
      %v573 = vpop.f32.mrf.mxu0
      %v574 = vadd.f32 0.0, %v573
      %575 = vmatmul.f32.gmra.mxu0 %v364
      %v576 = vpop.f32.mrf.mxu0
      %v577 = vadd.f32 0.0, %v576
      %578 = vmatmul.f32.gmra.mxu0 %v367
      %v579 = vpop.f32.mrf.mxu0
      %v580 = vadd.f32 0.0, %v579
      %581 = vmatmul.f32.gmra.mxu0 %v370
      %v582 = vpop.f32.mrf.mxu0
      %v583 = vadd.f32 0.0, %v582
      %584 = vmatmul.f32.gmra.mxu0 %v373
      %v585 = vpop.f32.mrf.mxu0
      %v586 = vadd.f32 0.0, %v585
      %587 = vmatmul.f32.gmra.mxu0 %v376
      %v588 = vpop.f32.mrf.mxu0
      %v589 = vadd.f32 0.0, %v588
      %590 = vmatmul.f32.gmra.mxu0 %v379
      %v591 = vpop.f32.mrf.mxu0
      %v592 = vadd.f32 0.0, %v591
      %593 = vmatmul.f32.gmra.mxu0 %v382
      %v594 = vpop.f32.mrf.mxu0
      %v595 = vadd.f32 0.0, %v594
      %596 = vmatmul.f32.gmra.mxu0 %v385
      %v597 = vpop.f32.mrf.mxu0
      %v598 = vadd.f32 0.0, %v597
      %599 = vmatmul.f32.gmra.mxu0 %v388
      %v600 = vpop.f32.mrf.mxu0
      %v601 = vadd.f32 0.0, %v600
      %602 = vmatmul.f32.gmra.mxu0 %v391
      %v603 = vpop.f32.mrf.mxu0
      %v604 = vadd.f32 0.0, %v603
      %605 = vmatmul.f32.gmra.mxu0 %v394
      %v606 = vpop.f32.mrf.mxu0
      %v607 = vadd.f32 0.0, %v606
      %608 = vmatmul.f32.gmra.mxu0 %v397
      %v609 = vpop.f32.mrf.mxu0
      %v610 = vadd.f32 0.0, %v609
      %611 = vmatmul.f32.gmra.mxu0 %v400
      %v612 = vpop.f32.mrf.mxu0
      %v613 = vadd.f32 0.0, %v612
      %614 = vmatmul.f32.gmra.mxu0 %v403
      %v615 = vpop.f32.mrf.mxu0
      %v616 = vadd.f32 0.0, %v615
      %617 = vmatmul.f32.gmra.mxu0 %v406
      %v618 = vpop.f32.mrf.mxu0
      %v619 = vadd.f32 0.0, %v618
      %620 = vmatmul.f32.gmra.mxu0 %v409
      %v621 = vpop.f32.mrf.mxu0
      %v622 = vadd.f32 0.0, %v621
      %623 = vmatmul.f32.gmra.mxu0 %v412
      %v624 = vpop.f32.mrf.mxu0
      %v625 = vadd.f32 0.0, %v624
      %626 = vmatmul.f32.gmra.mxu0 %v415
      %v627 = vpop.f32.mrf.mxu0
      %v628 = vadd.f32 0.0, %v627
      %629 = vmatmul.f32.gmra.mxu0 %v418
      %v630 = vpop.f32.mrf.mxu0
      %v631 = vadd.f32 0.0, %v630
      %632 = vmatmul.f32.gmra.mxu0 %v421
      %v633 = vpop.f32.mrf.mxu0
      %v634 = vadd.f32 0.0, %v633
      %635 = vmatmul.f32.gmra.mxu0 %v424
      %v636 = vpop.f32.mrf.mxu0
      %v637 = vadd.f32 0.0, %v636
      %638 = vmatmul.f32.gmra.mxu0 %v427
      %v639 = vpop.f32.mrf.mxu0
      %v640 = vadd.f32 0.0, %v639
      %641 = vmatmul.f32.gmra.mxu0 %v430
      %v642 = vpop.f32.mrf.mxu0
      %v643 = vadd.f32 0.0, %v642
      %644 = vdwg.mxu0
      %v645 = vmul.f32 %v454, 0.5
      %v646 = vmul.f32 %v457, 0.5
      %v647 = vmul.f32 %v460, 0.5
      %v648 = vmul.f32 %v463, 0.5
      %v649 = vmul.f32 %v466, 0.5
      %v650 = vmul.f32 %v469, 0.5
      %v651 = vmul.f32 %v472, 0.5
      %v652 = vmul.f32 %v475, 0.5
      %v653 = vmul.f32 %v478, 0.5
      %v654 = vmul.f32 %v481, 0.5
      %v655 = vmul.f32 %v484, 0.5
      %v656 = vmul.f32 %v487, 0.5
      %v657 = vmul.f32 %v490, 0.5
      %v658 = vmul.f32 %v493, 0.5
      %v659 = vmul.f32 %v496, 0.5
      %v660 = vmul.f32 %v499, 0.5
      %v661 = vmul.f32 %v502, 0.5
      %v662 = vmul.f32 %v505, 0.5
      %v663 = vmul.f32 %v508, 0.5
      %v664 = vmul.f32 %v511, 0.5
      %v665 = vmul.f32 %v514, 0.5
      %v666 = vmul.f32 %v517, 0.5
      %v667 = vmul.f32 %v520, 0.5
      %v668 = vmul.f32 %v523, 0.5
      %v669 = vmul.f32 %v526, 0.5
      %v670 = vmul.f32 %v529, 0.5
      %v671 = vmul.f32 %v532, 0.5
      %v672 = vmul.f32 %v535, 0.5
      %v673 = vmul.f32 %v538, 0.5
      %v674 = vmul.f32 %v541, 0.5
      %v675 = vmul.f32 %v544, 0.5
      %v676 = vmul.f32 %v547, 0.5
      %v677 = vmul.f32 %v550, 0.5
      %v678 = vmul.f32 %v553, 0.5
      %v679 = vmul.f32 %v556, 0.5
      %v680 = vmul.f32 %v559, 0.5
      %v681 = vmul.f32 %v562, 0.5
      %v682 = vmul.f32 %v565, 0.5
      %v683 = vmul.f32 %v568, 0.5
      %v684 = vmul.f32 %v571, 0.5
      %v685 = vmul.f32 %v574, 0.5
      %v686 = vmul.f32 %v577, 0.5
      %v687 = vmul.f32 %v580, 0.5
      %v688 = vmul.f32 %v583, 0.5
      %v689 = vmul.f32 %v586, 0.5
      %v690 = vmul.f32 %v589, 0.5
      %v691 = vmul.f32 %v592, 0.5
      %v692 = vmul.f32 %v595, 0.5
      %v693 = vmul.f32 %v598, 0.5
      %v694 = vmul.f32 %v601, 0.5
      %v695 = vmul.f32 %v604, 0.5
      %v696 = vmul.f32 %v607, 0.5
      %v697 = vmul.f32 %v610, 0.5
      %v698 = vmul.f32 %v613, 0.5
      %v699 = vmul.f32 %v616, 0.5
      %v700 = vmul.f32 %v619, 0.5
      %v701 = vmul.f32 %v622, 0.5
      %v702 = vmul.f32 %v625, 0.5
      %v703 = vmul.f32 %v628, 0.5
      %v704 = vmul.f32 %v631, 0.5
      %v705 = vmul.f32 %v634, 0.5
      %v706 = vmul.f32 %v637, 0.5
      %v707 = vmul.f32 %v640, 0.5
      %v708 = vmul.f32 %v643, 0.5
      %v709 = vld [vmem:[%s2] sm:$0x1]
      %v711 = vperm.slane %v709, 0
      %v713 = vadd.f32 %v645, %v711
      %v714 = vadd.f32 %v646, %v711
      %v715 = vadd.f32 %v647, %v711
      %v716 = vadd.f32 %v648, %v711
      %v717 = vadd.f32 %v649, %v711
      %v718 = vadd.f32 %v650, %v711
      %v719 = vadd.f32 %v651, %v711
      %v720 = vadd.f32 %v652, %v711
      %v721 = vadd.f32 %v653, %v711
      %v722 = vadd.f32 %v654, %v711
      %v723 = vadd.f32 %v655, %v711
      %v724 = vadd.f32 %v656, %v711
      %v725 = vadd.f32 %v657, %v711
      %v726 = vadd.f32 %v658, %v711
      %v727 = vadd.f32 %v659, %v711
      %v728 = vadd.f32 %v660, %v711
      %v729 = vadd.f32 %v661, %v711
      %v730 = vadd.f32 %v662, %v711
      %v731 = vadd.f32 %v663, %v711
      %v732 = vadd.f32 %v664, %v711
      %v733 = vadd.f32 %v665, %v711
      %v734 = vadd.f32 %v666, %v711
      %v735 = vadd.f32 %v667, %v711
      %v736 = vadd.f32 %v668, %v711
      %v737 = vadd.f32 %v669, %v711
      %v738 = vadd.f32 %v670, %v711
      %v739 = vadd.f32 %v671, %v711
      %v740 = vadd.f32 %v672, %v711
      %v741 = vadd.f32 %v673, %v711
      %v742 = vadd.f32 %v674, %v711
      %v743 = vadd.f32 %v675, %v711
      %v744 = vadd.f32 %v676, %v711
      %v745 = vadd.f32 %v677, %v711
      %v746 = vadd.f32 %v678, %v711
      %v747 = vadd.f32 %v679, %v711
      %v748 = vadd.f32 %v680, %v711
      %v749 = vadd.f32 %v681, %v711
      %v750 = vadd.f32 %v682, %v711
      %v751 = vadd.f32 %v683, %v711
      %v752 = vadd.f32 %v684, %v711
      %v753 = vadd.f32 %v685, %v711
      %v754 = vadd.f32 %v686, %v711
      %v755 = vadd.f32 %v687, %v711
      %v756 = vadd.f32 %v688, %v711
      %v757 = vadd.f32 %v689, %v711
      %v758 = vadd.f32 %v690, %v711
      %v759 = vadd.f32 %v691, %v711
      %v760 = vadd.f32 %v692, %v711
      %v761 = vadd.f32 %v693, %v711
      %v762 = vadd.f32 %v694, %v711
      %v763 = vadd.f32 %v695, %v711
      %v764 = vadd.f32 %v696, %v711
      %v765 = vadd.f32 %v697, %v711
      %v766 = vadd.f32 %v698, %v711
      %v767 = vadd.f32 %v699, %v711
      %v768 = vadd.f32 %v700, %v711
      %v769 = vadd.f32 %v701, %v711
      %v770 = vadd.f32 %v702, %v711
      %v771 = vadd.f32 %v703, %v711
      %v772 = vadd.f32 %v704, %v711
      %v773 = vadd.f32 %v705, %v711
      %v774 = vadd.f32 %v706, %v711
      %v775 = vadd.f32 %v707, %v711
      %v776 = vadd.f32 %v708, %v711
      %vm777 = vcmp.ge.f32.partialorder %v713, 0.0
      %vm778 = vcmp.ge.f32.partialorder %v714, 0.0
      %vm779 = vcmp.ge.f32.partialorder %v715, 0.0
      %vm780 = vcmp.ge.f32.partialorder %v716, 0.0
      %vm781 = vcmp.ge.f32.partialorder %v717, 0.0
      %vm782 = vcmp.ge.f32.partialorder %v718, 0.0
      %vm783 = vcmp.ge.f32.partialorder %v719, 0.0
      %vm784 = vcmp.ge.f32.partialorder %v720, 0.0
      %vm785 = vcmp.ge.f32.partialorder %v721, 0.0
      %vm786 = vcmp.ge.f32.partialorder %v722, 0.0
      %vm787 = vcmp.ge.f32.partialorder %v723, 0.0
      %vm788 = vcmp.ge.f32.partialorder %v724, 0.0
      %vm789 = vcmp.ge.f32.partialorder %v725, 0.0
      %vm790 = vcmp.ge.f32.partialorder %v726, 0.0
      %vm791 = vcmp.ge.f32.partialorder %v727, 0.0
      %vm792 = vcmp.ge.f32.partialorder %v728, 0.0
      %vm793 = vcmp.ge.f32.partialorder %v729, 0.0
      %vm794 = vcmp.ge.f32.partialorder %v730, 0.0
      %vm795 = vcmp.ge.f32.partialorder %v731, 0.0
      %vm796 = vcmp.ge.f32.partialorder %v732, 0.0
      %vm797 = vcmp.ge.f32.partialorder %v733, 0.0
      %vm798 = vcmp.ge.f32.partialorder %v734, 0.0
      %vm799 = vcmp.ge.f32.partialorder %v735, 0.0
      %vm800 = vcmp.ge.f32.partialorder %v736, 0.0
      %vm801 = vcmp.ge.f32.partialorder %v737, 0.0
      %vm802 = vcmp.ge.f32.partialorder %v738, 0.0
      %vm803 = vcmp.ge.f32.partialorder %v739, 0.0
      %vm804 = vcmp.ge.f32.partialorder %v740, 0.0
      %vm805 = vcmp.ge.f32.partialorder %v741, 0.0
      %vm806 = vcmp.ge.f32.partialorder %v742, 0.0
      %vm807 = vcmp.ge.f32.partialorder %v743, 0.0
      %vm808 = vcmp.ge.f32.partialorder %v744, 0.0
      %vm809 = vcmp.ge.f32.partialorder %v745, 0.0
      %vm810 = vcmp.ge.f32.partialorder %v746, 0.0
      %vm811 = vcmp.ge.f32.partialorder %v747, 0.0
      %vm812 = vcmp.ge.f32.partialorder %v748, 0.0
      %vm813 = vcmp.ge.f32.partialorder %v749, 0.0
      %vm814 = vcmp.ge.f32.partialorder %v750, 0.0
      %vm815 = vcmp.ge.f32.partialorder %v751, 0.0
      %vm816 = vcmp.ge.f32.partialorder %v752, 0.0
      %vm817 = vcmp.ge.f32.partialorder %v753, 0.0
      %vm818 = vcmp.ge.f32.partialorder %v754, 0.0
      %vm819 = vcmp.ge.f32.partialorder %v755, 0.0
      %vm820 = vcmp.ge.f32.partialorder %v756, 0.0
      %vm821 = vcmp.ge.f32.partialorder %v757, 0.0
      %vm822 = vcmp.ge.f32.partialorder %v758, 0.0
      %vm823 = vcmp.ge.f32.partialorder %v759, 0.0
      %vm824 = vcmp.ge.f32.partialorder %v760, 0.0
      %vm825 = vcmp.ge.f32.partialorder %v761, 0.0
      %vm826 = vcmp.ge.f32.partialorder %v762, 0.0
      %vm827 = vcmp.ge.f32.partialorder %v763, 0.0
      %vm828 = vcmp.ge.f32.partialorder %v764, 0.0
      %vm829 = vcmp.ge.f32.partialorder %v765, 0.0
      %vm830 = vcmp.ge.f32.partialorder %v766, 0.0
      %vm831 = vcmp.ge.f32.partialorder %v767, 0.0
      %vm832 = vcmp.ge.f32.partialorder %v768, 0.0
      %vm833 = vcmp.ge.f32.partialorder %v769, 0.0
      %vm834 = vcmp.ge.f32.partialorder %v770, 0.0
      %vm835 = vcmp.ge.f32.partialorder %v771, 0.0
      %vm836 = vcmp.ge.f32.partialorder %v772, 0.0
      %vm837 = vcmp.ge.f32.partialorder %v773, 0.0
      %vm838 = vcmp.ge.f32.partialorder %v774, 0.0
      %vm839 = vcmp.ge.f32.partialorder %v775, 0.0
      %vm840 = vcmp.ge.f32.partialorder %v776, 0.0
      %v841 = vmul.f32 %v713, 0.2
      %v842 = vmul.f32 %v714, 0.2
      %v843 = vmul.f32 %v715, 0.2
      %v844 = vmul.f32 %v716, 0.2
      %v845 = vmul.f32 %v717, 0.2
      %v846 = vmul.f32 %v718, 0.2
      %v847 = vmul.f32 %v719, 0.2
      %v848 = vmul.f32 %v720, 0.2
      %v849 = vmul.f32 %v721, 0.2
      %v850 = vmul.f32 %v722, 0.2
      %v851 = vmul.f32 %v723, 0.2
      %v852 = vmul.f32 %v724, 0.2
      %v853 = vmul.f32 %v725, 0.2
      %v854 = vmul.f32 %v726, 0.2
      %v855 = vmul.f32 %v727, 0.2
      %v856 = vmul.f32 %v728, 0.2
      %v857 = vmul.f32 %v729, 0.2
      %v858 = vmul.f32 %v730, 0.2
      %v859 = vmul.f32 %v731, 0.2
      %v860 = vmul.f32 %v732, 0.2
      %v861 = vmul.f32 %v733, 0.2
      %v862 = vmul.f32 %v734, 0.2
      %v863 = vmul.f32 %v735, 0.2
      %v864 = vmul.f32 %v736, 0.2
      %v865 = vmul.f32 %v737, 0.2
      %v866 = vmul.f32 %v738, 0.2
      %v867 = vmul.f32 %v739, 0.2
      %v868 = vmul.f32 %v740, 0.2
      %v869 = vmul.f32 %v741, 0.2
      %v870 = vmul.f32 %v742, 0.2
      %v871 = vmul.f32 %v743, 0.2
      %v872 = vmul.f32 %v744, 0.2
      %v873 = vmul.f32 %v745, 0.2
      %v874 = vmul.f32 %v746, 0.2
      %v875 = vmul.f32 %v747, 0.2
      %v876 = vmul.f32 %v748, 0.2
      %v877 = vmul.f32 %v749, 0.2
      %v878 = vmul.f32 %v750, 0.2
      %v879 = vmul.f32 %v751, 0.2
      %v880 = vmul.f32 %v752, 0.2
      %v881 = vmul.f32 %v753, 0.2
      %v882 = vmul.f32 %v754, 0.2
      %v883 = vmul.f32 %v755, 0.2
      %v884 = vmul.f32 %v756, 0.2
      %v885 = vmul.f32 %v757, 0.2
      %v886 = vmul.f32 %v758, 0.2
      %v887 = vmul.f32 %v759, 0.2
      %v888 = vmul.f32 %v760, 0.2
      %v889 = vmul.f32 %v761, 0.2
      %v890 = vmul.f32 %v762, 0.2
      %v891 = vmul.f32 %v763, 0.2
      %v892 = vmul.f32 %v764, 0.2
      %v893 = vmul.f32 %v765, 0.2
      %v894 = vmul.f32 %v766, 0.2
      %v895 = vmul.f32 %v767, 0.2
      %v896 = vmul.f32 %v768, 0.2
      %v897 = vmul.f32 %v769, 0.2
      %v898 = vmul.f32 %v770, 0.2
      %v899 = vmul.f32 %v771, 0.2
      %v900 = vmul.f32 %v772, 0.2
      %v901 = vmul.f32 %v773, 0.2
      %v902 = vmul.f32 %v774, 0.2
      %v903 = vmul.f32 %v775, 0.2
      %v904 = vmul.f32 %v776, 0.2
      %v905 = vsel %vm777, %v713, %v841
      %v906 = vsel %vm778, %v714, %v842
      %v907 = vsel %vm779, %v715, %v843
      %v908 = vsel %vm780, %v716, %v844
      %v909 = vsel %vm781, %v717, %v845
      %v910 = vsel %vm782, %v718, %v846
      %v911 = vsel %vm783, %v719, %v847
      %v912 = vsel %vm784, %v720, %v848
      %v913 = vsel %vm785, %v721, %v849
      %v914 = vsel %vm786, %v722, %v850
      %v915 = vsel %vm787, %v723, %v851
      %v916 = vsel %vm788, %v724, %v852
      %v917 = vsel %vm789, %v725, %v853
      %v918 = vsel %vm790, %v726, %v854
      %v919 = vsel %vm791, %v727, %v855
      %v920 = vsel %vm792, %v728, %v856
      %v921 = vsel %vm793, %v729, %v857
      %v922 = vsel %vm794, %v730, %v858
      %v923 = vsel %vm795, %v731, %v859
      %v924 = vsel %vm796, %v732, %v860
      %v925 = vsel %vm797, %v733, %v861
      %v926 = vsel %vm798, %v734, %v862
      %v927 = vsel %vm799, %v735, %v863
      %v928 = vsel %vm800, %v736, %v864
      %v929 = vsel %vm801, %v737, %v865
      %v930 = vsel %vm802, %v738, %v866
      %v931 = vsel %vm803, %v739, %v867
      %v932 = vsel %vm804, %v740, %v868
      %v933 = vsel %vm805, %v741, %v869
      %v934 = vsel %vm806, %v742, %v870
      %v935 = vsel %vm807, %v743, %v871
      %v936 = vsel %vm808, %v744, %v872
      %v937 = vsel %vm809, %v745, %v873
      %v938 = vsel %vm810, %v746, %v874
      %v939 = vsel %vm811, %v747, %v875
      %v940 = vsel %vm812, %v748, %v876
      %v941 = vsel %vm813, %v749, %v877
      %v942 = vsel %vm814, %v750, %v878
      %v943 = vsel %vm815, %v751, %v879
      %v944 = vsel %vm816, %v752, %v880
      %v945 = vsel %vm817, %v753, %v881
      %v946 = vsel %vm818, %v754, %v882
      %v947 = vsel %vm819, %v755, %v883
      %v948 = vsel %vm820, %v756, %v884
      %v949 = vsel %vm821, %v757, %v885
      %v950 = vsel %vm822, %v758, %v886
      %v951 = vsel %vm823, %v759, %v887
      %v952 = vsel %vm824, %v760, %v888
      %v953 = vsel %vm825, %v761, %v889
      %v954 = vsel %vm826, %v762, %v890
      %v955 = vsel %vm827, %v763, %v891
      %v956 = vsel %vm828, %v764, %v892
      %v957 = vsel %vm829, %v765, %v893
      %v958 = vsel %vm830, %v766, %v894
      %v959 = vsel %vm831, %v767, %v895
      %v960 = vsel %vm832, %v768, %v896
      %v961 = vsel %vm833, %v769, %v897
      %v962 = vsel %vm834, %v770, %v898
      %v963 = vsel %vm835, %v771, %v899
      %v964 = vsel %vm836, %v772, %v900
      %v965 = vsel %vm837, %v773, %v901
      %v966 = vsel %vm838, %v774, %v902
      %v967 = vsel %vm839, %v775, %v903
      %v968 = vsel %vm840, %v776, %v904
      %v969 = vmul.f32 %v905, 1.4142135
      %v970 = vmul.f32 %v906, 1.4142135
      %v971 = vmul.f32 %v907, 1.4142135
      %v972 = vmul.f32 %v908, 1.4142135
      %v973 = vmul.f32 %v909, 1.4142135
      %v974 = vmul.f32 %v910, 1.4142135
      %v975 = vmul.f32 %v911, 1.4142135
      %v976 = vmul.f32 %v912, 1.4142135
      %v977 = vmul.f32 %v913, 1.4142135
      %v978 = vmul.f32 %v914, 1.4142135
      %v979 = vmul.f32 %v915, 1.4142135
      %v980 = vmul.f32 %v916, 1.4142135
      %v981 = vmul.f32 %v917, 1.4142135
      %v982 = vmul.f32 %v918, 1.4142135
      %v983 = vmul.f32 %v919, 1.4142135
      %v984 = vmul.f32 %v920, 1.4142135
      %v985 = vmul.f32 %v921, 1.4142135
      %v986 = vmul.f32 %v922, 1.4142135
      %v987 = vmul.f32 %v923, 1.4142135
      %v988 = vmul.f32 %v924, 1.4142135
      %v989 = vmul.f32 %v925, 1.4142135
      %v990 = vmul.f32 %v926, 1.4142135
      %v991 = vmul.f32 %v927, 1.4142135
      %v992 = vmul.f32 %v928, 1.4142135
      %v993 = vmul.f32 %v929, 1.4142135
      %v994 = vmul.f32 %v930, 1.4142135
      %v995 = vmul.f32 %v931, 1.4142135
      %v996 = vmul.f32 %v932, 1.4142135
      %v997 = vmul.f32 %v933, 1.4142135
      %v998 = vmul.f32 %v934, 1.4142135
      %v999 = vmul.f32 %v935, 1.4142135
      %v1000 = vmul.f32 %v936, 1.4142135
      %v1001 = vmul.f32 %v937, 1.4142135
      %v1002 = vmul.f32 %v938, 1.4142135
      %v1003 = vmul.f32 %v939, 1.4142135
      %v1004 = vmul.f32 %v940, 1.4142135
      %v1005 = vmul.f32 %v941, 1.4142135
      %v1006 = vmul.f32 %v942, 1.4142135
      %v1007 = vmul.f32 %v943, 1.4142135
      %v1008 = vmul.f32 %v944, 1.4142135
      %v1009 = vmul.f32 %v945, 1.4142135
      %v1010 = vmul.f32 %v946, 1.4142135
      %v1011 = vmul.f32 %v947, 1.4142135
      %v1012 = vmul.f32 %v948, 1.4142135
      %v1013 = vmul.f32 %v949, 1.4142135
      %v1014 = vmul.f32 %v950, 1.4142135
      %v1015 = vmul.f32 %v951, 1.4142135
      %v1016 = vmul.f32 %v952, 1.4142135
      %v1017 = vmul.f32 %v953, 1.4142135
      %v1018 = vmul.f32 %v954, 1.4142135
      %v1019 = vmul.f32 %v955, 1.4142135
      %v1020 = vmul.f32 %v956, 1.4142135
      %v1021 = vmul.f32 %v957, 1.4142135
      %v1022 = vmul.f32 %v958, 1.4142135
      %v1023 = vmul.f32 %v959, 1.4142135
      %v1024 = vmul.f32 %v960, 1.4142135
      %v1025 = vmul.f32 %v961, 1.4142135
      %v1026 = vmul.f32 %v962, 1.4142135
      %v1027 = vmul.f32 %v963, 1.4142135
      %v1028 = vmul.f32 %v964, 1.4142135
      %v1029 = vmul.f32 %v965, 1.4142135
      %v1030 = vmul.f32 %v966, 1.4142135
      %v1031 = vmul.f32 %v967, 1.4142135
      %v1032 = vmul.f32 %v968, 1.4142135
      %v1033 = vpack.c.bf16 %v969, %v969
      %v1034 = vpack.c.bf16 %v970, %v970
      %v1035 = vpack.c.bf16 %v971, %v971
      %v1036 = vpack.c.bf16 %v972, %v972
      %v1037 = vpack.c.bf16 %v973, %v973
      %v1038 = vpack.c.bf16 %v974, %v974
      %v1039 = vpack.c.bf16 %v975, %v975
      %v1040 = vpack.c.bf16 %v976, %v976
      %v1041 = vpack.c.bf16 %v977, %v977
      %v1042 = vpack.c.bf16 %v978, %v978
      %v1043 = vpack.c.bf16 %v979, %v979
      %v1044 = vpack.c.bf16 %v980, %v980
      %v1045 = vpack.c.bf16 %v981, %v981
      %v1046 = vpack.c.bf16 %v982, %v982
      %v1047 = vpack.c.bf16 %v983, %v983
      %v1048 = vpack.c.bf16 %v984, %v984
      %v1049 = vpack.c.bf16 %v985, %v985
      %v1050 = vpack.c.bf16 %v986, %v986
      %v1051 = vpack.c.bf16 %v987, %v987
      %v1052 = vpack.c.bf16 %v988, %v988
      %v1053 = vpack.c.bf16 %v989, %v989
      %v1054 = vpack.c.bf16 %v990, %v990
      %v1055 = vpack.c.bf16 %v991, %v991
      %v1056 = vpack.c.bf16 %v992, %v992
      %v1057 = vpack.c.bf16 %v993, %v993
      %v1058 = vpack.c.bf16 %v994, %v994
      %v1059 = vpack.c.bf16 %v995, %v995
      %v1060 = vpack.c.bf16 %v996, %v996
      %v1061 = vpack.c.bf16 %v997, %v997
      %v1062 = vpack.c.bf16 %v998, %v998
      %v1063 = vpack.c.bf16 %v999, %v999
      %v1064 = vpack.c.bf16 %v1000, %v1000
      %v1065 = vpack.c.bf16 %v1001, %v1001
      %v1066 = vpack.c.bf16 %v1002, %v1002
      %v1067 = vpack.c.bf16 %v1003, %v1003
      %v1068 = vpack.c.bf16 %v1004, %v1004
      %v1069 = vpack.c.bf16 %v1005, %v1005
      %v1070 = vpack.c.bf16 %v1006, %v1006
      %v1071 = vpack.c.bf16 %v1007, %v1007
      %v1072 = vpack.c.bf16 %v1008, %v1008
      %v1073 = vpack.c.bf16 %v1009, %v1009
      %v1074 = vpack.c.bf16 %v1010, %v1010
      %v1075 = vpack.c.bf16 %v1011, %v1011
      %v1076 = vpack.c.bf16 %v1012, %v1012
      %v1077 = vpack.c.bf16 %v1013, %v1013
      %v1078 = vpack.c.bf16 %v1014, %v1014
      %v1079 = vpack.c.bf16 %v1015, %v1015
      %v1080 = vpack.c.bf16 %v1016, %v1016
      %v1081 = vpack.c.bf16 %v1017, %v1017
      %v1082 = vpack.c.bf16 %v1018, %v1018
      %v1083 = vpack.c.bf16 %v1019, %v1019
      %v1084 = vpack.c.bf16 %v1020, %v1020
      %v1085 = vpack.c.bf16 %v1021, %v1021
      %v1086 = vpack.c.bf16 %v1022, %v1022
      %v1087 = vpack.c.bf16 %v1023, %v1023
      %v1088 = vpack.c.bf16 %v1024, %v1024
      %v1089 = vpack.c.bf16 %v1025, %v1025
      %v1090 = vpack.c.bf16 %v1026, %v1026
      %v1091 = vpack.c.bf16 %v1027, %v1027
      %v1092 = vpack.c.bf16 %v1028, %v1028
      %v1093 = vpack.c.bf16 %v1029, %v1029
      %v1094 = vpack.c.bf16 %v1030, %v1030
      %v1095 = vpack.c.bf16 %v1031, %v1031
      %v1096 = vpack.c.bf16 %v1032, %v1032
      %1097 = vst [vmem:[%s172] sm:$0xf] %v1033
      %1098 = vst [vmem:[%s172 + $0x4] sm:$0xf] %v1034
      %1099 = vst [vmem:[%s172 + $0x8] sm:$0xf] %v1035
      %1100 = vst [vmem:[%s172 + $0xc] sm:$0xf] %v1036
      %1101 = vst [vmem:[%s172 + $0x10] sm:$0xf] %v1037
      %1102 = vst [vmem:[%s172 + $0x14] sm:$0xf] %v1038
      %1103 = vst [vmem:[%s172 + $0x18] sm:$0xf] %v1039
      %1104 = vst [vmem:[%s172 + $0x1c] sm:$0xf] %v1040
      %1105 = vst [vmem:[%s172 + $0x20] sm:$0xf] %v1041
      %1106 = vst [vmem:[%s172 + $0x24] sm:$0xf] %v1042
      %1107 = vst [vmem:[%s172 + $0x28] sm:$0xf] %v1043
      %1108 = vst [vmem:[%s172 + $0x2c] sm:$0xf] %v1044
      %1109 = vst [vmem:[%s172 + $0x30] sm:$0xf] %v1045
      %1110 = vst [vmem:[%s172 + $0x34] sm:$0xf] %v1046
      %1111 = vst [vmem:[%s172 + $0x38] sm:$0xf] %v1047
      %1112 = vst [vmem:[%s172 + $0x3c] sm:$0xf] %v1048
      %1113 = vst [vmem:[%s172 + $0x40] sm:$0xf] %v1049
      %1114 = vst [vmem:[%s172 + $0x44] sm:$0xf] %v1050
      %1115 = vst [vmem:[%s172 + $0x48] sm:$0xf] %v1051
      %1116 = vst [vmem:[%s172 + $0x4c] sm:$0xf] %v1052
      %1117 = vst [vmem:[%s172 + $0x50] sm:$0xf] %v1053
      %1118 = vst [vmem:[%s172 + $0x54] sm:$0xf] %v1054
      %1119 = vst [vmem:[%s172 + $0x58] sm:$0xf] %v1055
      %1120 = vst [vmem:[%s172 + $0x5c] sm:$0xf] %v1056
      %1121 = vst [vmem:[%s172 + $0x60] sm:$0xf] %v1057
      %1122 = vst [vmem:[%s172 + $0x64] sm:$0xf] %v1058
      %1123 = vst [vmem:[%s172 + $0x68] sm:$0xf] %v1059
      %1124 = vst [vmem:[%s172 + $0x6c] sm:$0xf] %v1060
      %1125 = vst [vmem:[%s172 + $0x70] sm:$0xf] %v1061
      %1126 = vst [vmem:[%s172 + $0x74] sm:$0xf] %v1062
      %1127 = vst [vmem:[%s172 + $0x78] sm:$0xf] %v1063
      %1128 = vst [vmem:[%s172 + $0x7c] sm:$0xf] %v1064
      %1129 = vst [vmem:[%s172 + $0x80] sm:$0xf] %v1065
      %1130 = vst [vmem:[%s172 + $0x84] sm:$0xf] %v1066
      %1131 = vst [vmem:[%s172 + $0x88] sm:$0xf] %v1067
      %1132 = vst [vmem:[%s172 + $0x8c] sm:$0xf] %v1068
      %1133 = vst [vmem:[%s172 + $0x90] sm:$0xf] %v1069
      %1134 = vst [vmem:[%s172 + $0x94] sm:$0xf] %v1070
      %1135 = vst [vmem:[%s172 + $0x98] sm:$0xf] %v1071
      %1136 = vst [vmem:[%s172 + $0x9c] sm:$0xf] %v1072
      %1137 = vst [vmem:[%s172 + $0xa0] sm:$0xf] %v1073
      %1138 = vst [vmem:[%s172 + $0xa4] sm:$0xf] %v1074
      %1139 = vst [vmem:[%s172 + $0xa8] sm:$0xf] %v1075
      %1140 = vst [vmem:[%s172 + $0xac] sm:$0xf] %v1076
      %1141 = vst [vmem:[%s172 + $0xb0] sm:$0xf] %v1077
      %1142 = vst [vmem:[%s172 + $0xb4] sm:$0xf] %v1078
      %1143 = vst [vmem:[%s172 + $0xb8] sm:$0xf] %v1079
      %1144 = vst [vmem:[%s172 + $0xbc] sm:$0xf] %v1080
      %1145 = vst [vmem:[%s172 + $0xc0] sm:$0xf] %v1081
      %1146 = vst [vmem:[%s172 + $0xc4] sm:$0xf] %v1082
      %1147 = vst [vmem:[%s172 + $0xc8] sm:$0xf] %v1083
      %1148 = vst [vmem:[%s172 + $0xcc] sm:$0xf] %v1084
      %1149 = vst [vmem:[%s172 + $0xd0] sm:$0xf] %v1085
      %1150 = vst [vmem:[%s172 + $0xd4] sm:$0xf] %v1086
      %1151 = vst [vmem:[%s172 + $0xd8] sm:$0xf] %v1087
      %1152 = vst [vmem:[%s172 + $0xdc] sm:$0xf] %v1088
      %1153 = vst [vmem:[%s172 + $0xe0] sm:$0xf] %v1089
      %1154 = vst [vmem:[%s172 + $0xe4] sm:$0xf] %v1090
      %1155 = vst [vmem:[%s172 + $0xe8] sm:$0xf] %v1091
      %1156 = vst [vmem:[%s172 + $0xec] sm:$0xf] %v1092
      %1157 = vst [vmem:[%s172 + $0xf0] sm:$0xf] %v1093
      %1158 = vst [vmem:[%s172 + $0xf4] sm:$0xf] %v1094
      %1159 = vst [vmem:[%s172 + $0xf8] sm:$0xf] %v1095
      %1160 = vst [vmem:[%s172 + $0xfc] sm:$0xf] %v1096
      %s1161 = smul.u32 64, %s14
      %p1162 = scmp.lt.s32.totalorder %s1161, 255
      %s1163 = scalar_select %p1162, %s1161, 255
      %s1164 = smul.addr %s1163, 4
      %s1165 = scalar_lea.vmem %s3, %s1164
      // Predicated region
      $region33: #{encoder_wiflow_forward.2} parent=31 // pred_check
        %p1166 = pneg %p100
      $region34: #{encoder_wiflow_forward.2} parent=31 // pred_check_branch
        %1168 = sbr.rel (%p1166) target = $region36
      $region35: #{encoder_wiflow_forward.2} parent=31 // pred_region
        %s1169 = smul.u32 64, %s14
      $region36: #{encoder_wiflow_forward.2} parent=31 // pred_fallthru
        _
    $region32: #{encoder_wiflow_forward.2} parent=5 // pred_fallthru
      _
    %p1170 = scmp.le.s32.totalorder 2, %s9
    // Predicated region
    $region37: #{encoder_wiflow_forward.2} parent=5 // pred_check
      %p1171 = pneg %p1170
    $region38: #{encoder_wiflow_forward.2} parent=5 // pred_check_branch
      %1173 = sbr.rel (%p1171) target = $region40
    $region39: #{encoder_wiflow_forward.2} parent=5 // pred_region
      %s1174 = ssub.s32 %s9, 2
      // Predicated region
      $region41: #{encoder_wiflow_forward.2} parent=39 // pred_check
        %p1175 = pneg %p106
      $region42: #{encoder_wiflow_forward.2} parent=39 // pred_check_branch
        %1177 = sbr.rel (%p1175) target = $region44
      $region43: #{encoder_wiflow_forward.2} parent=39 // pred_region
        %s1178 = smul.u32 64, %s15
        %p1179 = scmp.lt.s32.totalorder %s1178, 255
        %s1180 = scalar_select %p1179, %s1178, 255
        %s1181 = smul.addr %s1180, 4
        %s1182 = scalar_lea.vmem %s3, %s1181
      $region44: #{encoder_wiflow_forward.2} parent=39 // pred_fallthru
        _
    $region40: #{encoder_wiflow_forward.2} parent=5 // pred_fallthru
      _
  $region6: #{encoder_wiflow_forward.2} parent=0 // loop_footer
    %s13 = sadd.s32 1, %s9
  $region7: #{encoder_wiflow_forward.2} parent=0 // loop_footer_branch
    %8 = sbr.rel target = $region3
  $region8: #{encoder_wiflow_forward.2} parent=0 // loop_exit
    _

// kernel: encoder_wiflow_forward.3
$region0: #{encoder_wiflow_forward.3}
  #allocation0 [shape = 'u32[]', space=smem, size = 0x4, offset = 0x4, fixed_abs, tag = 'smem constant byte address 0x4 - core index']
  #allocation1 [shape = 'u32[72,128]{1,0:T(1,128)}', space=vmem, size = 0x9000, scoped, tag = 'internal scratch']
  %s0 = inlined_call_operand.vmem [shape: bf16[2,4,18,18,128], index: 0, kind: input, shape index: {}, may-alias: {0,1}]
  %s1 = inlined_call_operand.vmem [shape: bf16[2,4,18,18,128], index: 1, kind: input, shape index: {}, may-alias: {0,1}]
  %s2 = inlined_call_operand.vmem [shape: bf16[9,128,128], index: 2, kind: input, shape index: {}]
  %s3 = inlined_call_operand.vmem [shape: f32[1,128], index: 3, kind: input, shape index: {}]
  %s4 = inlined_call_operand.vmem [shape: bf16[2,16,16,128], index: 4, kind: output, shape index: {}]
  %s5 = sld [smem:[#allocation0]]
  $region152: #{encoder_wiflow_forward.3} parent=0
    _
  %s7 = ssub.s32 1, %s5
  %s8 = scalar_select 0, %s7, %s5
  $region1: #{encoder_wiflow_forward.3} parent=0
    #allocation2 [shape = 'u8[393216]{0}', space=vmem, size = 0x60000, scoped, tag = 'input window, operand 0']
    #allocation3 [shape = 'u8[98304]{0}', space=vmem, size = 0x18000, scoped, tag = 'input window, operand 1']
    loop: start=0, step=1, limit=6
    $region2: #{encoder_wiflow_forward.3} parent=1 // loop_pre_header
      _
    $region3: #{encoder_wiflow_forward.3} parent=1 // loop_header
      %s10 = sphi 0, %s14
      %p11 = scmp.ge.s32.totalorder %s10, 6
      %s17 = sphi 0, %s29
      %s18 = sphi 0, %s25
      %s19 = sphi 0, %s17
      %s20 = sphi 0, %s18
      %s21 = sphi 0, %s19
      %s22 = sphi 0, %s20
      %s34 = sphi 0, %s36
      %s37 = sphi 0, %s34
      %s38 = sphi 0, %s37
      %s54 = sphi 0, %s38
      %s66 = sphi 0, %s68
      %s69 = sphi 0, %s66
      %s70 = sphi 0, %s69
      %s86 = sphi 0, %s70
      %s90 = sphi 0, %s90
      %s92 = sphi 0, %s90
      %s93 = sphi 0, %s92
      %s107 = sphi 0, %s93
      %s111 = sphi 0, %s111
      %s113 = sphi 0, %s111
      %s114 = sphi 0, %s113
      %s128 = sphi 0, %s114
      %s136 = sphi 0, %s138
      %s139 = sphi 0, %s136
      %s140 = sphi 0, %s139
      %s156 = sphi 0, %s140
    $region4: #{encoder_wiflow_forward.3} parent=1 // loop_header_branch
      %13 = sbr.rel (%p11) target = $region8
    $region5: #{encoder_wiflow_forward.3} parent=1 // loop_body
      %s15 = ssub.s32 %s10, 1
      %s16 = ssub.s32 %s10, 2
      %s23 = sadd.s32 1, %s18
      %p24 = scmp.ge.s32.totalorder %s23, 2
      %s25 = scalar_select %p24, 0, %s23
      %s26 = sadd.s32 1, %s17
      %s27 = scalar_select %p24, %s26, %s17
      %p28 = scmp.ge.s32.totalorder %s27, 2
      %s29 = scalar_select %p28, 0, %s27
      %s30 = ssub.s32 %s17, %s29
      %s31 = ssub.s32 %s18, %s25
      %s32 = sor.u32 %s30, %s31
      %p33 = scmp.eq.s32.totalorder %s32, 0
      %s35 = sadd.s32 %s34, 1
      %s36 = scalar_select %p33, %s34, %s35
      %p39 = pneg %p33
      %p40 = scmp.eq.s32.totalorder %s10, 3
      %p41 = por %p39, %p40
      %p42 = scmp.ne.s32.totalorder %s34, %s37
      %p43 = scmp.eq.s32.totalorder %s10, 0
      %p44 = por %p42, %p43
      %p45 = scmp.ne.s32.totalorder %s34, %s37
      %p46 = scmp.eq.s32.totalorder %s15, 3
      %p47 = por %p45, %p46
      %p48 = scmp.ne.s32.totalorder %s37, %s38
      %p49 = scmp.eq.s32.totalorder %s15, 0
      %p50 = por %p48, %p49
      %p51 = scmp.ne.s32.totalorder %s37, %s38
      %p52 = scmp.eq.s32.totalorder %s16, 3
      %p53 = por %p51, %p52
      %p55 = scmp.ne.s32.totalorder %s38, %s54
      %p56 = scmp.eq.s32.totalorder %s16, 0
      %p57 = por %p55, %p56
      %s58 = sadd.s32 %s18, 1
      %s59 = smul.u32 %s58, 4
      %s60 = sadd.s32 %s25, 1
      %s61 = smul.u32 %s60, 4
      %s62 = ssub.s32 %s17, %s29
      %s63 = ssub.s32 %s59, %s61
      %s64 = sor.u32 %s62, %s63
      %p65 = scmp.eq.s32.totalorder %s64, 0
      %s67 = sadd.s32 %s66, 1
      %s68 = scalar_select %p65, %s66, %s67
      %p71 = pneg %p65
      %p72 = scmp.eq.s32.totalorder %s10, 3
      %p73 = por %p71, %p72
      %p74 = scmp.ne.s32.totalorder %s66, %s69
      %p75 = scmp.eq.s32.totalorder %s10, 0
      %p76 = por %p74, %p75
      %p77 = scmp.ne.s32.totalorder %s66, %s69
      %p78 = scmp.eq.s32.totalorder %s15, 3
      %p79 = por %p77, %p78
      %p80 = scmp.ne.s32.totalorder %s69, %s70
      %p81 = scmp.eq.s32.totalorder %s15, 0
      %p82 = por %p80, %p81
      %p83 = scmp.ne.s32.totalorder %s69, %s70
      %p84 = scmp.eq.s32.totalorder %s16, 3
      %p85 = por %p83, %p84
      %p87 = scmp.ne.s32.totalorder %s70, %s86
      %p88 = scmp.eq.s32.totalorder %s16, 0
      %p89 = por %p87, %p88
      %s91 = sadd.s32 %s90, 1
      %p94 = scmp.eq.s32.totalorder %s10, 3
      %p95 = scmp.ne.s32.totalorder %s90, %s92
      %p96 = scmp.eq.s32.totalorder %s10, 0
      %p97 = por %p95, %p96
      %p98 = scmp.ne.s32.totalorder %s90, %s92
      %p99 = scmp.eq.s32.totalorder %s15, 3
      %p100 = por %p98, %p99
      %p101 = scmp.ne.s32.totalorder %s92, %s93
      %p102 = scmp.eq.s32.totalorder %s15, 0
      %p103 = por %p101, %p102
      %p104 = scmp.ne.s32.totalorder %s92, %s93
      %p105 = scmp.eq.s32.totalorder %s16, 3
      %p106 = por %p104, %p105
      %p108 = scmp.ne.s32.totalorder %s93, %s107
      %p109 = scmp.eq.s32.totalorder %s16, 0
      %p110 = por %p108, %p109
      %s112 = sadd.s32 %s111, 1
      %p115 = scmp.eq.s32.totalorder %s10, 3
      %p116 = scmp.ne.s32.totalorder %s111, %s113
      %p117 = scmp.eq.s32.totalorder %s10, 0
      %p118 = por %p116, %p117
      %p119 = scmp.ne.s32.totalorder %s111, %s113
      %p120 = scmp.eq.s32.totalorder %s15, 3
      %p121 = por %p119, %p120
      %p122 = scmp.ne.s32.totalorder %s113, %s114
      %p123 = scmp.eq.s32.totalorder %s15, 0
      %p124 = por %p122, %p123
      %p125 = scmp.ne.s32.totalorder %s113, %s114
      %p126 = scmp.eq.s32.totalorder %s16, 3
      %p127 = por %p125, %p126
      %p129 = scmp.ne.s32.totalorder %s114, %s128
      %p130 = scmp.eq.s32.totalorder %s16, 0
      %p131 = por %p129, %p130
      %s132 = ssub.s32 %s17, %s29
      %s133 = ssub.s32 %s18, %s25
      %s134 = sor.u32 %s132, %s133
      %p135 = scmp.eq.s32.totalorder %s134, 0
      %s137 = sadd.s32 %s136, 1
      %s138 = scalar_select %p135, %s136, %s137
      %p141 = pneg %p135
      %p142 = scmp.eq.s32.totalorder %s10, 3
      %p143 = por %p141, %p142
      %p144 = scmp.ne.s32.totalorder %s136, %s139
      %p145 = scmp.eq.s32.totalorder %s10, 0
      %p146 = por %p144, %p145
      %p147 = scmp.ne.s32.totalorder %s136, %s139
      %p148 = scmp.eq.s32.totalorder %s15, 3
      %p149 = por %p147, %p148
      %p150 = scmp.ne.s32.totalorder %s139, %s140
      %p151 = scmp.eq.s32.totalorder %s15, 0
      %p152 = por %p150, %p151
      %p153 = scmp.ne.s32.totalorder %s139, %s140
      %p154 = scmp.eq.s32.totalorder %s16, 3
      %p155 = por %p153, %p154
      %p157 = scmp.ne.s32.totalorder %s140, %s156
      %p158 = scmp.eq.s32.totalorder %s16, 0
      %p159 = por %p157, %p158
      %p160 = scmp.le.s32.totalorder 1, %s10
      %p161 = scmp.lt.s32.totalorder %s10, 5
      %p162 = pnand %p160, %p161
      %p163 = pneg %p162
      // Predicated region
      $region9: #{encoder_wiflow_forward.3} parent=5 // pred_check
        _
      $region10: #{encoder_wiflow_forward.3} parent=5 // pred_check_branch
        %165 = sbr.rel (%p162) target = $region12
      $region11: #{encoder_wiflow_forward.3} parent=5 // pred_region
        %s166 = ssub.s32 %s10, 1
        // Predicated region
        $region13: #{encoder_wiflow_forward.3} parent=11 // pred_check
          %p167 = pneg %p103
        $region14: #{encoder_wiflow_forward.3} parent=11 // pred_check_branch
          %169 = sbr.rel (%p167) target = $region16
        $region15: #{encoder_wiflow_forward.3} parent=11 // pred_region
          _
        $region16: #{encoder_wiflow_forward.3} parent=11 // pred_fallthru
          _
        // Predicated region
        $region17: #{encoder_wiflow_forward.3} parent=11 // pred_check
          %p170 = pneg %p124
        $region18: #{encoder_wiflow_forward.3} parent=11 // pred_check_branch
          %172 = sbr.rel (%p170) target = $region20
        $region19: #{encoder_wiflow_forward.3} parent=11 // pred_region
          _
        $region20: #{encoder_wiflow_forward.3} parent=11 // pred_fallthru
          _
      $region12: #{encoder_wiflow_forward.3} parent=5 // pred_fallthru
        _
      %p173 = scmp.lt.s32.totalorder %s10, 4
      // Predicated region
      $region21: #{encoder_wiflow_forward.3} parent=5 // pred_check
        %p174 = pneg %p173
      $region22: #{encoder_wiflow_forward.3} parent=5 // pred_check_branch
        %176 = sbr.rel (%p174) target = $region24
      $region23: #{encoder_wiflow_forward.3} parent=5 // pred_region
        // Predicated region
        $region25: #{encoder_wiflow_forward.3} parent=23 // pred_check
          %p177 = pneg %p44
        $region26: #{encoder_wiflow_forward.3} parent=23 // pred_check_branch
          %179 = sbr.rel (%p177) target = $region28
        $region27: #{encoder_wiflow_forward.3} parent=23 // pred_region
          %s180 = sand.u32 %s34, 1
          %s181 = sand.u32 %s34, 1
          %s182 = smul.addr %s181, 384
          %s183 = scalar_lea.vmem [#allocation2], %s182
          %s184 = smul.u32 8, %s18
          %s185 = ssub.s32 18, %s184
          %p186 = scmp.lt.s32.totalorder %s185, 8
          %s187 = scalar_select %p186, %s185, 8
          %s188 = smul.u32 16, %s187
          %s189 = smul.u32 %s188, 3
          %p190 = scmp.ne.s32.totalorder 0, %s189
          %s191 = smul.addr %s184, 3
          %s192 = smul.addr %s17, 216
          %s193 = sadd.s32 %s191, %s192
          %s194 = smul.addr %s193, 4
          %s195 = scalar_lea.vmem %s0, %s194
          %s196 = smul.u32 %s187, 3
          // Predicated region
          $region29: #{encoder_wiflow_forward.3} parent=27 // pred_check
            %p197 = pneg %p190
          $region30: #{encoder_wiflow_forward.3} parent=27 // pred_check_branch
            %199 = sbr.rel (%p197) target = $region32
          $region31: #{encoder_wiflow_forward.3} parent=27 // pred_region
            // Predicated region
            $region33: #{encoder_wiflow_forward.3} parent=31 // pred_check
              _
            $region34: #{encoder_wiflow_forward.3} parent=31 // pred_check_branch
              %201 = sbr.rel target = $region36
            $region35: #{encoder_wiflow_forward.3} parent=31 // pred_region
              // Predicated region
              $region55: #{encoder_wiflow_forward.3} parent=35 // pred_check
                _
              $region56: #{encoder_wiflow_forward.3} parent=35 // pred_check_branch
                %319 = sbr.rel (0) target = $region58
              $region57: #{encoder_wiflow_forward.3} parent=35 // pred_region
                %s320 = sshrl.u32 %s196, 4
                // While loop
                $region59: #{encoder_wiflow_forward.3} parent=57 // loop_pre_header
                  _
                $region60: #{encoder_wiflow_forward.3} parent=57 // loop_header
                  %s322 = sphi 0, %s324
                  %p323 = scmp.ge.s32.totalorder %s322, %s320
                  %s327 = sphi 0, %s332
                  %s328 = sphi %s195, %s335
                  %s329 = sphi %s183, %s336
                $region61: #{encoder_wiflow_forward.3} parent=57 // loop_header_branch
                  %326 = sbr.rel (%p323) target = $region65
                $region62: #{encoder_wiflow_forward.3} parent=57 // loop_body
                  %s330 = sadd.s32 1, %s327
                  %p331 = scmp.ge.s32.totalorder %s330, %s320
                  %s332 = scalar_select %p331, 0, %s330
                  %s333 = smul.u32 %s332, 64
                  %s334 = smul.u32 %s332, 64
                  %s335 = scalar_lea.vmem %s195, %s333
                  %s336 = scalar_lea.vmem %s183, %s334 [#allocation2]
                $region63: #{encoder_wiflow_forward.3} parent=57 // loop_footer
                  %s324 = sadd.s32 %s322, 1
                $region64: #{encoder_wiflow_forward.3} parent=57 // loop_footer_branch
                  %321 = sbr.rel target = $region60
                $region65: #{encoder_wiflow_forward.3} parent=57 // loop_exit
                  _
                %s337 = sshrl.u32 %s196, 4
                %s338 = sand.u32 %s196, 15
                %s339 = smul.u32 %s337, 16
                %s340 = smul.u32 4, %s339
                %s341 = scalar_lea.vmem %s195, %s340
                %s342 = smul.u32 4, %s339
                %s343 = scalar_lea.vmem %s183, %s342 [#allocation2]
                // While loop
                $region66: #{encoder_wiflow_forward.3} parent=57 // loop_pre_header
                  _
                $region67: #{encoder_wiflow_forward.3} parent=57 // loop_header
                  %s345 = sphi 0, %s347
                  %p346 = scmp.ge.s32.totalorder %s345, %s338
                  %s350 = sphi 0, %s355
                  %s351 = sphi %s341, %s358
                  %s352 = sphi %s343, %s359
                $region68: #{encoder_wiflow_forward.3} parent=57 // loop_header_branch
                  %349 = sbr.rel (%p346) target = $region72
                $region69: #{encoder_wiflow_forward.3} parent=57 // loop_body
                  %s353 = sadd.s32 1, %s350
                  %p354 = scmp.ge.s32.totalorder %s353, %s338
                  %s355 = scalar_select %p354, 0, %s353
                  %s356 = smul.u32 %s355, 4
                  %s357 = smul.u32 %s355, 4
                  %s358 = scalar_lea.vmem %s341, %s356
                  %s359 = scalar_lea.vmem %s343, %s357 [#allocation2]
                $region70: #{encoder_wiflow_forward.3} parent=57 // loop_footer
                  %s347 = sadd.s32 %s345, 1
                $region71: #{encoder_wiflow_forward.3} parent=57 // loop_footer_branch
                  %344 = sbr.rel target = $region67
                $region72: #{encoder_wiflow_forward.3} parent=57 // loop_exit
                  _
                %s361 = ssub.s32 16, 1
                %s362 = sshrl.u32 %s196, 3
                // While loop
                $region73: #{encoder_wiflow_forward.3} parent=57 // loop_pre_header
                  _
                $region74: #{encoder_wiflow_forward.3} parent=57 // loop_header
                  %s364 = sphi 0, %s366
                  %p365 = scmp.ge.s32.totalorder %s364, %s362
                  %s369 = sphi 0, %s438
                  %s370 = sphi %s195, %s441
                  %s371 = sphi %s183, %s442
                $region75: #{encoder_wiflow_forward.3} parent=57 // loop_header_branch
                  %368 = sbr.rel (%p365) target = $region79
                $region76: #{encoder_wiflow_forward.3} parent=57 // loop_body
                  %v372 = vld [vmem:[%s370] sm:%s361]
                  %373 = vst [vmem:[%s371] sm:%s361] %v372
                  %v374 = vld [vmem:[%s370 + $0x4] sm:%s361]
                  %375 = vst [vmem:[%s371 + $0x4] sm:%s361] %v374
                  %v376 = vld [vmem:[%s370 + $0x8] sm:%s361]
                  %377 = vst [vmem:[%s371 + $0x8] sm:%s361] %v376
                  %v378 = vld [vmem:[%s370 + $0xc] sm:%s361]
                  %379 = vst [vmem:[%s371 + $0xc] sm:%s361] %v378
                  %v380 = vld [vmem:[%s370 + $0x10] sm:%s361]
                  %381 = vst [vmem:[%s371 + $0x10] sm:%s361] %v380
                  %v382 = vld [vmem:[%s370 + $0x14] sm:%s361]
                  %383 = vst [vmem:[%s371 + $0x14] sm:%s361] %v382
                  %v384 = vld [vmem:[%s370 + $0x18] sm:%s361]
                  %385 = vst [vmem:[%s371 + $0x18] sm:%s361] %v384
                  %v386 = vld [vmem:[%s370 + $0x1c] sm:%s361]
                  %387 = vst [vmem:[%s371 + $0x1c] sm:%s361] %v386
                  %v388 = vld [vmem:[%s370 + $0xd8] sm:%s361]
                  %389 = vst [vmem:[%s371 + $0x60] sm:%s361] %v388
                  %v390 = vld [vmem:[%s370 + $0xdc] sm:%s361]
                  %391 = vst [vmem:[%s371 + $0x64] sm:%s361] %v390
                  %v392 = vld [vmem:[%s370 + $0xe0] sm:%s361]
                  %393 = vst [vmem:[%s371 + $0x68] sm:%s361] %v392
                  %v394 = vld [vmem:[%s370 + $0xe4] sm:%s361]
                  %395 = vst [vmem:[%s371 + $0x6c] sm:%s361] %v394
                  %v396 = vld [vmem:[%s370 + $0xe8] sm:%s361]
                  %397 = vst [vmem:[%s371 + $0x70] sm:%s361] %v396
                  %v398 = vld [vmem:[%s370 + $0xec] sm:%s361]
                  %399 = vst [vmem:[%s371 + $0x74] sm:%s361] %v398
                  %v400 = vld [vmem:[%s370 + $0xf0] sm:%s361]
                  %401 = vst [vmem:[%s371 + $0x78] sm:%s361] %v400
                  %v402 = vld [vmem:[%s370 + $0xf4] sm:%s361]
                  %403 = vst [vmem:[%s371 + $0x7c] sm:%s361] %v402
                  %v404 = vld [vmem:[%s370 + $0x1b0] sm:%s361]
                  %405 = vst [vmem:[%s371 + $0xc0] sm:%s361] %v404
                  %v406 = vld [vmem:[%s370 + $0x1b4] sm:%s361]
                  %407 = vst [vmem:[%s371 + $0xc4] sm:%s361] %v406
                  %v408 = vld [vmem:[%s370 + $0x1b8] sm:%s361]
                  %409 = vst [vmem:[%s371 + $0xc8] sm:%s361] %v408
                  %v410 = vld [vmem:[%s370 + $0x1bc] sm:%s361]
                  %411 = vst [vmem:[%s371 + $0xcc] sm:%s361] %v410
                  %v412 = vld [vmem:[%s370 + $0x1c0] sm:%s361]
                  %413 = vst [vmem:[%s371 + $0xd0] sm:%s361] %v412
                  %v414 = vld [vmem:[%s370 + $0x1c4] sm:%s361]
                  %415 = vst [vmem:[%s371 + $0xd4] sm:%s361] %v414
                  %v416 = vld [vmem:[%s370 + $0x1c8] sm:%s361]
                  %417 = vst [vmem:[%s371 + $0xd8] sm:%s361] %v416
                  %v418 = vld [vmem:[%s370 + $0x1cc] sm:%s361]
                  %419 = vst [vmem:[%s371 + $0xdc] sm:%s361] %v418
                  %v420 = vld [vmem:[%s370 + $0x288] sm:%s361]
                  %421 = vst [vmem:[%s371 + $0x120] sm:%s361] %v420
                  %v422 = vld [vmem:[%s370 + $0x28c] sm:%s361]
                  %423 = vst [vmem:[%s371 + $0x124] sm:%s361] %v422
                  %v424 = vld [vmem:[%s370 + $0x290] sm:%s361]
                  %425 = vst [vmem:[%s371 + $0x128] sm:%s361] %v424
                  %v426 = vld [vmem:[%s370 + $0x294] sm:%s361]
                  %427 = vst [vmem:[%s371 + $0x12c] sm:%s361] %v426
                  %v428 = vld [vmem:[%s370 + $0x298] sm:%s361]
                  %429 = vst [vmem:[%s371 + $0x130] sm:%s361] %v428
                  %v430 = vld [vmem:[%s370 + $0x29c] sm:%s361]
                  %431 = vst [vmem:[%s371 + $0x134] sm:%s361] %v430
                  %v432 = vld [vmem:[%s370 + $0x2a0] sm:%s361]
                  %433 = vst [vmem:[%s371 + $0x138] sm:%s361] %v432
                  %v434 = vld [vmem:[%s370 + $0x2a4] sm:%s361]
                  %435 = vst [vmem:[%s371 + $0x13c] sm:%s361] %v434
                  %s436 = sadd.s32 1, %s369
                  %p437 = scmp.ge.s32.totalorder %s436, %s362
                  %s438 = scalar_select %p437, 0, %s436
                  %s439 = smul.u32 %s438, 32
                  %s440 = smul.u32 %s438, 32
                  %s441 = scalar_lea.vmem %s195, %s439
                  %s442 = scalar_lea.vmem %s183, %s440 [#allocation2]
                $region77: #{encoder_wiflow_forward.3} parent=57 // loop_footer
                  %s366 = sadd.s32 %s364, 1
                $region78: #{encoder_wiflow_forward.3} parent=57 // loop_footer_branch
                  %363 = sbr.rel target = $region74
                $region79: #{encoder_wiflow_forward.3} parent=57 // loop_exit
                  _
                %s443 = sshrl.u32 %s196, 3
                %s444 = sand.u32 %s196, 7
                %s445 = smul.u32 %s443, 8
                %s446 = smul.u32 4, %s445
                %s447 = scalar_lea.vmem %s195, %s446
                %s448 = smul.u32 4, %s445
                %s449 = scalar_lea.vmem %s183, %s448 [#allocation2]
                // While loop
                $region80: #{encoder_wiflow_forward.3} parent=57 // loop_pre_header
                  _
                $region81: #{encoder_wiflow_forward.3} parent=57 // loop_header
                  %s451 = sphi 0, %s453
                  %p452 = scmp.ge.s32.totalorder %s451, %s444
                  %s456 = sphi 0, %s469
                  %s457 = sphi %s447, %s472
                  %s458 = sphi %s449, %s473
                $region82: #{encoder_wiflow_forward.3} parent=57 // loop_header_branch
                  %455 = sbr.rel (%p452) target = $region86
                $region83: #{encoder_wiflow_forward.3} parent=57 // loop_body
                  %v459 = vld [vmem:[%s457] sm:%s361]
                  %460 = vst [vmem:[%s458] sm:%s361] %v459
                  %v461 = vld [vmem:[%s457 + $0xd8] sm:%s361]
                  %462 = vst [vmem:[%s458 + $0x60] sm:%s361] %v461
                  %v463 = vld [vmem:[%s457 + $0x1b0] sm:%s361]
                  %464 = vst [vmem:[%s458 + $0xc0] sm:%s361] %v463
                  %v465 = vld [vmem:[%s457 + $0x288] sm:%s361]
                  %466 = vst [vmem:[%s458 + $0x120] sm:%s361] %v465
                  %s467 = sadd.s32 1, %s456
                  %p468 = scmp.ge.s32.totalorder %s467, %s444
                  %s469 = scalar_select %p468, 0, %s467
                  %s470 = smul.u32 %s469, 4
                  %s471 = smul.u32 %s469, 4
                  %s472 = scalar_lea.vmem %s447, %s470
                  %s473 = scalar_lea.vmem %s449, %s471 [#allocation2]
                $region84: #{encoder_wiflow_forward.3} parent=57 // loop_footer
                  %s453 = sadd.s32 %s451, 1
                $region85: #{encoder_wiflow_forward.3} parent=57 // loop_footer_branch
                  %450 = sbr.rel target = $region81
                $region86: #{encoder_wiflow_forward.3} parent=57 // loop_exit
                  _
              $region58: #{encoder_wiflow_forward.3} parent=35 // pred_fallthru
                _
            $region36: #{encoder_wiflow_forward.3} parent=31 // pred_fallthru
              _
            // Predicated region
            $region37: #{encoder_wiflow_forward.3} parent=31 // pred_check
              _
            $region38: #{encoder_wiflow_forward.3} parent=31 // pred_check_branch
              %203 = sbr.rel (0) target = $region40
            $region39: #{encoder_wiflow_forward.3} parent=31 // pred_region
              %s205 = ssub.s32 16, 1
              %s206 = sshrl.u32 %s196, 3
              // While loop
              $region41: #{encoder_wiflow_forward.3} parent=39 // loop_pre_header
                _
              $region42: #{encoder_wiflow_forward.3} parent=39 // loop_header
                %s208 = sphi 0, %s210
                %p209 = scmp.ge.s32.totalorder %s208, %s206
                %s213 = sphi 0, %s282
                %s214 = sphi %s195, %s285
                %s215 = sphi %s183, %s286
              $region43: #{encoder_wiflow_forward.3} parent=39 // loop_header_branch
                %212 = sbr.rel (%p209) target = $region47
              $region44: #{encoder_wiflow_forward.3} parent=39 // loop_body
                %v216 = vld [vmem:[%s214] sm:%s205]
                %217 = vst [vmem:[%s215] sm:%s205] %v216
                %v218 = vld [vmem:[%s214 + $0x4] sm:%s205]
                %219 = vst [vmem:[%s215 + $0x4] sm:%s205] %v218
                %v220 = vld [vmem:[%s214 + $0x8] sm:%s205]
                %221 = vst [vmem:[%s215 + $0x8] sm:%s205] %v220
                %v222 = vld [vmem:[%s214 + $0xc] sm:%s205]
                %223 = vst [vmem:[%s215 + $0xc] sm:%s205] %v222
                %v224 = vld [vmem:[%s214 + $0x10] sm:%s205]
                %225 = vst [vmem:[%s215 + $0x10] sm:%s205] %v224
                %v226 = vld [vmem:[%s214 + $0x14] sm:%s205]
                %227 = vst [vmem:[%s215 + $0x14] sm:%s205] %v226
                %v228 = vld [vmem:[%s214 + $0x18] sm:%s205]
                %229 = vst [vmem:[%s215 + $0x18] sm:%s205] %v228
                %v230 = vld [vmem:[%s214 + $0x1c] sm:%s205]
                %231 = vst [vmem:[%s215 + $0x1c] sm:%s205] %v230
                %v232 = vld [vmem:[%s214 + $0xd8] sm:%s205]
                %233 = vst [vmem:[%s215 + $0x60] sm:%s205] %v232
                %v234 = vld [vmem:[%s214 + $0xdc] sm:%s205]
                %235 = vst [vmem:[%s215 + $0x64] sm:%s205] %v234
                %v236 = vld [vmem:[%s214 + $0xe0] sm:%s205]
                %237 = vst [vmem:[%s215 + $0x68] sm:%s205] %v236
                %v238 = vld [vmem:[%s214 + $0xe4] sm:%s205]
                %239 = vst [vmem:[%s215 + $0x6c] sm:%s205] %v238
                %v240 = vld [vmem:[%s214 + $0xe8] sm:%s205]
                %241 = vst [vmem:[%s215 + $0x70] sm:%s205] %v240
                %v242 = vld [vmem:[%s214 + $0xec] sm:%s205]
                %243 = vst [vmem:[%s215 + $0x74] sm:%s205] %v242
                %v244 = vld [vmem:[%s214 + $0xf0] sm:%s205]
                %245 = vst [vmem:[%s215 + $0x78] sm:%s205] %v244
                %v246 = vld [vmem:[%s214 + $0xf4] sm:%s205]
                %247 = vst [vmem:[%s215 + $0x7c] sm:%s205] %v246
                %v248 = vld [vmem:[%s214 + $0x1b0] sm:%s205]
                %249 = vst [vmem:[%s215 + $0xc0] sm:%s205] %v248
                %v250 = vld [vmem:[%s214 + $0x1b4] sm:%s205]
                %251 = vst [vmem:[%s215 + $0xc4] sm:%s205] %v250
                %v252 = vld [vmem:[%s214 + $0x1b8] sm:%s205]
                %253 = vst [vmem:[%s215 + $0xc8] sm:%s205] %v252
                %v254 = vld [vmem:[%s214 + $0x1bc] sm:%s205]
                %255 = vst [vmem:[%s215 + $0xcc] sm:%s205] %v254
                %v256 = vld [vmem:[%s214 + $0x1c0] sm:%s205]
                %257 = vst [vmem:[%s215 + $0xd0] sm:%s205] %v256
                %v258 = vld [vmem:[%s214 + $0x1c4] sm:%s205]
                %259 = vst [vmem:[%s215 + $0xd4] sm:%s205] %v258
                %v260 = vld [vmem:[%s214 + $0x1c8] sm:%s205]
                %261 = vst [vmem:[%s215 + $0xd8] sm:%s205] %v260
                %v262 = vld [vmem:[%s214 + $0x1cc] sm:%s205]
                %263 = vst [vmem:[%s215 + $0xdc] sm:%s205] %v262
                %v264 = vld [vmem:[%s214 + $0x288] sm:%s205]
                %265 = vst [vmem:[%s215 + $0x120] sm:%s205] %v264
                %v266 = vld [vmem:[%s214 + $0x28c] sm:%s205]
                %267 = vst [vmem:[%s215 + $0x124] sm:%s205] %v266
                %v268 = vld [vmem:[%s214 + $0x290] sm:%s205]
                %269 = vst [vmem:[%s215 + $0x128] sm:%s205] %v268
                %v270 = vld [vmem:[%s214 + $0x294] sm:%s205]
                %271 = vst [vmem:[%s215 + $0x12c] sm:%s205] %v270
                %v272 = vld [vmem:[%s214 + $0x298] sm:%s205]
                %273 = vst [vmem:[%s215 + $0x130] sm:%s205] %v272
                %v274 = vld [vmem:[%s214 + $0x29c] sm:%s205]
                %275 = vst [vmem:[%s215 + $0x134] sm:%s205] %v274
                %v276 = vld [vmem:[%s214 + $0x2a0] sm:%s205]
                %277 = vst [vmem:[%s215 + $0x138] sm:%s205] %v276
                %v278 = vld [vmem:[%s214 + $0x2a4] sm:%s205]
                %279 = vst [vmem:[%s215 + $0x13c] sm:%s205] %v278
                %s280 = sadd.s32 1, %s213
                %p281 = scmp.ge.s32.totalorder %s280, %s206
                %s282 = scalar_select %p281, 0, %s280
                %s283 = smul.u32 %s282, 32
                %s284 = smul.u32 %s282, 32
                %s285 = scalar_lea.vmem %s195, %s283
                %s286 = scalar_lea.vmem %s183, %s284 [#allocation2]
              $region45: #{encoder_wiflow_forward.3} parent=39 // loop_footer
                %s210 = sadd.s32 %s208, 1
              $region46: #{encoder_wiflow_forward.3} parent=39 // loop_footer_branch
                %207 = sbr.rel target = $region42
              $region47: #{encoder_wiflow_forward.3} parent=39 // loop_exit
                _
              %s287 = sshrl.u32 %s196, 3
              %s288 = sand.u32 %s196, 7
              %s289 = smul.u32 %s287, 8
              %s290 = smul.u32 4, %s289
              %s291 = scalar_lea.vmem %s195, %s290
              %s292 = smul.u32 4, %s289
              %s293 = scalar_lea.vmem %s183, %s292 [#allocation2]
              // While loop
              $region48: #{encoder_wiflow_forward.3} parent=39 // loop_pre_header
                _
              $region49: #{encoder_wiflow_forward.3} parent=39 // loop_header
                %s295 = sphi 0, %s297
                %p296 = scmp.ge.s32.totalorder %s295, %s288
                %s300 = sphi 0, %s313
                %s301 = sphi %s291, %s316
                %s302 = sphi %s293, %s317
              $region50: #{encoder_wiflow_forward.3} parent=39 // loop_header_branch
                %299 = sbr.rel (%p296) target = $region54
              $region51: #{encoder_wiflow_forward.3} parent=39 // loop_body
                %v303 = vld [vmem:[%s301] sm:%s205]
                %304 = vst [vmem:[%s302] sm:%s205] %v303
                %v305 = vld [vmem:[%s301 + $0xd8] sm:%s205]
                %306 = vst [vmem:[%s302 + $0x60] sm:%s205] %v305
                %v307 = vld [vmem:[%s301 + $0x1b0] sm:%s205]
                %308 = vst [vmem:[%s302 + $0xc0] sm:%s205] %v307
                %v309 = vld [vmem:[%s301 + $0x288] sm:%s205]
                %310 = vst [vmem:[%s302 + $0x120] sm:%s205] %v309
                %s311 = sadd.s32 1, %s300
                %p312 = scmp.ge.s32.totalorder %s311, %s288
                %s313 = scalar_select %p312, 0, %s311
                %s314 = smul.u32 %s313, 4
                %s315 = smul.u32 %s313, 4
                %s316 = scalar_lea.vmem %s291, %s314
                %s317 = scalar_lea.vmem %s293, %s315 [#allocation2]
              $region52: #{encoder_wiflow_forward.3} parent=39 // loop_footer
                %s297 = sadd.s32 %s295, 1
              $region53: #{encoder_wiflow_forward.3} parent=39 // loop_footer_branch
                %294 = sbr.rel target = $region49
              $region54: #{encoder_wiflow_forward.3} parent=39 // loop_exit
                _
            $region40: #{encoder_wiflow_forward.3} parent=31 // pred_fallthru
              _
          $region32: #{encoder_wiflow_forward.3} parent=27 // pred_fallthru
            _
          %474 = vnop
        $region28: #{encoder_wiflow_forward.3} parent=23 // pred_fallthru
          _
        // Predicated region
        $region87: #{encoder_wiflow_forward.3} parent=23 // pred_check
          %p475 = pneg %p76
        $region88: #{encoder_wiflow_forward.3} parent=23 // pred_check_branch
          %477 = sbr.rel (%p475) target = $region90
        $region89: #{encoder_wiflow_forward.3} parent=23 // pred_region
          %s478 = sand.u32 %s66, 1
          %s479 = sand.u32 %s66, 1
          %s480 = smul.addr %s479, 96
          %s481 = scalar_lea.vmem [#allocation3], %s480
          %s482 = sadd.s32 %s18, 1
          %s483 = smul.u32 %s482, 4
          %s484 = smul.u32 2, %s483
          %s485 = smul.addr %s484, 3
          %s486 = smul.addr %s17, 216
          %s487 = sadd.s32 %s485, %s486
          %s488 = smul.addr %s487, 4
          %s489 = scalar_lea.vmem %s1, %s488
          // Predicated region
          $region91: #{encoder_wiflow_forward.3} parent=89 // pred_check
            _
          $region92: #{encoder_wiflow_forward.3} parent=89 // pred_check_branch
            %491 = sbr.rel (0) target = $region94
          $region93: #{encoder_wiflow_forward.3} parent=89 // pred_region
            // Predicated region
            $region95: #{encoder_wiflow_forward.3} parent=93 // pred_check
              _
            $region96: #{encoder_wiflow_forward.3} parent=93 // pred_check_branch
              %493 = sbr.rel target = $region98
            $region97: #{encoder_wiflow_forward.3} parent=93 // pred_region
              // Predicated region
              $region110: #{encoder_wiflow_forward.3} parent=97 // pred_check
                _
              $region111: #{encoder_wiflow_forward.3} parent=97 // pred_check_branch
                %555 = sbr.rel (0) target = $region113
              $region112: #{encoder_wiflow_forward.3} parent=97 // pred_region
                loop: start=0, step=1, limit=1
                $region114: #{encoder_wiflow_forward.3} parent=112 // loop_pre_header
                  _
                $region115: #{encoder_wiflow_forward.3} parent=112 // loop_header
                  %s557 = sphi 0, %s561
                  %p558 = scmp.ge.s32.totalorder %s557, 1
                  %s562 = sphi %s489, %s489
                  %s563 = sphi %s481, %s481
                $region116: #{encoder_wiflow_forward.3} parent=112 // loop_header_branch
                  %560 = sbr.rel (%p558) target = $region120
                $region117: #{encoder_wiflow_forward.3} parent=112 // loop_body
                  _
                $region118: #{encoder_wiflow_forward.3} parent=112 // loop_footer
                  %s561 = sadd.s32 1, %s557
                $region119: #{encoder_wiflow_forward.3} parent=112 // loop_footer_branch
                  %556 = sbr.rel target = $region115
                $region120: #{encoder_wiflow_forward.3} parent=112 // loop_exit
                  _
                %s565 = ssub.s32 16, 1
                loop: start=0, step=1, limit=1
                $region121: #{encoder_wiflow_forward.3} parent=112 // loop_pre_header
                  _
                $region122: #{encoder_wiflow_forward.3} parent=112 // loop_header
                  %s567 = sphi 0, %s571
                  %p568 = scmp.ge.s32.totalorder %s567, 1
                  %s572 = sphi %s489, %s489
                  %s573 = sphi %s481, %s481
                $region123: #{encoder_wiflow_forward.3} parent=112 // loop_header_branch
                  %570 = sbr.rel (%p568) target = $region127
                $region124: #{encoder_wiflow_forward.3} parent=112 // loop_body
                  %v574 = vld [vmem:[%s572] sm:%s565]
                  %575 = vst [vmem:[%s573] sm:%s565] %v574
                  %v576 = vld [vmem:[%s572 + $0x4] sm:%s565]
                  %577 = vst [vmem:[%s573 + $0x4] sm:%s565] %v576
                  %v578 = vld [vmem:[%s572 + $0x8] sm:%s565]
                  %579 = vst [vmem:[%s573 + $0x8] sm:%s565] %v578
                  %v580 = vld [vmem:[%s572 + $0xc] sm:%s565]
                  %581 = vst [vmem:[%s573 + $0xc] sm:%s565] %v580
                  %v582 = vld [vmem:[%s572 + $0x10] sm:%s565]
                  %583 = vst [vmem:[%s573 + $0x10] sm:%s565] %v582
                  %v584 = vld [vmem:[%s572 + $0x14] sm:%s565]
                  %585 = vst [vmem:[%s573 + $0x14] sm:%s565] %v584
                  %v586 = vld [vmem:[%s572 + $0xd8] sm:%s565]
                  %587 = vst [vmem:[%s573 + $0x18] sm:%s565] %v586
                  %v588 = vld [vmem:[%s572 + $0xdc] sm:%s565]
                  %589 = vst [vmem:[%s573 + $0x1c] sm:%s565] %v588
                  %v590 = vld [vmem:[%s572 + $0xe0] sm:%s565]
                  %591 = vst [vmem:[%s573 + $0x20] sm:%s565] %v590
                  %v592 = vld [vmem:[%s572 + $0xe4] sm:%s565]
                  %593 = vst [vmem:[%s573 + $0x24] sm:%s565] %v592
                  %v594 = vld [vmem:[%s572 + $0xe8] sm:%s565]
                  %595 = vst [vmem:[%s573 + $0x28] sm:%s565] %v594
                  %v596 = vld [vmem:[%s572 + $0xec] sm:%s565]
                  %597 = vst [vmem:[%s573 + $0x2c] sm:%s565] %v596
                  %v598 = vld [vmem:[%s572 + $0x1b0] sm:%s565]
                  %599 = vst [vmem:[%s573 + $0x30] sm:%s565] %v598
                  %v600 = vld [vmem:[%s572 + $0x1b4] sm:%s565]
                  %601 = vst [vmem:[%s573 + $0x34] sm:%s565] %v600
                  %v602 = vld [vmem:[%s572 + $0x1b8] sm:%s565]
                  %603 = vst [vmem:[%s573 + $0x38] sm:%s565] %v602
                  %v604 = vld [vmem:[%s572 + $0x1bc] sm:%s565]
                  %605 = vst [vmem:[%s573 + $0x3c] sm:%s565] %v604
                  %v606 = vld [vmem:[%s572 + $0x1c0] sm:%s565]
                  %607 = vst [vmem:[%s573 + $0x40] sm:%s565] %v606
                  %v608 = vld [vmem:[%s572 + $0x1c4] sm:%s565]
                  %609 = vst [vmem:[%s573 + $0x44] sm:%s565] %v608
                  %v610 = vld [vmem:[%s572 + $0x288] sm:%s565]
                  %611 = vst [vmem:[%s573 + $0x48] sm:%s565] %v610
                  %v612 = vld [vmem:[%s572 + $0x28c] sm:%s565]
                  %613 = vst [vmem:[%s573 + $0x4c] sm:%s565] %v612
                  %v614 = vld [vmem:[%s572 + $0x290] sm:%s565]
                  %615 = vst [vmem:[%s573 + $0x50] sm:%s565] %v614
                  %v616 = vld [vmem:[%s572 + $0x294] sm:%s565]
                  %617 = vst [vmem:[%s573 + $0x54] sm:%s565] %v616
                  %v618 = vld [vmem:[%s572 + $0x298] sm:%s565]
                  %619 = vst [vmem:[%s573 + $0x58] sm:%s565] %v618
                  %v620 = vld [vmem:[%s572 + $0x29c] sm:%s565]
                  %621 = vst [vmem:[%s573 + $0x5c] sm:%s565] %v620
                $region125: #{encoder_wiflow_forward.3} parent=112 // loop_footer
                  %s571 = sadd.s32 1, %s567
                $region126: #{encoder_wiflow_forward.3} parent=112 // loop_footer_branch
                  %566 = sbr.rel target = $region122
                $region127: #{encoder_wiflow_forward.3} parent=112 // loop_exit
                  _
              $region113: #{encoder_wiflow_forward.3} parent=97 // pred_fallthru
                _
            $region98: #{encoder_wiflow_forward.3} parent=93 // pred_fallthru
              _
            // Predicated region
            $region99: #{encoder_wiflow_forward.3} parent=93 // pred_check
              _
            $region100: #{encoder_wiflow_forward.3} parent=93 // pred_check_branch
              %495 = sbr.rel (0) target = $region102
            $region101: #{encoder_wiflow_forward.3} parent=93 // pred_region
              %s497 = ssub.s32 16, 1
              loop: start=0, step=1, limit=1
              $region103: #{encoder_wiflow_forward.3} parent=101 // loop_pre_header
                _
              $region104: #{encoder_wiflow_forward.3} parent=101 // loop_header
                %s499 = sphi 0, %s503
                %p500 = scmp.ge.s32.totalorder %s499, 1
                %s504 = sphi %s489, %s489
                %s505 = sphi %s481, %s481
              $region105: #{encoder_wiflow_forward.3} parent=101 // loop_header_branch
                %502 = sbr.rel (%p500) target = $region109
              $region106: #{encoder_wiflow_forward.3} parent=101 // loop_body
                %v506 = vld [vmem:[%s504] sm:%s497]
                %507 = vst [vmem:[%s505] sm:%s497] %v506
                %v508 = vld [vmem:[%s504 + $0x4] sm:%s497]
                %509 = vst [vmem:[%s505 + $0x4] sm:%s497] %v508
                %v510 = vld [vmem:[%s504 + $0x8] sm:%s497]
                %511 = vst [vmem:[%s505 + $0x8] sm:%s497] %v510
                %v512 = vld [vmem:[%s504 + $0xc] sm:%s497]
                %513 = vst [vmem:[%s505 + $0xc] sm:%s497] %v512
                %v514 = vld [vmem:[%s504 + $0x10] sm:%s497]
                %515 = vst [vmem:[%s505 + $0x10] sm:%s497] %v514
                %v516 = vld [vmem:[%s504 + $0x14] sm:%s497]
                %517 = vst [vmem:[%s505 + $0x14] sm:%s497] %v516
                %v518 = vld [vmem:[%s504 + $0xd8] sm:%s497]
                %519 = vst [vmem:[%s505 + $0x18] sm:%s497] %v518
                %v520 = vld [vmem:[%s504 + $0xdc] sm:%s497]
                %521 = vst [vmem:[%s505 + $0x1c] sm:%s497] %v520
                %v522 = vld [vmem:[%s504 + $0xe0] sm:%s497]
                %523 = vst [vmem:[%s505 + $0x20] sm:%s497] %v522
                %v524 = vld [vmem:[%s504 + $0xe4] sm:%s497]
                %525 = vst [vmem:[%s505 + $0x24] sm:%s497] %v524
                %v526 = vld [vmem:[%s504 + $0xe8] sm:%s497]
                %527 = vst [vmem:[%s505 + $0x28] sm:%s497] %v526
                %v528 = vld [vmem:[%s504 + $0xec] sm:%s497]
                %529 = vst [vmem:[%s505 + $0x2c] sm:%s497] %v528
                %v530 = vld [vmem:[%s504 + $0x1b0] sm:%s497]
                %531 = vst [vmem:[%s505 + $0x30] sm:%s497] %v530
                %v532 = vld [vmem:[%s504 + $0x1b4] sm:%s497]
                %533 = vst [vmem:[%s505 + $0x34] sm:%s497] %v532
                %v534 = vld [vmem:[%s504 + $0x1b8] sm:%s497]
                %535 = vst [vmem:[%s505 + $0x38] sm:%s497] %v534
                %v536 = vld [vmem:[%s504 + $0x1bc] sm:%s497]
                %537 = vst [vmem:[%s505 + $0x3c] sm:%s497] %v536
                %v538 = vld [vmem:[%s504 + $0x1c0] sm:%s497]
                %539 = vst [vmem:[%s505 + $0x40] sm:%s497] %v538
                %v540 = vld [vmem:[%s504 + $0x1c4] sm:%s497]
                %541 = vst [vmem:[%s505 + $0x44] sm:%s497] %v540
                %v542 = vld [vmem:[%s504 + $0x288] sm:%s497]
                %543 = vst [vmem:[%s505 + $0x48] sm:%s497] %v542
                %v544 = vld [vmem:[%s504 + $0x28c] sm:%s497]
                %545 = vst [vmem:[%s505 + $0x4c] sm:%s497] %v544
                %v546 = vld [vmem:[%s504 + $0x290] sm:%s497]
                %547 = vst [vmem:[%s505 + $0x50] sm:%s497] %v546
                %v548 = vld [vmem:[%s504 + $0x294] sm:%s497]
                %549 = vst [vmem:[%s505 + $0x54] sm:%s497] %v548
                %v550 = vld [vmem:[%s504 + $0x298] sm:%s497]
                %551 = vst [vmem:[%s505 + $0x58] sm:%s497] %v550
                %v552 = vld [vmem:[%s504 + $0x29c] sm:%s497]
                %553 = vst [vmem:[%s505 + $0x5c] sm:%s497] %v552
              $region107: #{encoder_wiflow_forward.3} parent=101 // loop_footer
                %s503 = sadd.s32 1, %s499
              $region108: #{encoder_wiflow_forward.3} parent=101 // loop_footer_branch
                %498 = sbr.rel target = $region104
              $region109: #{encoder_wiflow_forward.3} parent=101 // loop_exit
                _
            $region102: #{encoder_wiflow_forward.3} parent=93 // pred_fallthru
              _
          $region94: #{encoder_wiflow_forward.3} parent=89 // pred_fallthru
            _
          %622 = vnop
        $region90: #{encoder_wiflow_forward.3} parent=23 // pred_fallthru
          _
      $region24: #{encoder_wiflow_forward.3} parent=5 // pred_fallthru
        _
      %p623 = scmp.le.s32.totalorder 1, %s10
      %p624 = scmp.lt.s32.totalorder %s10, 5
      %p625 = pnand %p623, %p624
      %p626 = pneg %p625
      // Predicated region
      $region128: #{encoder_wiflow_forward.3} parent=5 // pred_check
        _
      $region129: #{encoder_wiflow_forward.3} parent=5 // pred_check_branch
        %628 = sbr.rel (%p625) target = $region131
      $region130: #{encoder_wiflow_forward.3} parent=5 // pred_region
        %s629 = ssub.s32 %s10, 1
        %s630 = sand.u32 %s37, 1
        %s631 = sand.u32 %s37, 1
        %s632 = smul.addr %s631, 384
        %s633 = scalar_lea.vmem [#allocation2], %s632
        // Predicated region
        $region132: #{encoder_wiflow_forward.3} parent=130 // pred_check
          %p634 = pneg %p50
        $region133: #{encoder_wiflow_forward.3} parent=130 // pred_check_branch
          %636 = sbr.rel (%p634) target = $region135
        $region134: #{encoder_wiflow_forward.3} parent=130 // pred_region
          _
        $region135: #{encoder_wiflow_forward.3} parent=130 // pred_fallthru
          _
        %s637 = sand.u32 %s69, 1
        %s638 = sand.u32 %s69, 1
        %s639 = smul.addr %s638, 96
        %s640 = scalar_lea.vmem [#allocation3], %s639
        // Predicated region
        $region136: #{encoder_wiflow_forward.3} parent=130 // pred_check
          %p641 = pneg %p82
        $region137: #{encoder_wiflow_forward.3} parent=130 // pred_check_branch
          %643 = sbr.rel (%p641) target = $region139
        $region138: #{encoder_wiflow_forward.3} parent=130 // pred_region
          _
        $region139: #{encoder_wiflow_forward.3} parent=130 // pred_fallthru
          _
        %s644 = sand.u32 %s37, 1
        %s645 = sand.u32 %s37, 1
        %s646 = smul.addr %s645, 384
        %s647 = scalar_lea.vmem [#allocation2], %s646
        %p648 = pneg %p50
        %p649 = pneg %p47
        %s650 = sand.u32 %s69, 1
        %s651 = sand.u32 %s69, 1
        %s652 = smul.addr %s651, 96
        %s653 = scalar_lea.vmem [#allocation3], %s652
        %p654 = pneg %p82
        %p655 = pneg %p79
        %p656 = pneg %p103
        %p657 = pneg %p100
        %p658 = pneg %p124
        %p659 = pneg %p121
        %p660 = pneg %p152
        %p661 = pneg %p149
        %s662 = smul.u32 8, %s20
        %p663 = scmp.lt.s32.totalorder %s19, 1
        %s664 = scalar_select %p663, %s19, 1
        %p665 = scmp.lt.s32.totalorder %s662, 15
        %s666 = scalar_select %p665, %s662, 15
        %s667 = smul.addr %s666, 2
        %s668 = smul.addr %s664, 32
        %s669 = sadd.s32 %s667, %s668
        %s670 = smul.addr %s669, 4
        %s671 = scalar_lea.vmem %s4, %s670
        %s672 = smul.u32 8, %s20
        %s673 = ssub.s32 18, %s672
        %p674 = scmp.lt.s32.totalorder %s673, 8
        %s675 = scalar_select %p674, %s673, 8
        %s676 = smul.u32 16, %s675
        %s677 = smul.u32 %s676, 3
        %s678 = sadd.s32 %s20, 1
        %s679 = smul.u32 %s678, 4
        %s680 = smul.u32 2, %s679
        %s681 = smul.u32 8, %s20
        %p682 = scmp.lt.s32.totalorder %s19, 1
        %s683 = scalar_select %p682, %s19, 1
        %p684 = scmp.lt.s32.totalorder %s681, 15
        %s685 = scalar_select %p684, %s681, 15
        %s686 = smul.addr %s685, 2
        %s687 = smul.addr %s683, 32
        %s688 = sadd.s32 %s686, %s687
        %s689 = smul.addr %s688, 4
        %s690 = scalar_lea.vmem %s4, %s689
        %s691 = smul.u32 8, %s20
        %v692 = vld [vmem:[%s633] sm:$0xf]
        %v693 = vld [vmem:[%s633 + $0x4] sm:$0xf]
        %v694 = vld [vmem:[%s633 + $0x8] sm:$0x1]
        %v695 = vld [vmem:[%s633 + $0xc] sm:$0xf]
        %v696 = vld [vmem:[%s633 + $0x10] sm:$0xf]
        %v697 = vld [vmem:[%s633 + $0x14] sm:$0x1]
        %v698 = vld [vmem:[%s633 + $0x18] sm:$0xf]
        %v699 = vld [vmem:[%s633 + $0x1c] sm:$0xf]
        %v700 = vld [vmem:[%s633 + $0x20] sm:$0x1]
        %v701 = vld [vmem:[%s633 + $0x24] sm:$0xf]
        %v702 = vld [vmem:[%s633 + $0x28] sm:$0xf]
        %v703 = vld [vmem:[%s633 + $0x2c] sm:$0x1]
        %v704 = vld [vmem:[%s633 + $0x30] sm:$0xf]
        %v705 = vld [vmem:[%s633 + $0x34] sm:$0xf]
        %v706 = vld [vmem:[%s633 + $0x38] sm:$0x1]
        %v707 = vld [vmem:[%s633 + $0x3c] sm:$0xf]
        %v708 = vld [vmem:[%s633 + $0x40] sm:$0xf]
        %v709 = vld [vmem:[%s633 + $0x44] sm:$0x1]
        %v710 = vld [vmem:[%s633 + $0x48] sm:$0xf]
        %v711 = vld [vmem:[%s633 + $0x4c] sm:$0xf]
        %v712 = vld [vmem:[%s633 + $0x50] sm:$0x1]
        %v713 = vld [vmem:[%s633 + $0x54] sm:$0xf]
        %v714 = vld [vmem:[%s633 + $0x58] sm:$0xf]
        %v715 = vld [vmem:[%s633 + $0x5c] sm:$0x1]
        %v716 = vld [vmem:[%s640] sm:$0xf]
        %v717 = vld [vmem:[%s640 + $0x4] sm:$0xf]
        %v718 = vld [vmem:[%s640 + $0x8] sm:$0x1]
        %v719 = vld [vmem:[%s640 + $0xc] sm:$0xf]
        %v720 = vld [vmem:[%s640 + $0x10] sm:$0xf]
        %v721 = vld [vmem:[%s640 + $0x14] sm:$0x1]
        %v722 = vunpack.c.l.bf16 %v692
        %v723 = vunpack.c.l.bf16 %v693
        %v724 = vunpack.c.l.bf16 %v694
        %v725 = vunpack.c.l.bf16 %v695
        %v726 = vunpack.c.l.bf16 %v696
        %v727 = vunpack.c.l.bf16 %v697
        %v728 = vunpack.c.l.bf16 %v698
        %v729 = vunpack.c.l.bf16 %v699
        %v730 = vunpack.c.l.bf16 %v700
        %v731 = vunpack.c.l.bf16 %v701
        %v732 = vunpack.c.l.bf16 %v702
        %v733 = vunpack.c.l.bf16 %v703
        %v734 = vunpack.c.l.bf16 %v704
        %v735 = vunpack.c.l.bf16 %v705
        %v736 = vunpack.c.l.bf16 %v706
        %v737 = vunpack.c.l.bf16 %v707
        %v738 = vunpack.c.l.bf16 %v708
        %v739 = vunpack.c.l.bf16 %v709
        %v740 = vunpack.c.l.bf16 %v710
        %v741 = vunpack.c.l.bf16 %v711
        %v742 = vunpack.c.l.bf16 %v712
        %v743 = vunpack.c.l.bf16 %v713
        %v744 = vunpack.c.l.bf16 %v714
        %v745 = vunpack.c.l.bf16 %v715
        %v746 = vunpack.c.l.bf16 %v716
        %v747 = vunpack.c.l.bf16 %v717
        %v748 = vunpack.c.l.bf16 %v718
        %v749 = vunpack.c.l.bf16 %v719
        %v750 = vunpack.c.l.bf16 %v720
        %v751 = vunpack.c.l.bf16 %v721
        %s752 = scalar_lea.vmem %s633, 96 [#allocation2]
        %v753 = vld [vmem:[%s752] sm:$0xf]
        %v754 = vld [vmem:[%s752 + $0x4] sm:$0xf]
        %v755 = vld [vmem:[%s752 + $0x8] sm:$0x1]
        %v756 = vld [vmem:[%s752 + $0xc] sm:$0xf]
        %v757 = vld [vmem:[%s752 + $0x10] sm:$0xf]
        %v758 = vld [vmem:[%s752 + $0x14] sm:$0x1]
        %v759 = vld [vmem:[%s752 + $0x18] sm:$0xf]
        %v760 = vld [vmem:[%s752 + $0x1c] sm:$0xf]
        %v761 = vld [vmem:[%s752 + $0x20] sm:$0x1]
        %v762 = vld [vmem:[%s752 + $0x24] sm:$0xf]
        %v763 = vld [vmem:[%s752 + $0x28] sm:$0xf]
        %v764 = vld [vmem:[%s752 + $0x2c] sm:$0x1]
        %v765 = vld [vmem:[%s752 + $0x30] sm:$0xf]
        %v766 = vld [vmem:[%s752 + $0x34] sm:$0xf]
        %v767 = vld [vmem:[%s752 + $0x38] sm:$0x1]
        %v768 = vld [vmem:[%s752 + $0x3c] sm:$0xf]
        %v769 = vld [vmem:[%s752 + $0x40] sm:$0xf]
        %v770 = vld [vmem:[%s752 + $0x44] sm:$0x1]
        %v771 = vld [vmem:[%s752 + $0x48] sm:$0xf]
        %v772 = vld [vmem:[%s752 + $0x4c] sm:$0xf]
        %v773 = vld [vmem:[%s752 + $0x50] sm:$0x1]
        %v774 = vld [vmem:[%s752 + $0x54] sm:$0xf]
        %v775 = vld [vmem:[%s752 + $0x58] sm:$0xf]
        %v776 = vld [vmem:[%s752 + $0x5c] sm:$0x1]
        %s777 = scalar_lea.vmem %s640, 24 [#allocation3]
        %v778 = vld [vmem:[%s777] sm:$0xf]
        %v779 = vld [vmem:[%s777 + $0x4] sm:$0xf]
        %v780 = vld [vmem:[%s777 + $0x8] sm:$0x1]
        %v781 = vld [vmem:[%s777 + $0xc] sm:$0xf]
        %v782 = vld [vmem:[%s777 + $0x10] sm:$0xf]
        %v783 = vld [vmem:[%s777 + $0x14] sm:$0x1]
        %v784 = vunpack.c.l.bf16 %v753
        %v785 = vunpack.c.l.bf16 %v754
        %v786 = vunpack.c.l.bf16 %v755
        %v787 = vunpack.c.l.bf16 %v756
        %v788 = vunpack.c.l.bf16 %v757
        %v789 = vunpack.c.l.bf16 %v758
        %v790 = vunpack.c.l.bf16 %v759
        %v791 = vunpack.c.l.bf16 %v760
        %v792 = vunpack.c.l.bf16 %v761
        %v793 = vunpack.c.l.bf16 %v762
        %v794 = vunpack.c.l.bf16 %v763
        %v795 = vunpack.c.l.bf16 %v764
        %v796 = vunpack.c.l.bf16 %v765
        %v797 = vunpack.c.l.bf16 %v766
        %v798 = vunpack.c.l.bf16 %v767
        %v799 = vunpack.c.l.bf16 %v768
        %v800 = vunpack.c.l.bf16 %v769
        %v801 = vunpack.c.l.bf16 %v770
        %v802 = vunpack.c.l.bf16 %v771
        %v803 = vunpack.c.l.bf16 %v772
        %v804 = vunpack.c.l.bf16 %v773
        %v805 = vunpack.c.l.bf16 %v774
        %v806 = vunpack.c.l.bf16 %v775
        %v807 = vunpack.c.l.bf16 %v776
        %v808 = vunpack.c.l.bf16 %v778
        %v809 = vunpack.c.l.bf16 %v779
        %v810 = vunpack.c.l.bf16 %v780
        %v811 = vunpack.c.l.bf16 %v781
        %v812 = vunpack.c.l.bf16 %v782
        %v813 = vunpack.c.l.bf16 %v783
        %s814 = scalar_lea.vmem %s633, 192 [#allocation2]
        %v815 = vld [vmem:[%s814] sm:$0xf]
        %v816 = vld [vmem:[%s814 + $0x4] sm:$0xf]
        %v817 = vld [vmem:[%s814 + $0x8] sm:$0x1]
        %v818 = vld [vmem:[%s814 + $0xc] sm:$0xf]
        %v819 = vld [vmem:[%s814 + $0x10] sm:$0xf]
        %v820 = vld [vmem:[%s814 + $0x14] sm:$0x1]
        %v821 = vld [vmem:[%s814 + $0x18] sm:$0xf]
        %v822 = vld [vmem:[%s814 + $0x1c] sm:$0xf]
        %v823 = vld [vmem:[%s814 + $0x20] sm:$0x1]
        %v824 = vld [vmem:[%s814 + $0x24] sm:$0xf]
        %v825 = vld [vmem:[%s814 + $0x28] sm:$0xf]
        %v826 = vld [vmem:[%s814 + $0x2c] sm:$0x1]
        %v827 = vld [vmem:[%s814 + $0x30] sm:$0xf]
        %v828 = vld [vmem:[%s814 + $0x34] sm:$0xf]
        %v829 = vld [vmem:[%s814 + $0x38] sm:$0x1]
        %v830 = vld [vmem:[%s814 + $0x3c] sm:$0xf]
        %v831 = vld [vmem:[%s814 + $0x40] sm:$0xf]
        %v832 = vld [vmem:[%s814 + $0x44] sm:$0x1]
        %v833 = vld [vmem:[%s814 + $0x48] sm:$0xf]
        %v834 = vld [vmem:[%s814 + $0x4c] sm:$0xf]
        %v835 = vld [vmem:[%s814 + $0x50] sm:$0x1]
        %v836 = vld [vmem:[%s814 + $0x54] sm:$0xf]
        %v837 = vld [vmem:[%s814 + $0x58] sm:$0xf]
        %v838 = vld [vmem:[%s814 + $0x5c] sm:$0x1]
        %s839 = scalar_lea.vmem %s640, 48 [#allocation3]
        %v840 = vld [vmem:[%s839] sm:$0xf]
        %v841 = vld [vmem:[%s839 + $0x4] sm:$0xf]
        %v842 = vld [vmem:[%s839 + $0x8] sm:$0x1]
        %v843 = vld [vmem:[%s839 + $0xc] sm:$0xf]
        %v844 = vld [vmem:[%s839 + $0x10] sm:$0xf]
        %v845 = vld [vmem:[%s839 + $0x14] sm:$0x1]
        %v846 = vunpack.c.l.bf16 %v815
        %v847 = vunpack.c.l.bf16 %v816
        %v848 = vunpack.c.l.bf16 %v817
        %v849 = vunpack.c.l.bf16 %v818
        %v850 = vunpack.c.l.bf16 %v819
        %v851 = vunpack.c.l.bf16 %v820
        %v852 = vunpack.c.l.bf16 %v821
        %v853 = vunpack.c.l.bf16 %v822
        %v854 = vunpack.c.l.bf16 %v823
        %v855 = vunpack.c.l.bf16 %v824
        %v856 = vunpack.c.l.bf16 %v825
        %v857 = vunpack.c.l.bf16 %v826
        %v858 = vunpack.c.l.bf16 %v827
        %v859 = vunpack.c.l.bf16 %v828
        %v860 = vunpack.c.l.bf16 %v829
        %v861 = vunpack.c.l.bf16 %v830
        %v862 = vunpack.c.l.bf16 %v831
        %v863 = vunpack.c.l.bf16 %v832
        %v864 = vunpack.c.l.bf16 %v833
        %v865 = vunpack.c.l.bf16 %v834
        %v866 = vunpack.c.l.bf16 %v835
        %v867 = vunpack.c.l.bf16 %v836
        %v868 = vunpack.c.l.bf16 %v837
        %v869 = vunpack.c.l.bf16 %v838
        %v870 = vunpack.c.l.bf16 %v840
        %v871 = vunpack.c.l.bf16 %v841
        %v872 = vunpack.c.l.bf16 %v842
        %v873 = vunpack.c.l.bf16 %v843
        %v874 = vunpack.c.l.bf16 %v844
        %v875 = vunpack.c.l.bf16 %v845
        %s876 = scalar_lea.vmem %s633, 288 [#allocation2]
        %v877 = vld [vmem:[%s876] sm:$0xf]
        %v878 = vld [vmem:[%s876 + $0x4] sm:$0xf]
        %v879 = vld [vmem:[%s876 + $0x8] sm:$0x1]
        %v880 = vld [vmem:[%s876 + $0xc] sm:$0xf]
        %v881 = vld [vmem:[%s876 + $0x10] sm:$0xf]
        %v882 = vld [vmem:[%s876 + $0x14] sm:$0x1]
        %v883 = vld [vmem:[%s876 + $0x18] sm:$0xf]
        %v884 = vld [vmem:[%s876 + $0x1c] sm:$0xf]
        %v885 = vld [vmem:[%s876 + $0x20] sm:$0x1]
        %v886 = vld [vmem:[%s876 + $0x24] sm:$0xf]
        %v887 = vld [vmem:[%s876 + $0x28] sm:$0xf]
        %v888 = vld [vmem:[%s876 + $0x2c] sm:$0x1]
        %v889 = vld [vmem:[%s876 + $0x30] sm:$0xf]
        %v890 = vld [vmem:[%s876 + $0x34] sm:$0xf]
        %v891 = vld [vmem:[%s876 + $0x38] sm:$0x1]
        %v892 = vld [vmem:[%s876 + $0x3c] sm:$0xf]
        %v893 = vld [vmem:[%s876 + $0x40] sm:$0xf]
        %v894 = vld [vmem:[%s876 + $0x44] sm:$0x1]
        %v895 = vld [vmem:[%s876 + $0x48] sm:$0xf]
        %v896 = vld [vmem:[%s876 + $0x4c] sm:$0xf]
        %v897 = vld [vmem:[%s876 + $0x50] sm:$0x1]
        %v898 = vld [vmem:[%s876 + $0x54] sm:$0xf]
        %v899 = vld [vmem:[%s876 + $0x58] sm:$0xf]
        %v900 = vld [vmem:[%s876 + $0x5c] sm:$0x1]
        %s901 = scalar_lea.vmem %s640, 72 [#allocation3]
        %v902 = vld [vmem:[%s901] sm:$0xf]
        %v903 = vld [vmem:[%s901 + $0x4] sm:$0xf]
        %v904 = vld [vmem:[%s901 + $0x8] sm:$0x1]
        %v905 = vld [vmem:[%s901 + $0xc] sm:$0xf]
        %v906 = vld [vmem:[%s901 + $0x10] sm:$0xf]
        %v907 = vld [vmem:[%s901 + $0x14] sm:$0x1]
        %v908 = vunpack.c.l.bf16 %v877
        %v909 = vunpack.c.l.bf16 %v878
        %v910 = vunpack.c.l.bf16 %v879
        %v911 = vunpack.c.l.bf16 %v880
        %v912 = vunpack.c.l.bf16 %v881
        %v913 = vunpack.c.l.bf16 %v882
        %v914 = vunpack.c.l.bf16 %v883
        %v915 = vunpack.c.l.bf16 %v884
        %v916 = vunpack.c.l.bf16 %v885
        %v917 = vunpack.c.l.bf16 %v886
        %v918 = vunpack.c.l.bf16 %v887
        %v919 = vunpack.c.l.bf16 %v888
        %v920 = vunpack.c.l.bf16 %v889
        %v921 = vunpack.c.l.bf16 %v890
        %v922 = vunpack.c.l.bf16 %v891
        %v923 = vunpack.c.l.bf16 %v892
        %v924 = vunpack.c.l.bf16 %v893
        %v925 = vunpack.c.l.bf16 %v894
        %v926 = vunpack.c.l.bf16 %v895
        %v927 = vunpack.c.l.bf16 %v896
        %v928 = vunpack.c.l.bf16 %v897
        %v929 = vunpack.c.l.bf16 %v898
        %v930 = vunpack.c.l.bf16 %v899
        %v931 = vunpack.c.l.bf16 %v900
        %v932 = vunpack.c.l.bf16 %v902
        %v933 = vunpack.c.l.bf16 %v903
        %v934 = vunpack.c.l.bf16 %v904
        %v935 = vunpack.c.l.bf16 %v905
        %v936 = vunpack.c.l.bf16 %v906
        %v937 = vunpack.c.l.bf16 %v907
        %v938 = vmul.f32 %v722, 0.125
        %v939 = vmul.f32 %v723, 0.125
        %v940 = vmul.f32 %v724, 0.125
        %v941 = vmul.f32 %v725, 0.125
        %v942 = vmul.f32 %v726, 0.125
        %v943 = vmul.f32 %v727, 0.125
        %v944 = vmul.f32 %v728, 0.125
        %v945 = vmul.f32 %v729, 0.125
        %v946 = vmul.f32 %v730, 0.125
        %v947 = vmul.f32 %v731, 0.125
        %v948 = vmul.f32 %v732, 0.125
        %v949 = vmul.f32 %v733, 0.125
        %v950 = vmul.f32 %v734, 0.125
        %v951 = vmul.f32 %v735, 0.125
        %v952 = vmul.f32 %v736, 0.125
        %v953 = vmul.f32 %v737, 0.125
        %v954 = vmul.f32 %v738, 0.125
        %v955 = vmul.f32 %v739, 0.125
        %v956 = vmul.f32 %v740, 0.125
        %v957 = vmul.f32 %v741, 0.125
        %v958 = vmul.f32 %v742, 0.125
        %v959 = vmul.f32 %v743, 0.125
        %v960 = vmul.f32 %v744, 0.125
        %v961 = vmul.f32 %v745, 0.125
        %v962 = vmul.f32 %v746, 0.125
        %v963 = vmul.f32 %v747, 0.125
        %v964 = vmul.f32 %v748, 0.125
        %v965 = vmul.f32 %v749, 0.125
        %v966 = vmul.f32 %v750, 0.125
        %v967 = vmul.f32 %v751, 0.125
        %v968 = vmul.f32 %v784, 0.375
        %v969 = vmul.f32 %v785, 0.375
        %v970 = vmul.f32 %v786, 0.375
        %v971 = vmul.f32 %v787, 0.375
        %v972 = vmul.f32 %v788, 0.375
        %v973 = vmul.f32 %v789, 0.375
        %v974 = vmul.f32 %v790, 0.375
        %v975 = vmul.f32 %v791, 0.375
        %v976 = vmul.f32 %v792, 0.375
        %v977 = vmul.f32 %v793, 0.375
        %v978 = vmul.f32 %v794, 0.375
        %v979 = vmul.f32 %v795, 0.375
        %v980 = vmul.f32 %v796, 0.375
        %v981 = vmul.f32 %v797, 0.375
        %v982 = vmul.f32 %v798, 0.375
        %v983 = vmul.f32 %v799, 0.375
        %v984 = vmul.f32 %v800, 0.375
        %v985 = vmul.f32 %v801, 0.375
        %v986 = vmul.f32 %v802, 0.375
        %v987 = vmul.f32 %v803, 0.375
        %v988 = vmul.f32 %v804, 0.375
        %v989 = vmul.f32 %v805, 0.375
        %v990 = vmul.f32 %v806, 0.375
        %v991 = vmul.f32 %v807, 0.375
        %v992 = vmul.f32 %v808, 0.375
        %v993 = vmul.f32 %v809, 0.375
        %v994 = vmul.f32 %v810, 0.375
        %v995 = vmul.f32 %v811, 0.375
        %v996 = vmul.f32 %v812, 0.375
        %v997 = vmul.f32 %v813, 0.375
        %v998 = vadd.f32 %v938, %v968
        %v999 = vadd.f32 %v939, %v969
        %v1000 = vadd.f32 %v940, %v970
        %v1001 = vadd.f32 %v941, %v971
        %v1002 = vadd.f32 %v942, %v972
        %v1003 = vadd.f32 %v943, %v973
        %v1004 = vadd.f32 %v944, %v974
        %v1005 = vadd.f32 %v945, %v975
        %v1006 = vadd.f32 %v946, %v976
        %v1007 = vadd.f32 %v947, %v977
        %v1008 = vadd.f32 %v948, %v978
        %v1009 = vadd.f32 %v949, %v979
        %v1010 = vadd.f32 %v950, %v980
        %v1011 = vadd.f32 %v951, %v981
        %v1012 = vadd.f32 %v952, %v982
        %v1013 = vadd.f32 %v953, %v983
        %v1014 = vadd.f32 %v954, %v984
        %v1015 = vadd.f32 %v955, %v985
        %v1016 = vadd.f32 %v956, %v986
        %v1017 = vadd.f32 %v957, %v987
        %v1018 = vadd.f32 %v958, %v988
        %v1019 = vadd.f32 %v959, %v989
        %v1020 = vadd.f32 %v960, %v990
        %v1021 = vadd.f32 %v961, %v991
        %v1022 = vadd.f32 %v962, %v992
        %v1023 = vadd.f32 %v963, %v993
        %v1024 = vadd.f32 %v964, %v994
        %v1025 = vadd.f32 %v965, %v995
        %v1026 = vadd.f32 %v966, %v996
        %v1027 = vadd.f32 %v967, %v997
        %v1028 = vmul.f32 %v722, 0.375
        %v1029 = vmul.f32 %v723, 0.375
        %v1030 = vmul.f32 %v724, 0.375
        %v1031 = vmul.f32 %v725, 0.375
        %v1032 = vmul.f32 %v726, 0.375
        %v1033 = vmul.f32 %v727, 0.375
        %v1034 = vmul.f32 %v728, 0.375
        %v1035 = vmul.f32 %v729, 0.375
        %v1036 = vmul.f32 %v730, 0.375
        %v1037 = vmul.f32 %v731, 0.375
        %v1038 = vmul.f32 %v732, 0.375
        %v1039 = vmul.f32 %v733, 0.375
        %v1040 = vmul.f32 %v734, 0.375
        %v1041 = vmul.f32 %v735, 0.375
        %v1042 = vmul.f32 %v736, 0.375
        %v1043 = vmul.f32 %v737, 0.375
        %v1044 = vmul.f32 %v738, 0.375
        %v1045 = vmul.f32 %v739, 0.375
        %v1046 = vmul.f32 %v740, 0.375
        %v1047 = vmul.f32 %v741, 0.375
        %v1048 = vmul.f32 %v742, 0.375
        %v1049 = vmul.f32 %v743, 0.375
        %v1050 = vmul.f32 %v744, 0.375
        %v1051 = vmul.f32 %v745, 0.375
        %v1052 = vmul.f32 %v746, 0.375
        %v1053 = vmul.f32 %v747, 0.375
        %v1054 = vmul.f32 %v748, 0.375
        %v1055 = vmul.f32 %v749, 0.375
        %v1056 = vmul.f32 %v750, 0.375
        %v1057 = vmul.f32 %v751, 0.375
        %vm1088 = vcmask 1046528
        %v1089 = vrot.slane %v1028, 1
        %v1090 = vrot.slane %v1029, 1
        %v1091 = vsel %vm1088, %v1089, %v1090
        %v1092 = vrot.slane %v1030, 1
        %v1093 = vsel %vm1088, %v1090, %v1092
        %v1094 = vrot.slane %v1031, 1
        %v1095 = vrot.slane %v1032, 1
        %v1096 = vsel %vm1088, %v1094, %v1095
        %v1097 = vrot.slane %v1033, 1
        %v1098 = vsel %vm1088, %v1095, %v1097
        %v1099 = vrot.slane %v1034, 1
        %v1100 = vrot.slane %v1035, 1
        %v1101 = vsel %vm1088, %v1099, %v1100
        %v1102 = vrot.slane %v1036, 1
        %v1103 = vsel %vm1088, %v1100, %v1102
        %v1104 = vrot.slane %v1037, 1
        %v1105 = vrot.slane %v1038, 1
        %v1106 = vsel %vm1088, %v1104, %v1105
        %v1107 = vrot.slane %v1039, 1
        %v1108 = vsel %vm1088, %v1105, %v1107
        %v1109 = vrot.slane %v1040, 1
        %v1110 = vrot.slane %v1041, 1
        %v1111 = vsel %vm1088, %v1109, %v1110
        %v1112 = vrot.slane %v1042, 1
        %v1113 = vsel %vm1088, %v1110, %v1112
        %v1114 = vrot.slane %v1043, 1
        %v1115 = vrot.slane %v1044, 1
        %v1116 = vsel %vm1088, %v1114, %v1115
        %v1117 = vrot.slane %v1045, 1
        %v1118 = vsel %vm1088, %v1115, %v1117
        %v1119 = vrot.slane %v1046, 1
        %v1120 = vrot.slane %v1047, 1
        %v1121 = vsel %vm1088, %v1119, %v1120
        %v1122 = vrot.slane %v1048, 1
        %v1123 = vsel %vm1088, %v1120, %v1122
        %v1124 = vrot.slane %v1049, 1
        %v1125 = vrot.slane %v1050, 1
        %v1126 = vsel %vm1088, %v1124, %v1125
        %v1127 = vrot.slane %v1051, 1
        %v1128 = vsel %vm1088, %v1125, %v1127
        %v1129 = vrot.slane %v1052, 1
        %v1130 = vrot.slane %v1053, 1
        %v1131 = vsel %vm1088, %v1129, %v1130
        %v1132 = vrot.slane %v1054, 1
        %v1133 = vsel %vm1088, %v1130, %v1132
        %v1134 = vrot.slane %v1055, 1
        %v1135 = vrot.slane %v1056, 1
        %v1136 = vsel %vm1088, %v1134, %v1135
        %v1137 = vrot.slane %v1057, 1
        %v1138 = vsel %vm1088, %v1135, %v1137
        %v1169 = vadd.f32 %v998, %v1091
        %v1170 = vadd.f32 %v999, %v1093
        %v1171 = vadd.f32 %v1000, %v1092
        %v1172 = vadd.f32 %v1001, %v1096
        %v1173 = vadd.f32 %v1002, %v1098
        %v1174 = vadd.f32 %v1003, %v1097
        %v1175 = vadd.f32 %v1004, %v1101
        %v1176 = vadd.f32 %v1005, %v1103
        %v1177 = vadd.f32 %v1006, %v1102
        %v1178 = vadd.f32 %v1007, %v1106
        %v1179 = vadd.f32 %v1008, %v1108
        %v1180 = vadd.f32 %v1009, %v1107
        %v1181 = vadd.f32 %v1010, %v1111
        %v1182 = vadd.f32 %v1011, %v1113
        %v1183 = vadd.f32 %v1012, %v1112
        %v1184 = vadd.f32 %v1013, %v1116
        %v1185 = vadd.f32 %v1014, %v1118
        %v1186 = vadd.f32 %v1015, %v1117
        %v1187 = vadd.f32 %v1016, %v1121
        %v1188 = vadd.f32 %v1017, %v1123
        %v1189 = vadd.f32 %v1018, %v1122
        %v1190 = vadd.f32 %v1019, %v1126
        %v1191 = vadd.f32 %v1020, %v1128
        %v1192 = vadd.f32 %v1021, %v1127
        %v1193 = vadd.f32 %v1022, %v1131
        %v1194 = vadd.f32 %v1023, %v1133
        %v1195 = vadd.f32 %v1024, %v1132
        %v1196 = vadd.f32 %v1025, %v1136
        %v1197 = vadd.f32 %v1026, %v1138
        %v1198 = vadd.f32 %v1027, %v1137
        %v1199 = vmul.f32 %v784, 0.125
        %v1200 = vmul.f32 %v785, 0.125
        %v1201 = vmul.f32 %v786, 0.125
        %v1202 = vmul.f32 %v787, 0.125
        %v1203 = vmul.f32 %v788, 0.125
        %v1204 = vmul.f32 %v789, 0.125
        %v1205 = vmul.f32 %v790, 0.125
        %v1206 = vmul.f32 %v791, 0.125
        %v1207 = vmul.f32 %v792, 0.125
        %v1208 = vmul.f32 %v793, 0.125
        %v1209 = vmul.f32 %v794, 0.125
        %v1210 = vmul.f32 %v795, 0.125
        %v1211 = vmul.f32 %v796, 0.125
        %v1212 = vmul.f32 %v797, 0.125
        %v1213 = vmul.f32 %v798, 0.125
        %v1214 = vmul.f32 %v799, 0.125
        %v1215 = vmul.f32 %v800, 0.125
        %v1216 = vmul.f32 %v801, 0.125
        %v1217 = vmul.f32 %v802, 0.125
        %v1218 = vmul.f32 %v803, 0.125
        %v1219 = vmul.f32 %v804, 0.125
        %v1220 = vmul.f32 %v805, 0.125
        %v1221 = vmul.f32 %v806, 0.125
        %v1222 = vmul.f32 %v807, 0.125
        %v1223 = vmul.f32 %v808, 0.125
        %v1224 = vmul.f32 %v809, 0.125
        %v1225 = vmul.f32 %v810, 0.125
        %v1226 = vmul.f32 %v811, 0.125
        %v1227 = vmul.f32 %v812, 0.125
        %v1228 = vmul.f32 %v813, 0.125
        %v1259 = vrot.slane %v1199, 1
        %v1260 = vrot.slane %v1200, 1
        %v1261 = vsel %vm1088, %v1259, %v1260
        %v1262 = vrot.slane %v1201, 1
        %v1263 = vsel %vm1088, %v1260, %v1262
        %v1264 = vrot.slane %v1202, 1
        %v1265 = vrot.slane %v1203, 1
        %v1266 = vsel %vm1088, %v1264, %v1265
        %v1267 = vrot.slane %v1204, 1
        %v1268 = vsel %vm1088, %v1265, %v1267
        %v1269 = vrot.slane %v1205, 1
        %v1270 = vrot.slane %v1206, 1
        %v1271 = vsel %vm1088, %v1269, %v1270
        %v1272 = vrot.slane %v1207, 1
        %v1273 = vsel %vm1088, %v1270, %v1272
        %v1274 = vrot.slane %v1208, 1
        %v1275 = vrot.slane %v1209, 1
        %v1276 = vsel %vm1088, %v1274, %v1275
        %v1277 = vrot.slane %v1210, 1
        %v1278 = vsel %vm1088, %v1275, %v1277
        %v1279 = vrot.slane %v1211, 1
        %v1280 = vrot.slane %v1212, 1
        %v1281 = vsel %vm1088, %v1279, %v1280
        %v1282 = vrot.slane %v1213, 1
        %v1283 = vsel %vm1088, %v1280, %v1282
        %v1284 = vrot.slane %v1214, 1
        %v1285 = vrot.slane %v1215, 1
        %v1286 = vsel %vm1088, %v1284, %v1285
        %v1287 = vrot.slane %v1216, 1
        %v1288 = vsel %vm1088, %v1285, %v1287
        %v1289 = vrot.slane %v1217, 1
        %v1290 = vrot.slane %v1218, 1
        %v1291 = vsel %vm1088, %v1289, %v1290
        %v1292 = vrot.slane %v1219, 1
        %v1293 = vsel %vm1088, %v1290, %v1292
        %v1294 = vrot.slane %v1220, 1
        %v1295 = vrot.slane %v1221, 1
        %v1296 = vsel %vm1088, %v1294, %v1295
        %v1297 = vrot.slane %v1222, 1
        %v1298 = vsel %vm1088, %v1295, %v1297
        %v1299 = vrot.slane %v1223, 1
        %v1300 = vrot.slane %v1224, 1
        %v1301 = vsel %vm1088, %v1299, %v1300
        %v1302 = vrot.slane %v1225, 1
        %v1303 = vsel %vm1088, %v1300, %v1302
        %v1304 = vrot.slane %v1226, 1
        %v1305 = vrot.slane %v1227, 1
        %v1306 = vsel %vm1088, %v1304, %v1305
        %v1307 = vrot.slane %v1228, 1
        %v1308 = vsel %vm1088, %v1305, %v1307
        %v1339 = vadd.f32 %v1169, %v1261
        %v1340 = vadd.f32 %v1170, %v1263
        %v1341 = vadd.f32 %v1171, %v1262
        %v1342 = vadd.f32 %v1172, %v1266
        %v1343 = vadd.f32 %v1173, %v1268
        %v1344 = vadd.f32 %v1174, %v1267
        %v1345 = vadd.f32 %v1175, %v1271
        %v1346 = vadd.f32 %v1176, %v1273
        %v1347 = vadd.f32 %v1177, %v1272
        %v1348 = vadd.f32 %v1178, %v1276
        %v1349 = vadd.f32 %v1179, %v1278
        %v1350 = vadd.f32 %v1180, %v1277
        %v1351 = vadd.f32 %v1181, %v1281
        %v1352 = vadd.f32 %v1182, %v1283
        %v1353 = vadd.f32 %v1183, %v1282
        %v1354 = vadd.f32 %v1184, %v1286
        %v1355 = vadd.f32 %v1185, %v1288
        %v1356 = vadd.f32 %v1186, %v1287
        %v1357 = vadd.f32 %v1187, %v1291
        %v1358 = vadd.f32 %v1188, %v1293
        %v1359 = vadd.f32 %v1189, %v1292
        %v1360 = vadd.f32 %v1190, %v1296
        %v1361 = vadd.f32 %v1191, %v1298
        %v1362 = vadd.f32 %v1192, %v1297
        %v1363 = vadd.f32 %v1193, %v1301
        %v1364 = vadd.f32 %v1194, %v1303
        %v1365 = vadd.f32 %v1195, %v1302
        %v1366 = vadd.f32 %v1196, %v1306
        %v1367 = vadd.f32 %v1197, %v1308
        %v1368 = vadd.f32 %v1198, %v1307
        %v1369 = vadd.f32 %v1199, %v1091
        %v1370 = vadd.f32 %v1200, %v1093
        %v1371 = vadd.f32 %v1202, %v1096
        %v1372 = vadd.f32 %v1203, %v1098
        %v1373 = vadd.f32 %v1205, %v1101
        %v1374 = vadd.f32 %v1206, %v1103
        %v1375 = vadd.f32 %v1208, %v1106
        %v1376 = vadd.f32 %v1209, %v1108
        %v1377 = vadd.f32 %v1211, %v1111
        %v1378 = vadd.f32 %v1212, %v1113
        %v1379 = vadd.f32 %v1214, %v1116
        %v1380 = vadd.f32 %v1215, %v1118
        %v1381 = vadd.f32 %v1217, %v1121
        %v1382 = vadd.f32 %v1218, %v1123
        %v1383 = vadd.f32 %v1220, %v1126
        %v1384 = vadd.f32 %v1221, %v1128
        %v1385 = vadd.f32 %v1223, %v1131
        %v1386 = vadd.f32 %v1224, %v1133
        %v1387 = vadd.f32 %v1226, %v1136
        %v1388 = vadd.f32 %v1227, %v1138
        %v1419 = vrot.slane %v968, 1
        %v1420 = vrot.slane %v969, 1
        %v1421 = vsel %vm1088, %v1419, %v1420
        %v1422 = vrot.slane %v970, 1
        %v1423 = vsel %vm1088, %v1420, %v1422
        %v1424 = vrot.slane %v971, 1
        %v1425 = vrot.slane %v972, 1
        %v1426 = vsel %vm1088, %v1424, %v1425
        %v1427 = vrot.slane %v973, 1
        %v1428 = vsel %vm1088, %v1425, %v1427
        %v1429 = vrot.slane %v974, 1
        %v1430 = vrot.slane %v975, 1
        %v1431 = vsel %vm1088, %v1429, %v1430
        %v1432 = vrot.slane %v976, 1
        %v1433 = vsel %vm1088, %v1430, %v1432
        %v1434 = vrot.slane %v977, 1
        %v1435 = vrot.slane %v978, 1
        %v1436 = vsel %vm1088, %v1434, %v1435
        %v1437 = vrot.slane %v979, 1
        %v1438 = vsel %vm1088, %v1435, %v1437
        %v1439 = vrot.slane %v980, 1
        %v1440 = vrot.slane %v981, 1
        %v1441 = vsel %vm1088, %v1439, %v1440
        %v1442 = vrot.slane %v982, 1
        %v1443 = vsel %vm1088, %v1440, %v1442
        %v1444 = vrot.slane %v983, 1
        %v1445 = vrot.slane %v984, 1
        %v1446 = vsel %vm1088, %v1444, %v1445
        %v1447 = vrot.slane %v985, 1
        %v1448 = vsel %vm1088, %v1445, %v1447
        %v1449 = vrot.slane %v986, 1
        %v1450 = vrot.slane %v987, 1
        %v1451 = vsel %vm1088, %v1449, %v1450
        %v1452 = vrot.slane %v988, 1
        %v1453 = vsel %vm1088, %v1450, %v1452
        %v1454 = vrot.slane %v989, 1
        %v1455 = vrot.slane %v990, 1
        %v1456 = vsel %vm1088, %v1454, %v1455
        %v1457 = vrot.slane %v991, 1
        %v1458 = vsel %vm1088, %v1455, %v1457
        %v1459 = vrot.slane %v992, 1
        %v1460 = vrot.slane %v993, 1
        %v1461 = vsel %vm1088, %v1459, %v1460
        %v1462 = vrot.slane %v994, 1
        %v1463 = vsel %vm1088, %v1460, %v1462
        %v1464 = vrot.slane %v995, 1
        %v1465 = vrot.slane %v996, 1
        %v1466 = vsel %vm1088, %v1464, %v1465
        %v1467 = vrot.slane %v997, 1
        %v1468 = vsel %vm1088, %v1465, %v1467
        %v1489 = vadd.f32 %v1369, %v1421
        %v1490 = vadd.f32 %v1370, %v1423
        %v1491 = vadd.f32 %v1371, %v1426
        %v1492 = vadd.f32 %v1372, %v1428
        %v1493 = vadd.f32 %v1373, %v1431
        %v1494 = vadd.f32 %v1374, %v1433
        %v1495 = vadd.f32 %v1375, %v1436
        %v1496 = vadd.f32 %v1376, %v1438
        %v1497 = vadd.f32 %v1377, %v1441
        %v1498 = vadd.f32 %v1378, %v1443
        %v1499 = vadd.f32 %v1379, %v1446
        %v1500 = vadd.f32 %v1380, %v1448
        %v1501 = vadd.f32 %v1381, %v1451
        %v1502 = vadd.f32 %v1382, %v1453
        %v1503 = vadd.f32 %v1383, %v1456
        %v1504 = vadd.f32 %v1384, %v1458
        %v1505 = vadd.f32 %v1385, %v1461
        %v1506 = vadd.f32 %v1386, %v1463
        %v1507 = vadd.f32 %v1387, %v1466
        %v1508 = vadd.f32 %v1388, %v1468
        %vm1539 = vcmask 1045504
        %v1540 = vrot.slane %v938, 2
        %v1541 = vrot.slane %v939, 2
        %v1542 = vsel %vm1539, %v1540, %v1541
        %v1543 = vrot.slane %v940, 2
        %v1544 = vsel %vm1539, %v1541, %v1543
        %v1545 = vrot.slane %v941, 2
        %v1546 = vrot.slane %v942, 2
        %v1547 = vsel %vm1539, %v1545, %v1546
        %v1548 = vrot.slane %v943, 2
        %v1549 = vsel %vm1539, %v1546, %v1548
        %v1550 = vrot.slane %v944, 2
        %v1551 = vrot.slane %v945, 2
        %v1552 = vsel %vm1539, %v1550, %v1551
        %v1553 = vrot.slane %v946, 2
        %v1554 = vsel %vm1539, %v1551, %v1553
        %v1555 = vrot.slane %v947, 2
        %v1556 = vrot.slane %v948, 2
        %v1557 = vsel %vm1539, %v1555, %v1556
        %v1558 = vrot.slane %v949, 2
        %v1559 = vsel %vm1539, %v1556, %v1558
        %v1560 = vrot.slane %v950, 2
        %v1561 = vrot.slane %v951, 2
        %v1562 = vsel %vm1539, %v1560, %v1561
        %v1563 = vrot.slane %v952, 2
        %v1564 = vsel %vm1539, %v1561, %v1563
        %v1565 = vrot.slane %v953, 2
        %v1566 = vrot.slane %v954, 2
        %v1567 = vsel %vm1539, %v1565, %v1566
        %v1568 = vrot.slane %v955, 2
        %v1569 = vsel %vm1539, %v1566, %v1568
        %v1570 = vrot.slane %v956, 2
        %v1571 = vrot.slane %v957, 2
        %v1572 = vsel %vm1539, %v1570, %v1571
        %v1573 = vrot.slane %v958, 2
        %v1574 = vsel %vm1539, %v1571, %v1573
        %v1575 = vrot.slane %v959, 2
        %v1576 = vrot.slane %v960, 2
        %v1577 = vsel %vm1539, %v1575, %v1576
        %v1578 = vrot.slane %v961, 2
        %v1579 = vsel %vm1539, %v1576, %v1578
        %v1580 = vrot.slane %v962, 2
        %v1581 = vrot.slane %v963, 2
        %v1582 = vsel %vm1539, %v1580, %v1581
        %v1583 = vrot.slane %v964, 2
        %v1584 = vsel %vm1539, %v1581, %v1583
        %v1585 = vrot.slane %v965, 2
        %v1586 = vrot.slane %v966, 2
        %v1587 = vsel %vm1539, %v1585, %v1586
        %v1588 = vrot.slane %v967, 2
        %v1589 = vsel %vm1539, %v1586, %v1588
        %v1610 = vadd.f32 %v1489, %v1542
        %v1611 = vadd.f32 %v1490, %v1544
        %v1612 = vadd.f32 %v1491, %v1547
        %v1613 = vadd.f32 %v1492, %v1549
        %v1614 = vadd.f32 %v1493, %v1552
        %v1615 = vadd.f32 %v1494, %v1554
        %v1616 = vadd.f32 %v1495, %v1557
        %v1617 = vadd.f32 %v1496, %v1559
        %v1618 = vadd.f32 %v1497, %v1562
        %v1619 = vadd.f32 %v1498, %v1564
        %v1620 = vadd.f32 %v1499, %v1567
        %v1621 = vadd.f32 %v1500, %v1569
        %v1622 = vadd.f32 %v1501, %v1572
        %v1623 = vadd.f32 %v1502, %v1574
        %v1624 = vadd.f32 %v1503, %v1577
        %v1625 = vadd.f32 %v1504, %v1579
        %v1626 = vadd.f32 %v1505, %v1582
        %v1627 = vadd.f32 %v1506, %v1584
        %v1628 = vadd.f32 %v1507, %v1587
        %v1629 = vadd.f32 %v1508, %v1589
        %v1630 = vmul.f32 %v846, 0.125
        %v1631 = vmul.f32 %v847, 0.125
        %v1632 = vmul.f32 %v848, 0.125
        %v1633 = vmul.f32 %v849, 0.125
        %v1634 = vmul.f32 %v850, 0.125
        %v1635 = vmul.f32 %v851, 0.125
        %v1636 = vmul.f32 %v852, 0.125
        %v1637 = vmul.f32 %v853, 0.125
        %v1638 = vmul.f32 %v854, 0.125
        %v1639 = vmul.f32 %v855, 0.125
        %v1640 = vmul.f32 %v856, 0.125
        %v1641 = vmul.f32 %v857, 0.125
        %v1642 = vmul.f32 %v858, 0.125
        %v1643 = vmul.f32 %v859, 0.125
        %v1644 = vmul.f32 %v860, 0.125
        %v1645 = vmul.f32 %v861, 0.125
        %v1646 = vmul.f32 %v862, 0.125
        %v1647 = vmul.f32 %v863, 0.125
        %v1648 = vmul.f32 %v864, 0.125
        %v1649 = vmul.f32 %v865, 0.125
        %v1650 = vmul.f32 %v866, 0.125
        %v1651 = vmul.f32 %v867, 0.125
        %v1652 = vmul.f32 %v868, 0.125
        %v1653 = vmul.f32 %v869, 0.125
        %v1654 = vmul.f32 %v870, 0.125
        %v1655 = vmul.f32 %v871, 0.125
        %v1656 = vmul.f32 %v872, 0.125
        %v1657 = vmul.f32 %v873, 0.125
        %v1658 = vmul.f32 %v874, 0.125
        %v1659 = vmul.f32 %v875, 0.125
        %v1660 = vmul.f32 %v908, 0.375
        %v1661 = vmul.f32 %v909, 0.375
        %v1662 = vmul.f32 %v910, 0.375
        %v1663 = vmul.f32 %v911, 0.375
        %v1664 = vmul.f32 %v912, 0.375
        %v1665 = vmul.f32 %v913, 0.375
        %v1666 = vmul.f32 %v914, 0.375
        %v1667 = vmul.f32 %v915, 0.375
        %v1668 = vmul.f32 %v916, 0.375
        %v1669 = vmul.f32 %v917, 0.375
        %v1670 = vmul.f32 %v918, 0.375
        %v1671 = vmul.f32 %v919, 0.375
        %v1672 = vmul.f32 %v920, 0.375
        %v1673 = vmul.f32 %v921, 0.375
        %v1674 = vmul.f32 %v922, 0.375
        %v1675 = vmul.f32 %v923, 0.375
        %v1676 = vmul.f32 %v924, 0.375
        %v1677 = vmul.f32 %v925, 0.375
        %v1678 = vmul.f32 %v926, 0.375
        %v1679 = vmul.f32 %v927, 0.375
        %v1680 = vmul.f32 %v928, 0.375
        %v1681 = vmul.f32 %v929, 0.375
        %v1682 = vmul.f32 %v930, 0.375
        %v1683 = vmul.f32 %v931, 0.375
        %v1684 = vmul.f32 %v932, 0.375
        %v1685 = vmul.f32 %v933, 0.375
        %v1686 = vmul.f32 %v934, 0.375
        %v1687 = vmul.f32 %v935, 0.375
        %v1688 = vmul.f32 %v936, 0.375
        %v1689 = vmul.f32 %v937, 0.375
        %v1690 = vadd.f32 %v1630, %v1660
        %v1691 = vadd.f32 %v1631, %v1661
        %v1692 = vadd.f32 %v1632, %v1662
        %v1693 = vadd.f32 %v1633, %v1663
        %v1694 = vadd.f32 %v1634, %v1664
        %v1695 = vadd.f32 %v1635, %v1665
        %v1696 = vadd.f32 %v1636, %v1666
        %v1697 = vadd.f32 %v1637, %v1667
        %v1698 = vadd.f32 %v1638, %v1668
        %v1699 = vadd.f32 %v1639, %v1669
        %v1700 = vadd.f32 %v1640, %v1670
        %v1701 = vadd.f32 %v1641, %v1671
        %v1702 = vadd.f32 %v1642, %v1672
        %v1703 = vadd.f32 %v1643, %v1673
        %v1704 = vadd.f32 %v1644, %v1674
        %v1705 = vadd.f32 %v1645, %v1675
        %v1706 = vadd.f32 %v1646, %v1676
        %v1707 = vadd.f32 %v1647, %v1677
        %v1708 = vadd.f32 %v1648, %v1678
        %v1709 = vadd.f32 %v1649, %v1679
        %v1710 = vadd.f32 %v1650, %v1680
        %v1711 = vadd.f32 %v1651, %v1681
        %v1712 = vadd.f32 %v1652, %v1682
        %v1713 = vadd.f32 %v1653, %v1683
        %v1714 = vadd.f32 %v1654, %v1684
        %v1715 = vadd.f32 %v1655, %v1685
        %v1716 = vadd.f32 %v1656, %v1686
        %v1717 = vadd.f32 %v1657, %v1687
        %v1718 = vadd.f32 %v1658, %v1688
        %v1719 = vadd.f32 %v1659, %v1689
        %v1720 = vmul.f32 %v846, 0.375
        %v1721 = vmul.f32 %v847, 0.375
        %v1722 = vmul.f32 %v848, 0.375
        %v1723 = vmul.f32 %v849, 0.375
        %v1724 = vmul.f32 %v850, 0.375
        %v1725 = vmul.f32 %v851, 0.375
        %v1726 = vmul.f32 %v852, 0.375
        %v1727 = vmul.f32 %v853, 0.375
        %v1728 = vmul.f32 %v854, 0.375
        %v1729 = vmul.f32 %v855, 0.375
        %v1730 = vmul.f32 %v856, 0.375
        %v1731 = vmul.f32 %v857, 0.375
        %v1732 = vmul.f32 %v858, 0.375
        %v1733 = vmul.f32 %v859, 0.375
        %v1734 = vmul.f32 %v860, 0.375
        %v1735 = vmul.f32 %v861, 0.375
        %v1736 = vmul.f32 %v862, 0.375
        %v1737 = vmul.f32 %v863, 0.375
        %v1738 = vmul.f32 %v864, 0.375
        %v1739 = vmul.f32 %v865, 0.375
        %v1740 = vmul.f32 %v866, 0.375
        %v1741 = vmul.f32 %v867, 0.375
        %v1742 = vmul.f32 %v868, 0.375
        %v1743 = vmul.f32 %v869, 0.375
        %v1744 = vmul.f32 %v870, 0.375
        %v1745 = vmul.f32 %v871, 0.375
        %v1746 = vmul.f32 %v872, 0.375
        %v1747 = vmul.f32 %v873, 0.375
        %v1748 = vmul.f32 %v874, 0.375
        %v1749 = vmul.f32 %v875, 0.375
        %v1780 = vrot.slane %v1720, 1
        %v1781 = vrot.slane %v1721, 1
        %v1782 = vsel %vm1088, %v1780, %v1781
        %v1783 = vrot.slane %v1722, 1
        %v1784 = vsel %vm1088, %v1781, %v1783
        %v1785 = vrot.slane %v1723, 1
        %v1786 = vrot.slane %v1724, 1
        %v1787 = vsel %vm1088, %v1785, %v1786
        %v1788 = vrot.slane %v1725, 1
        %v1789 = vsel %vm1088, %v1786, %v1788
        %v1790 = vrot.slane %v1726, 1
        %v1791 = vrot.slane %v1727, 1
        %v1792 = vsel %vm1088, %v1790, %v1791
        %v1793 = vrot.slane %v1728, 1
        %v1794 = vsel %vm1088, %v1791, %v1793
        %v1795 = vrot.slane %v1729, 1
        %v1796 = vrot.slane %v1730, 1
        %v1797 = vsel %vm1088, %v1795, %v1796
        %v1798 = vrot.slane %v1731, 1
        %v1799 = vsel %vm1088, %v1796, %v1798
        %v1800 = vrot.slane %v1732, 1
        %v1801 = vrot.slane %v1733, 1
        %v1802 = vsel %vm1088, %v1800, %v1801
        %v1803 = vrot.slane %v1734, 1
        %v1804 = vsel %vm1088, %v1801, %v1803
        %v1805 = vrot.slane %v1735, 1
        %v1806 = vrot.slane %v1736, 1
        %v1807 = vsel %vm1088, %v1805, %v1806
        %v1808 = vrot.slane %v1737, 1
        %v1809 = vsel %vm1088, %v1806, %v1808
        %v1810 = vrot.slane %v1738, 1
        %v1811 = vrot.slane %v1739, 1
        %v1812 = vsel %vm1088, %v1810, %v1811
        %v1813 = vrot.slane %v1740, 1
        %v1814 = vsel %vm1088, %v1811, %v1813
        %v1815 = vrot.slane %v1741, 1
        %v1816 = vrot.slane %v1742, 1
        %v1817 = vsel %vm1088, %v1815, %v1816
        %v1818 = vrot.slane %v1743, 1
        %v1819 = vsel %vm1088, %v1816, %v1818
        %v1820 = vrot.slane %v1744, 1
        %v1821 = vrot.slane %v1745, 1
        %v1822 = vsel %vm1088, %v1820, %v1821
        %v1823 = vrot.slane %v1746, 1
        %v1824 = vsel %vm1088, %v1821, %v1823
        %v1825 = vrot.slane %v1747, 1
        %v1826 = vrot.slane %v1748, 1
        %v1827 = vsel %vm1088, %v1825, %v1826
        %v1828 = vrot.slane %v1749, 1
        %v1829 = vsel %vm1088, %v1826, %v1828
        %v1860 = vadd.f32 %v1690, %v1782
        %v1861 = vadd.f32 %v1691, %v1784
        %v1862 = vadd.f32 %v1692, %v1783
        %v1863 = vadd.f32 %v1693, %v1787
        %v1864 = vadd.f32 %v1694, %v1789
        %v1865 = vadd.f32 %v1695, %v1788
        %v1866 = vadd.f32 %v1696, %v1792
        %v1867 = vadd.f32 %v1697, %v1794
        %v1868 = vadd.f32 %v1698, %v1793
        %v1869 = vadd.f32 %v1699, %v1797
        %v1870 = vadd.f32 %v1700, %v1799
        %v1871 = vadd.f32 %v1701, %v1798
        %v1872 = vadd.f32 %v1702, %v1802
        %v1873 = vadd.f32 %v1703, %v1804
        %v1874 = vadd.f32 %v1704, %v1803
        %v1875 = vadd.f32 %v1705, %v1807
        %v1876 = vadd.f32 %v1706, %v1809
        %v1877 = vadd.f32 %v1707, %v1808
        %v1878 = vadd.f32 %v1708, %v1812
        %v1879 = vadd.f32 %v1709, %v1814
        %v1880 = vadd.f32 %v1710, %v1813
        %v1881 = vadd.f32 %v1711, %v1817
        %v1882 = vadd.f32 %v1712, %v1819
        %v1883 = vadd.f32 %v1713, %v1818
        %v1884 = vadd.f32 %v1714, %v1822
        %v1885 = vadd.f32 %v1715, %v1824
        %v1886 = vadd.f32 %v1716, %v1823
        %v1887 = vadd.f32 %v1717, %v1827
        %v1888 = vadd.f32 %v1718, %v1829
        %v1889 = vadd.f32 %v1719, %v1828
        %v1890 = vmul.f32 %v908, 0.125
        %v1891 = vmul.f32 %v909, 0.125
        %v1892 = vmul.f32 %v910, 0.125
        %v1893 = vmul.f32 %v911, 0.125
        %v1894 = vmul.f32 %v912, 0.125
        %v1895 = vmul.f32 %v913, 0.125
        %v1896 = vmul.f32 %v914, 0.125
        %v1897 = vmul.f32 %v915, 0.125
        %v1898 = vmul.f32 %v916, 0.125
        %v1899 = vmul.f32 %v917, 0.125
        %v1900 = vmul.f32 %v918, 0.125
        %v1901 = vmul.f32 %v919, 0.125
        %v1902 = vmul.f32 %v920, 0.125
        %v1903 = vmul.f32 %v921, 0.125
        %v1904 = vmul.f32 %v922, 0.125
        %v1905 = vmul.f32 %v923, 0.125
        %v1906 = vmul.f32 %v924, 0.125
        %v1907 = vmul.f32 %v925, 0.125
        %v1908 = vmul.f32 %v926, 0.125
        %v1909 = vmul.f32 %v927, 0.125
        %v1910 = vmul.f32 %v928, 0.125
        %v1911 = vmul.f32 %v929, 0.125
        %v1912 = vmul.f32 %v930, 0.125
        %v1913 = vmul.f32 %v931, 0.125
        %v1914 = vmul.f32 %v932, 0.125
        %v1915 = vmul.f32 %v933, 0.125
        %v1916 = vmul.f32 %v934, 0.125
        %v1917 = vmul.f32 %v935, 0.125
        %v1918 = vmul.f32 %v936, 0.125
        %v1919 = vmul.f32 %v937, 0.125
        %v1950 = vrot.slane %v1890, 1
        %v1951 = vrot.slane %v1891, 1
        %v1952 = vsel %vm1088, %v1950, %v1951
        %v1953 = vrot.slane %v1892, 1
        %v1954 = vsel %vm1088, %v1951, %v1953
        %v1955 = vrot.slane %v1893, 1
        %v1956 = vrot.slane %v1894, 1
        %v1957 = vsel %vm1088, %v1955, %v1956
        %v1958 = vrot.slane %v1895, 1
        %v1959 = vsel %vm1088, %v1956, %v1958
        %v1960 = vrot.slane %v1896, 1
        %v1961 = vrot.slane %v1897, 1
        %v1962 = vsel %vm1088, %v1960, %v1961
        %v1963 = vrot.slane %v1898, 1
        %v1964 = vsel %vm1088, %v1961, %v1963
        %v1965 = vrot.slane %v1899, 1
        %v1966 = vrot.slane %v1900, 1
        %v1967 = vsel %vm1088, %v1965, %v1966
        %v1968 = vrot.slane %v1901, 1
        %v1969 = vsel %vm1088, %v1966, %v1968
        %v1970 = vrot.slane %v1902, 1
        %v1971 = vrot.slane %v1903, 1
        %v1972 = vsel %vm1088, %v1970, %v1971
        %v1973 = vrot.slane %v1904, 1
        %v1974 = vsel %vm1088, %v1971, %v1973
        %v1975 = vrot.slane %v1905, 1
        %v1976 = vrot.slane %v1906, 1
        %v1977 = vsel %vm1088, %v1975, %v1976
        %v1978 = vrot.slane %v1907, 1
        %v1979 = vsel %vm1088, %v1976, %v1978
        %v1980 = vrot.slane %v1908, 1
        %v1981 = vrot.slane %v1909, 1
        %v1982 = vsel %vm1088, %v1980, %v1981
        %v1983 = vrot.slane %v1910, 1
        %v1984 = vsel %vm1088, %v1981, %v1983
        %v1985 = vrot.slane %v1911, 1
        %v1986 = vrot.slane %v1912, 1
        %v1987 = vsel %vm1088, %v1985, %v1986
        %v1988 = vrot.slane %v1913, 1
        %v1989 = vsel %vm1088, %v1986, %v1988
        %v1990 = vrot.slane %v1914, 1
        %v1991 = vrot.slane %v1915, 1
        %v1992 = vsel %vm1088, %v1990, %v1991
        %v1993 = vrot.slane %v1916, 1
        %v1994 = vsel %vm1088, %v1991, %v1993
        %v1995 = vrot.slane %v1917, 1
        %v1996 = vrot.slane %v1918, 1
        %v1997 = vsel %vm1088, %v1995, %v1996
        %v1998 = vrot.slane %v1919, 1
        %v1999 = vsel %vm1088, %v1996, %v1998
        %v2030 = vadd.f32 %v1860, %v1952
        %v2031 = vadd.f32 %v1861, %v1954
        %v2032 = vadd.f32 %v1862, %v1953
        %v2033 = vadd.f32 %v1863, %v1957
        %v2034 = vadd.f32 %v1864, %v1959
        %v2035 = vadd.f32 %v1865, %v1958
        %v2036 = vadd.f32 %v1866, %v1962
        %v2037 = vadd.f32 %v1867, %v1964
        %v2038 = vadd.f32 %v1868, %v1963
        %v2039 = vadd.f32 %v1869, %v1967
        %v2040 = vadd.f32 %v1870, %v1969
        %v2041 = vadd.f32 %v1871, %v1968
        %v2042 = vadd.f32 %v1872, %v1972
        %v2043 = vadd.f32 %v1873, %v1974
        %v2044 = vadd.f32 %v1874, %v1973
        %v2045 = vadd.f32 %v1875, %v1977
        %v2046 = vadd.f32 %v1876, %v1979
        %v2047 = vadd.f32 %v1877, %v1978
        %v2048 = vadd.f32 %v1878, %v1982
        %v2049 = vadd.f32 %v1879, %v1984
        %v2050 = vadd.f32 %v1880, %v1983
        %v2051 = vadd.f32 %v1881, %v1987
        %v2052 = vadd.f32 %v1882, %v1989
        %v2053 = vadd.f32 %v1883, %v1988
        %v2054 = vadd.f32 %v1884, %v1992
        %v2055 = vadd.f32 %v1885, %v1994
        %v2056 = vadd.f32 %v1886, %v1993
        %v2057 = vadd.f32 %v1887, %v1997
        %v2058 = vadd.f32 %v1888, %v1999
        %v2059 = vadd.f32 %v1889, %v1998
        %v2060 = vadd.f32 %v1890, %v1782
        %v2061 = vadd.f32 %v1891, %v1784
        %v2062 = vadd.f32 %v1893, %v1787
        %v2063 = vadd.f32 %v1894, %v1789
        %v2064 = vadd.f32 %v1896, %v1792
        %v2065 = vadd.f32 %v1897, %v1794
        %v2066 = vadd.f32 %v1899, %v1797
        %v2067 = vadd.f32 %v1900, %v1799
        %v2068 = vadd.f32 %v1902, %v1802
        %v2069 = vadd.f32 %v1903, %v1804
        %v2070 = vadd.f32 %v1905, %v1807
        %v2071 = vadd.f32 %v1906, %v1809
        %v2072 = vadd.f32 %v1908, %v1812
        %v2073 = vadd.f32 %v1909, %v1814
        %v2074 = vadd.f32 %v1911, %v1817
        %v2075 = vadd.f32 %v1912, %v1819
        %v2076 = vadd.f32 %v1914, %v1822
        %v2077 = vadd.f32 %v1915, %v1824
        %v2078 = vadd.f32 %v1917, %v1827
        %v2079 = vadd.f32 %v1918, %v1829
        %v2110 = vrot.slane %v1660, 1
        %v2111 = vrot.slane %v1661, 1
        %v2112 = vsel %vm1088, %v2110, %v2111
        %v2113 = vrot.slane %v1662, 1
        %v2114 = vsel %vm1088, %v2111, %v2113
        %v2115 = vrot.slane %v1663, 1
        %v2116 = vrot.slane %v1664, 1
        %v2117 = vsel %vm1088, %v2115, %v2116
        %v2118 = vrot.slane %v1665, 1
        %v2119 = vsel %vm1088, %v2116, %v2118
        %v2120 = vrot.slane %v1666, 1
        %v2121 = vrot.slane %v1667, 1
        %v2122 = vsel %vm1088, %v2120, %v2121
        %v2123 = vrot.slane %v1668, 1
        %v2124 = vsel %vm1088, %v2121, %v2123
        %v2125 = vrot.slane %v1669, 1
        %v2126 = vrot.slane %v1670, 1
        %v2127 = vsel %vm1088, %v2125, %v2126
        %v2128 = vrot.slane %v1671, 1
        %v2129 = vsel %vm1088, %v2126, %v2128
        %v2130 = vrot.slane %v1672, 1
        %v2131 = vrot.slane %v1673, 1
        %v2132 = vsel %vm1088, %v2130, %v2131
        %v2133 = vrot.slane %v1674, 1
        %v2134 = vsel %vm1088, %v2131, %v2133
        %v2135 = vrot.slane %v1675, 1
        %v2136 = vrot.slane %v1676, 1
        %v2137 = vsel %vm1088, %v2135, %v2136
        %v2138 = vrot.slane %v1677, 1
        %v2139 = vsel %vm1088, %v2136, %v2138
        %v2140 = vrot.slane %v1678, 1
        %v2141 = vrot.slane %v1679, 1
        %v2142 = vsel %vm1088, %v2140, %v2141
        %v2143 = vrot.slane %v1680, 1
        %v2144 = vsel %vm1088, %v2141, %v2143
        %v2145 = vrot.slane %v1681, 1
        %v2146 = vrot.slane %v1682, 1
        %v2147 = vsel %vm1088, %v2145, %v2146
        %v2148 = vrot.slane %v1683, 1
        %v2149 = vsel %vm1088, %v2146, %v2148
        %v2150 = vrot.slane %v1684, 1
        %v2151 = vrot.slane %v1685, 1
        %v2152 = vsel %vm1088, %v2150, %v2151
        %v2153 = vrot.slane %v1686, 1
        %v2154 = vsel %vm1088, %v2151, %v2153
        %v2155 = vrot.slane %v1687, 1
        %v2156 = vrot.slane %v1688, 1
        %v2157 = vsel %vm1088, %v2155, %v2156
        %v2158 = vrot.slane %v1689, 1
        %v2159 = vsel %vm1088, %v2156, %v2158
        %v2180 = vadd.f32 %v2060, %v2112
        %v2181 = vadd.f32 %v2061, %v2114
        %v2182 = vadd.f32 %v2062, %v2117
        %v2183 = vadd.f32 %v2063, %v2119
        %v2184 = vadd.f32 %v2064, %v2122
        %v2185 = vadd.f32 %v2065, %v2124
        %v2186 = vadd.f32 %v2066, %v2127
        %v2187 = vadd.f32 %v2067, %v2129
        %v2188 = vadd.f32 %v2068, %v2132
        %v2189 = vadd.f32 %v2069, %v2134
        %v2190 = vadd.f32 %v2070, %v2137
        %v2191 = vadd.f32 %v2071, %v2139
        %v2192 = vadd.f32 %v2072, %v2142
        %v2193 = vadd.f32 %v2073, %v2144
        %v2194 = vadd.f32 %v2074, %v2147
        %v2195 = vadd.f32 %v2075, %v2149
        %v2196 = vadd.f32 %v2076, %v2152
        %v2197 = vadd.f32 %v2077, %v2154
        %v2198 = vadd.f32 %v2078, %v2157
        %v2199 = vadd.f32 %v2079, %v2159
        %v2230 = vrot.slane %v1630, 2
        %v2231 = vrot.slane %v1631, 2
        %v2232 = vsel %vm1539, %v2230, %v2231
        %v2233 = vrot.slane %v1632, 2
        %v2234 = vsel %vm1539, %v2231, %v2233
        %v2235 = vrot.slane %v1633, 2
        %v2236 = vrot.slane %v1634, 2
        %v2237 = vsel %vm1539, %v2235, %v2236
        %v2238 = vrot.slane %v1635, 2
        %v2239 = vsel %vm1539, %v2236, %v2238
        %v2240 = vrot.slane %v1636, 2
        %v2241 = vrot.slane %v1637, 2
        %v2242 = vsel %vm1539, %v2240, %v2241
        %v2243 = vrot.slane %v1638, 2
        %v2244 = vsel %vm1539, %v2241, %v2243
        %v2245 = vrot.slane %v1639, 2
        %v2246 = vrot.slane %v1640, 2
        %v2247 = vsel %vm1539, %v2245, %v2246
        %v2248 = vrot.slane %v1641, 2
        %v2249 = vsel %vm1539, %v2246, %v2248
        %v2250 = vrot.slane %v1642, 2
        %v2251 = vrot.slane %v1643, 2
        %v2252 = vsel %vm1539, %v2250, %v2251
        %v2253 = vrot.slane %v1644, 2
        %v2254 = vsel %vm1539, %v2251, %v2253
        %v2255 = vrot.slane %v1645, 2
        %v2256 = vrot.slane %v1646, 2
        %v2257 = vsel %vm1539, %v2255, %v2256
        %v2258 = vrot.slane %v1647, 2
        %v2259 = vsel %vm1539, %v2256, %v2258
        %v2260 = vrot.slane %v1648, 2
        %v2261 = vrot.slane %v1649, 2
        %v2262 = vsel %vm1539, %v2260, %v2261
        %v2263 = vrot.slane %v1650, 2
        %v2264 = vsel %vm1539, %v2261, %v2263
        %v2265 = vrot.slane %v1651, 2
        %v2266 = vrot.slane %v1652, 2
        %v2267 = vsel %vm1539, %v2265, %v2266
        %v2268 = vrot.slane %v1653, 2
        %v2269 = vsel %vm1539, %v2266, %v2268
        %v2270 = vrot.slane %v1654, 2
        %v2271 = vrot.slane %v1655, 2
        %v2272 = vsel %vm1539, %v2270, %v2271
        %v2273 = vrot.slane %v1656, 2
        %v2274 = vsel %vm1539, %v2271, %v2273
        %v2275 = vrot.slane %v1657, 2
        %v2276 = vrot.slane %v1658, 2
        %v2277 = vsel %vm1539, %v2275, %v2276
        %v2278 = vrot.slane %v1659, 2
        %v2279 = vsel %vm1539, %v2276, %v2278
        %v2300 = vadd.f32 %v2180, %v2232
        %v2301 = vadd.f32 %v2181, %v2234
        %v2302 = vadd.f32 %v2182, %v2237
        %v2303 = vadd.f32 %v2183, %v2239
        %v2304 = vadd.f32 %v2184, %v2242
        %v2305 = vadd.f32 %v2185, %v2244
        %v2306 = vadd.f32 %v2186, %v2247
        %v2307 = vadd.f32 %v2187, %v2249
        %v2308 = vadd.f32 %v2188, %v2252
        %v2309 = vadd.f32 %v2189, %v2254
        %v2310 = vadd.f32 %v2190, %v2257
        %v2311 = vadd.f32 %v2191, %v2259
        %v2312 = vadd.f32 %v2192, %v2262
        %v2313 = vadd.f32 %v2193, %v2264
        %v2314 = vadd.f32 %v2194, %v2267
        %v2315 = vadd.f32 %v2195, %v2269
        %v2316 = vadd.f32 %v2196, %v2272
        %v2317 = vadd.f32 %v2197, %v2274
        %v2318 = vadd.f32 %v2198, %v2277
        %v2319 = vadd.f32 %v2199, %v2279
        %v2320 = vmul.f32 %v1339, 0.125
        %v2321 = vmul.f32 %v1340, 0.125
        %v2322 = vmul.f32 %v1341, 0.125
        %v2323 = vmul.f32 %v1342, 0.125
        %v2324 = vmul.f32 %v1343, 0.125
        %v2325 = vmul.f32 %v1344, 0.125
        %v2326 = vmul.f32 %v1345, 0.125
        %v2327 = vmul.f32 %v1346, 0.125
        %v2328 = vmul.f32 %v1347, 0.125
        %v2329 = vmul.f32 %v1348, 0.125
        %v2330 = vmul.f32 %v1349, 0.125
        %v2331 = vmul.f32 %v1350, 0.125
        %v2332 = vmul.f32 %v1351, 0.125
        %v2333 = vmul.f32 %v1352, 0.125
        %v2334 = vmul.f32 %v1353, 0.125
        %v2335 = vmul.f32 %v1354, 0.125
        %v2336 = vmul.f32 %v1355, 0.125
        %v2337 = vmul.f32 %v1356, 0.125
        %v2338 = vmul.f32 %v1357, 0.125
        %v2339 = vmul.f32 %v1358, 0.125
        %v2340 = vmul.f32 %v1359, 0.125
        %v2341 = vmul.f32 %v1360, 0.125
        %v2342 = vmul.f32 %v1361, 0.125
        %v2343 = vmul.f32 %v1362, 0.125
        %v2344 = vmul.f32 %v1363, 0.125
        %v2345 = vmul.f32 %v1364, 0.125
        %v2346 = vmul.f32 %v1365, 0.125
        %v2347 = vmul.f32 %v2030, 0.375
        %v2348 = vmul.f32 %v2031, 0.375
        %v2349 = vmul.f32 %v2032, 0.375
        %v2350 = vmul.f32 %v2033, 0.375
        %v2351 = vmul.f32 %v2034, 0.375
        %v2352 = vmul.f32 %v2035, 0.375
        %v2353 = vmul.f32 %v2036, 0.375
        %v2354 = vmul.f32 %v2037, 0.375
        %v2355 = vmul.f32 %v2038, 0.375
        %v2356 = vmul.f32 %v2039, 0.375
        %v2357 = vmul.f32 %v2040, 0.375
        %v2358 = vmul.f32 %v2041, 0.375
        %v2359 = vmul.f32 %v2042, 0.375
        %v2360 = vmul.f32 %v2043, 0.375
        %v2361 = vmul.f32 %v2044, 0.375
        %v2362 = vmul.f32 %v2045, 0.375
        %v2363 = vmul.f32 %v2046, 0.375
        %v2364 = vmul.f32 %v2047, 0.375
        %v2365 = vmul.f32 %v2048, 0.375
        %v2366 = vmul.f32 %v2049, 0.375
        %v2367 = vmul.f32 %v2050, 0.375
        %v2368 = vmul.f32 %v2051, 0.375
        %v2369 = vmul.f32 %v2052, 0.375
        %v2370 = vmul.f32 %v2053, 0.375
        %v2371 = vmul.f32 %v2054, 0.375
        %v2372 = vmul.f32 %v2055, 0.375
        %v2373 = vmul.f32 %v2056, 0.375
        %v2374 = vadd.f32 %v2320, %v2347
        %v2375 = vadd.f32 %v2321, %v2348
        %v2376 = vadd.f32 %v2322, %v2349
        %v2377 = vadd.f32 %v2323, %v2350
        %v2378 = vadd.f32 %v2324, %v2351
        %v2379 = vadd.f32 %v2325, %v2352
        %v2380 = vadd.f32 %v2326, %v2353
        %v2381 = vadd.f32 %v2327, %v2354
        %v2382 = vadd.f32 %v2328, %v2355
        %v2383 = vadd.f32 %v2329, %v2356
        %v2384 = vadd.f32 %v2330, %v2357
        %v2385 = vadd.f32 %v2331, %v2358
        %v2386 = vadd.f32 %v2332, %v2359
        %v2387 = vadd.f32 %v2333, %v2360
        %v2388 = vadd.f32 %v2334, %v2361
        %v2389 = vadd.f32 %v2335, %v2362
        %v2390 = vadd.f32 %v2336, %v2363
        %v2391 = vadd.f32 %v2337, %v2364
        %v2392 = vadd.f32 %v2338, %v2365
        %v2393 = vadd.f32 %v2339, %v2366
        %v2394 = vadd.f32 %v2340, %v2367
        %v2395 = vadd.f32 %v2341, %v2368
        %v2396 = vadd.f32 %v2342, %v2369
        %v2397 = vadd.f32 %v2343, %v2370
        %v2398 = vadd.f32 %v2344, %v2371
        %v2399 = vadd.f32 %v2345, %v2372
        %v2400 = vadd.f32 %v2346, %v2373
        %v2401 = vmul.f32 %v1342, 0.375
        %v2402 = vmul.f32 %v1343, 0.375
        %v2403 = vmul.f32 %v1344, 0.375
        %v2404 = vmul.f32 %v1345, 0.375
        %v2405 = vmul.f32 %v1346, 0.375
        %v2406 = vmul.f32 %v1347, 0.375
        %v2407 = vmul.f32 %v1348, 0.375
        %v2408 = vmul.f32 %v1349, 0.375
        %v2409 = vmul.f32 %v1350, 0.375
        %v2410 = vmul.f32 %v1351, 0.375
        %v2411 = vmul.f32 %v1352, 0.375
        %v2412 = vmul.f32 %v1353, 0.375
        %v2413 = vmul.f32 %v1354, 0.375
        %v2414 = vmul.f32 %v1355, 0.375
        %v2415 = vmul.f32 %v1356, 0.375
        %v2416 = vmul.f32 %v1357, 0.375
        %v2417 = vmul.f32 %v1358, 0.375
        %v2418 = vmul.f32 %v1359, 0.375
        %v2419 = vmul.f32 %v1360, 0.375
        %v2420 = vmul.f32 %v1361, 0.375
        %v2421 = vmul.f32 %v1362, 0.375
        %v2422 = vmul.f32 %v1363, 0.375
        %v2423 = vmul.f32 %v1364, 0.375
        %v2424 = vmul.f32 %v1365, 0.375
        %v2425 = vmul.f32 %v1366, 0.375
        %v2426 = vmul.f32 %v1367, 0.375
        %v2427 = vmul.f32 %v1368, 0.375
        %v2428 = vadd.f32 %v2374, %v2401
        %v2429 = vadd.f32 %v2375, %v2402
        %v2430 = vadd.f32 %v2376, %v2403
        %v2431 = vadd.f32 %v2377, %v2404
        %v2432 = vadd.f32 %v2378, %v2405
        %v2433 = vadd.f32 %v2379, %v2406
        %v2434 = vadd.f32 %v2380, %v2407
        %v2435 = vadd.f32 %v2381, %v2408
        %v2436 = vadd.f32 %v2382, %v2409
        %v2437 = vadd.f32 %v2383, %v2410
        %v2438 = vadd.f32 %v2384, %v2411
        %v2439 = vadd.f32 %v2385, %v2412
        %v2440 = vadd.f32 %v2386, %v2413
        %v2441 = vadd.f32 %v2387, %v2414
        %v2442 = vadd.f32 %v2388, %v2415
        %v2443 = vadd.f32 %v2389, %v2416
        %v2444 = vadd.f32 %v2390, %v2417
        %v2445 = vadd.f32 %v2391, %v2418
        %v2446 = vadd.f32 %v2392, %v2419
        %v2447 = vadd.f32 %v2393, %v2420
        %v2448 = vadd.f32 %v2394, %v2421
        %v2449 = vadd.f32 %v2395, %v2422
        %v2450 = vadd.f32 %v2396, %v2423
        %v2451 = vadd.f32 %v2397, %v2424
        %v2452 = vadd.f32 %v2398, %v2425
        %v2453 = vadd.f32 %v2399, %v2426
        %v2454 = vadd.f32 %v2400, %v2427
        %v2455 = vmul.f32 %v2033, 0.125
        %v2456 = vmul.f32 %v2034, 0.125
        %v2457 = vmul.f32 %v2035, 0.125
        %v2458 = vmul.f32 %v2036, 0.125
        %v2459 = vmul.f32 %v2037, 0.125
        %v2460 = vmul.f32 %v2038, 0.125
        %v2461 = vmul.f32 %v2039, 0.125
        %v2462 = vmul.f32 %v2040, 0.125
        %v2463 = vmul.f32 %v2041, 0.125
        %v2464 = vmul.f32 %v2042, 0.125
        %v2465 = vmul.f32 %v2043, 0.125
        %v2466 = vmul.f32 %v2044, 0.125
        %v2467 = vmul.f32 %v2045, 0.125
        %v2468 = vmul.f32 %v2046, 0.125
        %v2469 = vmul.f32 %v2047, 0.125
        %v2470 = vmul.f32 %v2048, 0.125
        %v2471 = vmul.f32 %v2049, 0.125
        %v2472 = vmul.f32 %v2050, 0.125
        %v2473 = vmul.f32 %v2051, 0.125
        %v2474 = vmul.f32 %v2052, 0.125
        %v2475 = vmul.f32 %v2053, 0.125
        %v2476 = vmul.f32 %v2054, 0.125
        %v2477 = vmul.f32 %v2055, 0.125
        %v2478 = vmul.f32 %v2056, 0.125
        %v2479 = vmul.f32 %v2057, 0.125
        %v2480 = vmul.f32 %v2058, 0.125
        %v2481 = vmul.f32 %v2059, 0.125
        %v2482 = vadd.f32 %v2428, %v2455
        %v2483 = vadd.f32 %v2429, %v2456
        %v2484 = vadd.f32 %v2430, %v2457
        %v2485 = vadd.f32 %v2431, %v2458
        %v2486 = vadd.f32 %v2432, %v2459
        %v2487 = vadd.f32 %v2433, %v2460
        %v2488 = vadd.f32 %v2434, %v2461
        %v2489 = vadd.f32 %v2435, %v2462
        %v2490 = vadd.f32 %v2436, %v2463
        %v2491 = vadd.f32 %v2437, %v2464
        %v2492 = vadd.f32 %v2438, %v2465
        %v2493 = vadd.f32 %v2439, %v2466
        %v2494 = vadd.f32 %v2440, %v2467
        %v2495 = vadd.f32 %v2441, %v2468
        %v2496 = vadd.f32 %v2442, %v2469
        %v2497 = vadd.f32 %v2443, %v2470
        %v2498 = vadd.f32 %v2444, %v2471
        %v2499 = vadd.f32 %v2445, %v2472
        %v2500 = vadd.f32 %v2446, %v2473
        %v2501 = vadd.f32 %v2447, %v2474
        %v2502 = vadd.f32 %v2448, %v2475
        %v2503 = vadd.f32 %v2449, %v2476
        %v2504 = vadd.f32 %v2450, %v2477
        %v2505 = vadd.f32 %v2451, %v2478
        %v2506 = vadd.f32 %v2452, %v2479
        %v2507 = vadd.f32 %v2453, %v2480
        %v2508 = vadd.f32 %v2454, %v2481
        %v2509 = vmul.f32 %v1610, 0.125
        %v2510 = vmul.f32 %v1611, 0.125
        %v2511 = vmul.f32 %v1612, 0.125
        %v2512 = vmul.f32 %v1613, 0.125
        %v2513 = vmul.f32 %v1614, 0.125
        %v2514 = vmul.f32 %v1615, 0.125
        %v2515 = vmul.f32 %v1616, 0.125
        %v2516 = vmul.f32 %v1617, 0.125
        %v2517 = vmul.f32 %v1618, 0.125
        %v2518 = vmul.f32 %v1619, 0.125
        %v2519 = vmul.f32 %v1620, 0.125
        %v2520 = vmul.f32 %v1621, 0.125
        %v2521 = vmul.f32 %v1622, 0.125
        %v2522 = vmul.f32 %v1623, 0.125
        %v2523 = vmul.f32 %v1624, 0.125
        %v2524 = vmul.f32 %v1625, 0.125
        %v2525 = vmul.f32 %v1626, 0.125
        %v2526 = vmul.f32 %v1627, 0.125
        %v2527 = vmul.f32 %v2300, 0.375
        %v2528 = vmul.f32 %v2301, 0.375
        %v2529 = vmul.f32 %v2302, 0.375
        %v2530 = vmul.f32 %v2303, 0.375
        %v2531 = vmul.f32 %v2304, 0.375
        %v2532 = vmul.f32 %v2305, 0.375
        %v2533 = vmul.f32 %v2306, 0.375
        %v2534 = vmul.f32 %v2307, 0.375
        %v2535 = vmul.f32 %v2308, 0.375
        %v2536 = vmul.f32 %v2309, 0.375
        %v2537 = vmul.f32 %v2310, 0.375
        %v2538 = vmul.f32 %v2311, 0.375
        %v2539 = vmul.f32 %v2312, 0.375
        %v2540 = vmul.f32 %v2313, 0.375
        %v2541 = vmul.f32 %v2314, 0.375
        %v2542 = vmul.f32 %v2315, 0.375
        %v2543 = vmul.f32 %v2316, 0.375
        %v2544 = vmul.f32 %v2317, 0.375
        %v2545 = vadd.f32 %v2509, %v2527
        %v2546 = vadd.f32 %v2510, %v2528
        %v2547 = vadd.f32 %v2511, %v2529
        %v2548 = vadd.f32 %v2512, %v2530
        %v2549 = vadd.f32 %v2513, %v2531
        %v2550 = vadd.f32 %v2514, %v2532
        %v2551 = vadd.f32 %v2515, %v2533
        %v2552 = vadd.f32 %v2516, %v2534
        %v2553 = vadd.f32 %v2517, %v2535
        %v2554 = vadd.f32 %v2518, %v2536
        %v2555 = vadd.f32 %v2519, %v2537
        %v2556 = vadd.f32 %v2520, %v2538
        %v2557 = vadd.f32 %v2521, %v2539
        %v2558 = vadd.f32 %v2522, %v2540
        %v2559 = vadd.f32 %v2523, %v2541
        %v2560 = vadd.f32 %v2524, %v2542
        %v2561 = vadd.f32 %v2525, %v2543
        %v2562 = vadd.f32 %v2526, %v2544
        %v2563 = vmul.f32 %v1612, 0.375
        %v2564 = vmul.f32 %v1613, 0.375
        %v2565 = vmul.f32 %v1614, 0.375
        %v2566 = vmul.f32 %v1615, 0.375
        %v2567 = vmul.f32 %v1616, 0.375
        %v2568 = vmul.f32 %v1617, 0.375
        %v2569 = vmul.f32 %v1618, 0.375
        %v2570 = vmul.f32 %v1619, 0.375
        %v2571 = vmul.f32 %v1620, 0.375
        %v2572 = vmul.f32 %v1621, 0.375
        %v2573 = vmul.f32 %v1622, 0.375
        %v2574 = vmul.f32 %v1623, 0.375
        %v2575 = vmul.f32 %v1624, 0.375
        %v2576 = vmul.f32 %v1625, 0.375
        %v2577 = vmul.f32 %v1626, 0.375
        %v2578 = vmul.f32 %v1627, 0.375
        %v2579 = vmul.f32 %v1628, 0.375
        %v2580 = vmul.f32 %v1629, 0.375
        %v2581 = vadd.f32 %v2545, %v2563
        %v2582 = vadd.f32 %v2546, %v2564
        %v2583 = vadd.f32 %v2547, %v2565
        %v2584 = vadd.f32 %v2548, %v2566
        %v2585 = vadd.f32 %v2549, %v2567
        %v2586 = vadd.f32 %v2550, %v2568
        %v2587 = vadd.f32 %v2551, %v2569
        %v2588 = vadd.f32 %v2552, %v2570
        %v2589 = vadd.f32 %v2553, %v2571
        %v2590 = vadd.f32 %v2554, %v2572
        %v2591 = vadd.f32 %v2555, %v2573
        %v2592 = vadd.f32 %v2556, %v2574
        %v2593 = vadd.f32 %v2557, %v2575
        %v2594 = vadd.f32 %v2558, %v2576
        %v2595 = vadd.f32 %v2559, %v2577
        %v2596 = vadd.f32 %v2560, %v2578
        %v2597 = vadd.f32 %v2561, %v2579
        %v2598 = vadd.f32 %v2562, %v2580
        %v2599 = vmul.f32 %v2302, 0.125
        %v2600 = vmul.f32 %v2303, 0.125
        %v2601 = vmul.f32 %v2304, 0.125
        %v2602 = vmul.f32 %v2305, 0.125
        %v2603 = vmul.f32 %v2306, 0.125
        %v2604 = vmul.f32 %v2307, 0.125
        %v2605 = vmul.f32 %v2308, 0.125
        %v2606 = vmul.f32 %v2309, 0.125
        %v2607 = vmul.f32 %v2310, 0.125
        %v2608 = vmul.f32 %v2311, 0.125
        %v2609 = vmul.f32 %v2312, 0.125
        %v2610 = vmul.f32 %v2313, 0.125
        %v2611 = vmul.f32 %v2314, 0.125
        %v2612 = vmul.f32 %v2315, 0.125
        %v2613 = vmul.f32 %v2316, 0.125
        %v2614 = vmul.f32 %v2317, 0.125
        %v2615 = vmul.f32 %v2318, 0.125
        %v2616 = vmul.f32 %v2319, 0.125
        %v2617 = vadd.f32 %v2581, %v2599
        %v2618 = vadd.f32 %v2582, %v2600
        %v2619 = vadd.f32 %v2583, %v2601
        %v2620 = vadd.f32 %v2584, %v2602
        %v2621 = vadd.f32 %v2585, %v2603
        %v2622 = vadd.f32 %v2586, %v2604
        %v2623 = vadd.f32 %v2587, %v2605
        %v2624 = vadd.f32 %v2588, %v2606
        %v2625 = vadd.f32 %v2589, %v2607
        %v2626 = vadd.f32 %v2590, %v2608
        %v2627 = vadd.f32 %v2591, %v2609
        %v2628 = vadd.f32 %v2592, %v2610
        %v2629 = vadd.f32 %v2593, %v2611
        %v2630 = vadd.f32 %v2594, %v2612
        %v2631 = vadd.f32 %v2595, %v2613
        %v2632 = vadd.f32 %v2596, %v2614
        %v2633 = vadd.f32 %v2597, %v2615
        %v2634 = vadd.f32 %v2598, %v2616
        %v2635 = vmul.f32 %v2030, 0.125
        %v2636 = vmul.f32 %v2031, 0.125
        %v2637 = vmul.f32 %v2032, 0.125
        %v2638 = vadd.f32 %v2635, %v2401
        %v2639 = vadd.f32 %v2636, %v2402
        %v2640 = vadd.f32 %v2637, %v2403
        %v2641 = vadd.f32 %v2455, %v2404
        %v2642 = vadd.f32 %v2456, %v2405
        %v2643 = vadd.f32 %v2457, %v2406
        %v2644 = vadd.f32 %v2458, %v2407
        %v2645 = vadd.f32 %v2459, %v2408
        %v2646 = vadd.f32 %v2460, %v2409
        %v2647 = vadd.f32 %v2461, %v2410
        %v2648 = vadd.f32 %v2462, %v2411
        %v2649 = vadd.f32 %v2463, %v2412
        %v2650 = vadd.f32 %v2464, %v2413
        %v2651 = vadd.f32 %v2465, %v2414
        %v2652 = vadd.f32 %v2466, %v2415
        %v2653 = vadd.f32 %v2467, %v2416
        %v2654 = vadd.f32 %v2468, %v2417
        %v2655 = vadd.f32 %v2469, %v2418
        %v2656 = vadd.f32 %v2470, %v2419
        %v2657 = vadd.f32 %v2471, %v2420
        %v2658 = vadd.f32 %v2472, %v2421
        %v2659 = vadd.f32 %v2473, %v2422
        %v2660 = vadd.f32 %v2474, %v2423
        %v2661 = vadd.f32 %v2475, %v2424
        %v2662 = vadd.f32 %v2638, %v2350
        %v2663 = vadd.f32 %v2639, %v2351
        %v2664 = vadd.f32 %v2640, %v2352
        %v2665 = vadd.f32 %v2641, %v2353
        %v2666 = vadd.f32 %v2642, %v2354
        %v2667 = vadd.f32 %v2643, %v2355
        %v2668 = vadd.f32 %v2644, %v2356
        %v2669 = vadd.f32 %v2645, %v2357
        %v2670 = vadd.f32 %v2646, %v2358
        %v2671 = vadd.f32 %v2647, %v2359
        %v2672 = vadd.f32 %v2648, %v2360
        %v2673 = vadd.f32 %v2649, %v2361
        %v2674 = vadd.f32 %v2650, %v2362
        %v2675 = vadd.f32 %v2651, %v2363
        %v2676 = vadd.f32 %v2652, %v2364
        %v2677 = vadd.f32 %v2653, %v2365
        %v2678 = vadd.f32 %v2654, %v2366
        %v2679 = vadd.f32 %v2655, %v2367
        %v2680 = vadd.f32 %v2656, %v2368
        %v2681 = vadd.f32 %v2657, %v2369
        %v2682 = vadd.f32 %v2658, %v2370
        %v2683 = vadd.f32 %v2659, %v2371
        %v2684 = vadd.f32 %v2660, %v2372
        %v2685 = vadd.f32 %v2661, %v2373
        %v2686 = vmul.f32 %v1366, 0.125
        %v2687 = vmul.f32 %v1367, 0.125
        %v2688 = vmul.f32 %v1368, 0.125
        %v2689 = vadd.f32 %v2662, %v2326
        %v2690 = vadd.f32 %v2663, %v2327
        %v2691 = vadd.f32 %v2664, %v2328
        %v2692 = vadd.f32 %v2665, %v2329
        %v2693 = vadd.f32 %v2666, %v2330
        %v2694 = vadd.f32 %v2667, %v2331
        %v2695 = vadd.f32 %v2668, %v2332
        %v2696 = vadd.f32 %v2669, %v2333
        %v2697 = vadd.f32 %v2670, %v2334
        %v2698 = vadd.f32 %v2671, %v2335
        %v2699 = vadd.f32 %v2672, %v2336
        %v2700 = vadd.f32 %v2673, %v2337
        %v2701 = vadd.f32 %v2674, %v2338
        %v2702 = vadd.f32 %v2675, %v2339
        %v2703 = vadd.f32 %v2676, %v2340
        %v2704 = vadd.f32 %v2677, %v2341
        %v2705 = vadd.f32 %v2678, %v2342
        %v2706 = vadd.f32 %v2679, %v2343
        %v2707 = vadd.f32 %v2680, %v2344
        %v2708 = vadd.f32 %v2681, %v2345
        %v2709 = vadd.f32 %v2682, %v2346
        %v2710 = vadd.f32 %v2683, %v2686
        %v2711 = vadd.f32 %v2684, %v2687
        %v2712 = vadd.f32 %v2685, %v2688
        %v2713 = vmul.f32 %v2300, 0.125
        %v2714 = vmul.f32 %v2301, 0.125
        %v2715 = vadd.f32 %v2713, %v2563
        %v2716 = vadd.f32 %v2714, %v2564
        %v2717 = vadd.f32 %v2599, %v2565
        %v2718 = vadd.f32 %v2600, %v2566
        %v2719 = vadd.f32 %v2601, %v2567
        %v2720 = vadd.f32 %v2602, %v2568
        %v2721 = vadd.f32 %v2603, %v2569
        %v2722 = vadd.f32 %v2604, %v2570
        %v2723 = vadd.f32 %v2605, %v2571
        %v2724 = vadd.f32 %v2606, %v2572
        %v2725 = vadd.f32 %v2607, %v2573
        %v2726 = vadd.f32 %v2608, %v2574
        %v2727 = vadd.f32 %v2609, %v2575
        %v2728 = vadd.f32 %v2610, %v2576
        %v2729 = vadd.f32 %v2611, %v2577
        %v2730 = vadd.f32 %v2612, %v2578
        %v2731 = vadd.f32 %v2715, %v2529
        %v2732 = vadd.f32 %v2716, %v2530
        %v2733 = vadd.f32 %v2717, %v2531
        %v2734 = vadd.f32 %v2718, %v2532
        %v2735 = vadd.f32 %v2719, %v2533
        %v2736 = vadd.f32 %v2720, %v2534
        %v2737 = vadd.f32 %v2721, %v2535
        %v2738 = vadd.f32 %v2722, %v2536
        %v2739 = vadd.f32 %v2723, %v2537
        %v2740 = vadd.f32 %v2724, %v2538
        %v2741 = vadd.f32 %v2725, %v2539
        %v2742 = vadd.f32 %v2726, %v2540
        %v2743 = vadd.f32 %v2727, %v2541
        %v2744 = vadd.f32 %v2728, %v2542
        %v2745 = vadd.f32 %v2729, %v2543
        %v2746 = vadd.f32 %v2730, %v2544
        %v2747 = vmul.f32 %v1628, 0.125
        %v2748 = vmul.f32 %v1629, 0.125
        %v2749 = vadd.f32 %v2731, %v2513
        %v2750 = vadd.f32 %v2732, %v2514
        %v2751 = vadd.f32 %v2733, %v2515
        %v2752 = vadd.f32 %v2734, %v2516
        %v2753 = vadd.f32 %v2735, %v2517
        %v2754 = vadd.f32 %v2736, %v2518
        %v2755 = vadd.f32 %v2737, %v2519
        %v2756 = vadd.f32 %v2738, %v2520
        %v2757 = vadd.f32 %v2739, %v2521
        %v2758 = vadd.f32 %v2740, %v2522
        %v2759 = vadd.f32 %v2741, %v2523
        %v2760 = vadd.f32 %v2742, %v2524
        %v2761 = vadd.f32 %v2743, %v2525
        %v2762 = vadd.f32 %v2744, %v2526
        %v2763 = vadd.f32 %v2745, %v2747
        %v2764 = vadd.f32 %v2746, %v2748
        %v2765 = vpack.c.bf16 %v2483, %v2482
        %v2766 = vpack.c.bf16 %v2486, %v2485
        %v2767 = vpack.c.bf16 %v2489, %v2488
        %v2768 = vpack.c.bf16 %v2492, %v2491
        %v2769 = vpack.c.bf16 %v2495, %v2494
        %v2770 = vpack.c.bf16 %v2498, %v2497
        %v2771 = vpack.c.bf16 %v2501, %v2500
        %v2772 = vpack.c.bf16 %v2504, %v2503
        %v2773 = vld [vmem:[%s2] sm:$0xf]
        %v2774 = vld [vmem:[%s2 + $0x4] sm:$0xf]
        %v2775 = vld [vmem:[%s2 + $0x8] sm:$0xf]
        %v2776 = vld [vmem:[%s2 + $0xc] sm:$0xf]
        %v2777 = vld [vmem:[%s2 + $0x10] sm:$0xf]
        %v2778 = vld [vmem:[%s2 + $0x14] sm:$0xf]
        %v2779 = vld [vmem:[%s2 + $0x18] sm:$0xf]
        %v2780 = vld [vmem:[%s2 + $0x1c] sm:$0xf]
        %v2781 = vld [vmem:[%s2 + $0x20] sm:$0xf]
        %v2782 = vld [vmem:[%s2 + $0x24] sm:$0xf]
        %v2783 = vld [vmem:[%s2 + $0x28] sm:$0xf]
        %v2784 = vld [vmem:[%s2 + $0x2c] sm:$0xf]
        %v2785 = vld [vmem:[%s2 + $0x30] sm:$0xf]
        %v2786 = vld [vmem:[%s2 + $0x34] sm:$0xf]
        %v2787 = vld [vmem:[%s2 + $0x38] sm:$0xf]
        %v2788 = vld [vmem:[%s2 + $0x3c] sm:$0xf]
        %v2789 = vpack.c.bf16 %v2618, %v2617
        %v2790 = vpack.c.bf16 %v2620, %v2619
        %v2791 = vpack.c.bf16 %v2622, %v2621
        %v2792 = vpack.c.bf16 %v2624, %v2623
        %v2793 = vpack.c.bf16 %v2626, %v2625
        %v2794 = vpack.c.bf16 %v2628, %v2627
        %v2795 = vpack.c.bf16 %v2630, %v2629
        %v2796 = vpack.c.bf16 %v2632, %v2631
        %s2797 = scalar_lea.vmem %s2, 64
        %v2798 = vld [vmem:[%s2797] sm:$0xf]
        %v2799 = vld [vmem:[%s2797 + $0x4] sm:$0xf]
        %v2800 = vld [vmem:[%s2797 + $0x8] sm:$0xf]
        %v2801 = vld [vmem:[%s2797 + $0xc] sm:$0xf]
        %v2802 = vld [vmem:[%s2797 + $0x10] sm:$0xf]
        %v2803 = vld [vmem:[%s2797 + $0x14] sm:$0xf]
        %v2804 = vld [vmem:[%s2797 + $0x18] sm:$0xf]
        %v2805 = vld [vmem:[%s2797 + $0x1c] sm:$0xf]
        %v2806 = vld [vmem:[%s2797 + $0x20] sm:$0xf]
        %v2807 = vld [vmem:[%s2797 + $0x24] sm:$0xf]
        %v2808 = vld [vmem:[%s2797 + $0x28] sm:$0xf]
        %v2809 = vld [vmem:[%s2797 + $0x2c] sm:$0xf]
        %v2810 = vld [vmem:[%s2797 + $0x30] sm:$0xf]
        %v2811 = vld [vmem:[%s2797 + $0x34] sm:$0xf]
        %v2812 = vld [vmem:[%s2797 + $0x38] sm:$0xf]
        %v2813 = vld [vmem:[%s2797 + $0x3c] sm:$0xf]
        %v2830 = vunpack.c.l.b16 %v2798
        %v2831 = vunpack.c.l.b16 %v2799
        %v2832 = vunpack.c.l.b16 %v2800
        %v2833 = vunpack.c.l.b16 %v2801
        %v2834 = vunpack.c.l.b16 %v2802
        %v2835 = vunpack.c.l.b16 %v2803
        %v2836 = vunpack.c.l.b16 %v2804
        %v2837 = vunpack.c.l.b16 %v2805
        %v2838 = vunpack.c.l.b16 %v2806
        %v2839 = vunpack.c.l.b16 %v2807
        %v2840 = vunpack.c.l.b16 %v2808
        %v2841 = vunpack.c.l.b16 %v2809
        %v2842 = vunpack.c.l.b16 %v2810
        %v2843 = vunpack.c.l.b16 %v2811
        %v2844 = vunpack.c.l.b16 %v2812
        %v2845 = vunpack.c.l.b16 %v2813
        %v2846 = vpack.c.b16 %v2831, %v2830
        %v2847 = vpack.c.b16 %v2833, %v2832
        %v2848 = vpack.c.b16 %v2835, %v2834
        %v2849 = vpack.c.b16 %v2837, %v2836
        %v2850 = vpack.c.b16 %v2839, %v2838
        %v2851 = vpack.c.b16 %v2841, %v2840
        %v2852 = vpack.c.b16 %v2843, %v2842
        %v2853 = vpack.c.b16 %v2845, %v2844
        %2862 = vmatpush.bf16.msra.mxu0 %v2853
        %2863 = vmatpush.bf16.msra.mxu0 %v2852
        %2864 = vmatpush.bf16.msra.mxu0 %v2851
        %2865 = vmatpush.bf16.msra.mxu0 %v2850
        %2866 = vmatpush.bf16.msra.mxu0 %v2849
        %2867 = vmatpush.bf16.msra.mxu0 %v2848
        %2868 = vmatpush.bf16.msra.mxu0 %v2847
        %2869 = vmatpush.bf16.msra.mxu0 %v2846
        %2870 = vmatmul.bf16.gmra.mxu0 %v2789
        %v2871 = vpop.f32.mrf.mxu0
        %v2872 = vadd.f32 0.0, %v2871
        %v2873 = vpop.f32.mrf.mxu0
        %v2874 = vadd.f32 0.0, %v2873
        %2875 = vmatmul.bf16.gmra.mxu0 %v2790
        %v2876 = vpop.f32.mrf.mxu0
        %v2877 = vadd.f32 0.0, %v2876
        %v2878 = vpop.f32.mrf.mxu0
        %v2879 = vadd.f32 0.0, %v2878
        %2880 = vmatmul.bf16.gmra.mxu0 %v2791
        %v2881 = vpop.f32.mrf.mxu0
        %v2882 = vadd.f32 0.0, %v2881
        %v2883 = vpop.f32.mrf.mxu0
        %v2884 = vadd.f32 0.0, %v2883
        %2885 = vmatmul.bf16.gmra.mxu0 %v2792
        %v2886 = vpop.f32.mrf.mxu0
        %v2887 = vadd.f32 0.0, %v2886
        %v2888 = vpop.f32.mrf.mxu0
        %v2889 = vadd.f32 0.0, %v2888
        %2890 = vmatmul.bf16.gmra.mxu0 %v2793
        %v2891 = vpop.f32.mrf.mxu0
        %v2892 = vadd.f32 0.0, %v2891
        %v2893 = vpop.f32.mrf.mxu0
        %v2894 = vadd.f32 0.0, %v2893
        %2895 = vmatmul.bf16.gmra.mxu0 %v2794
        %v2896 = vpop.f32.mrf.mxu0
        %v2897 = vadd.f32 0.0, %v2896
        %v2898 = vpop.f32.mrf.mxu0
        %v2899 = vadd.f32 0.0, %v2898
        %2900 = vmatmul.bf16.gmra.mxu0 %v2795
        %v2901 = vpop.f32.mrf.mxu0
        %v2902 = vadd.f32 0.0, %v2901
        %v2903 = vpop.f32.mrf.mxu0
        %v2904 = vadd.f32 0.0, %v2903
        %2905 = vmatmul.bf16.gmra.mxu0 %v2796
        %v2906 = vpop.f32.mrf.mxu0
        %v2907 = vadd.f32 0.0, %v2906
        %v2908 = vpop.f32.mrf.mxu0
        %v2909 = vadd.f32 0.0, %v2908
        %2910 = vdwg.mxu0
        %v2927 = vunpack.c.l.b16 %v2773
        %v2928 = vunpack.c.l.b16 %v2774
        %v2929 = vunpack.c.l.b16 %v2775
        %v2930 = vunpack.c.l.b16 %v2776
        %v2931 = vunpack.c.l.b16 %v2777
        %v2932 = vunpack.c.l.b16 %v2778
        %v2933 = vunpack.c.l.b16 %v2779
        %v2934 = vunpack.c.l.b16 %v2780
        %v2935 = vunpack.c.l.b16 %v2781
        %v2936 = vunpack.c.l.b16 %v2782
        %v2937 = vunpack.c.l.b16 %v2783
        %v2938 = vunpack.c.l.b16 %v2784
        %v2939 = vunpack.c.l.b16 %v2785
        %v2940 = vunpack.c.l.b16 %v2786
        %v2941 = vunpack.c.l.b16 %v2787
        %v2942 = vunpack.c.l.b16 %v2788
        %v2943 = vpack.c.b16 %v2928, %v2927
        %v2944 = vpack.c.b16 %v2930, %v2929
        %v2945 = vpack.c.b16 %v2932, %v2931
        %v2946 = vpack.c.b16 %v2934, %v2933
        %v2947 = vpack.c.b16 %v2936, %v2935
        %v2948 = vpack.c.b16 %v2938, %v2937
        %v2949 = vpack.c.b16 %v2940, %v2939
        %v2950 = vpack.c.b16 %v2942, %v2941
        %2959 = vmatpush.bf16.msra.mxu0 %v2950
        %2960 = vmatpush.bf16.msra.mxu0 %v2949
        %2961 = vmatpush.bf16.msra.mxu0 %v2948
        %2962 = vmatpush.bf16.msra.mxu0 %v2947
        %2963 = vmatpush.bf16.msra.mxu0 %v2946
        %2964 = vmatpush.bf16.msra.mxu0 %v2945
        %2965 = vmatpush.bf16.msra.mxu0 %v2944
        %2966 = vmatpush.bf16.msra.mxu0 %v2943
        %2967 = vmatmul.bf16.gmra.mxu0 %v2765
        %v2968 = vpop.f32.mrf.mxu0
        %v2969 = vadd.f32 %v2872, %v2968
        %v2970 = vpop.f32.mrf.mxu0
        %v2971 = vadd.f32 %v2874, %v2970
        %2972 = vmatmul.bf16.gmra.mxu0 %v2766
        %v2973 = vpop.f32.mrf.mxu0
        %v2974 = vadd.f32 %v2877, %v2973
        %v2975 = vpop.f32.mrf.mxu0
        %v2976 = vadd.f32 %v2879, %v2975
        %2977 = vmatmul.bf16.gmra.mxu0 %v2767
        %v2978 = vpop.f32.mrf.mxu0
        %v2979 = vadd.f32 %v2882, %v2978
        %v2980 = vpop.f32.mrf.mxu0
        %v2981 = vadd.f32 %v2884, %v2980
        %2982 = vmatmul.bf16.gmra.mxu0 %v2768
        %v2983 = vpop.f32.mrf.mxu0
        %v2984 = vadd.f32 %v2887, %v2983
        %v2985 = vpop.f32.mrf.mxu0
        %v2986 = vadd.f32 %v2889, %v2985
        %2987 = vmatmul.bf16.gmra.mxu0 %v2769
        %v2988 = vpop.f32.mrf.mxu0
        %v2989 = vadd.f32 %v2892, %v2988
        %v2990 = vpop.f32.mrf.mxu0
        %v2991 = vadd.f32 %v2894, %v2990
        %2992 = vmatmul.bf16.gmra.mxu0 %v2770
        %v2993 = vpop.f32.mrf.mxu0
        %v2994 = vadd.f32 %v2897, %v2993
        %v2995 = vpop.f32.mrf.mxu0
        %v2996 = vadd.f32 %v2899, %v2995
        %2997 = vmatmul.bf16.gmra.mxu0 %v2771
        %v2998 = vpop.f32.mrf.mxu0
        %v2999 = vadd.f32 %v2902, %v2998
        %v3000 = vpop.f32.mrf.mxu0
        %v3001 = vadd.f32 %v2904, %v3000
        %3002 = vmatmul.bf16.gmra.mxu0 %v2772
        %v3003 = vpop.f32.mrf.mxu0
        %v3004 = vadd.f32 %v2907, %v3003
        %v3005 = vpop.f32.mrf.mxu0
        %v3006 = vadd.f32 %v2909, %v3005
        %3007 = vdwg.mxu0
        %v3032 = vrot.slane %v2482, 1
        %v3033 = vrot.slane %v2483, 1
        %v3034 = vsel %vm1088, %v3032, %v3033
        %v3035 = vrot.slane %v2484, 1
        %v3036 = vsel %vm1088, %v3033, %v3035
        %v3037 = vrot.slane %v2485, 1
        %v3038 = vrot.slane %v2486, 1
        %v3039 = vsel %vm1088, %v3037, %v3038
        %v3040 = vrot.slane %v2487, 1
        %v3041 = vsel %vm1088, %v3038, %v3040
        %v3042 = vrot.slane %v2488, 1
        %v3043 = vrot.slane %v2489, 1
        %v3044 = vsel %vm1088, %v3042, %v3043
        %v3045 = vrot.slane %v2490, 1
        %v3046 = vsel %vm1088, %v3043, %v3045
        %v3047 = vrot.slane %v2491, 1
        %v3048 = vrot.slane %v2492, 1
        %v3049 = vsel %vm1088, %v3047, %v3048
        %v3050 = vrot.slane %v2493, 1
        %v3051 = vsel %vm1088, %v3048, %v3050
        %v3052 = vrot.slane %v2494, 1
        %v3053 = vrot.slane %v2495, 1
        %v3054 = vsel %vm1088, %v3052, %v3053
        %v3055 = vrot.slane %v2496, 1
        %v3056 = vsel %vm1088, %v3053, %v3055
        %v3057 = vrot.slane %v2497, 1
        %v3058 = vrot.slane %v2498, 1
        %v3059 = vsel %vm1088, %v3057, %v3058
        %v3060 = vrot.slane %v2499, 1
        %v3061 = vsel %vm1088, %v3058, %v3060
        %v3062 = vrot.slane %v2500, 1
        %v3063 = vrot.slane %v2501, 1
        %v3064 = vsel %vm1088, %v3062, %v3063
        %v3065 = vrot.slane %v2502, 1
        %v3066 = vsel %vm1088, %v3063, %v3065
        %v3067 = vrot.slane %v2503, 1
        %v3068 = vrot.slane %v2504, 1
        %v3069 = vsel %vm1088, %v3067, %v3068
        %v3070 = vrot.slane %v2505, 1
        %v3071 = vsel %vm1088, %v3068, %v3070
        %v3088 = vpack.c.bf16 %v3036, %v3034
        %v3089 = vpack.c.bf16 %v3041, %v3039
        %v3090 = vpack.c.bf16 %v3046, %v3044
        %v3091 = vpack.c.bf16 %v3051, %v3049
        %v3092 = vpack.c.bf16 %v3056, %v3054
        %v3093 = vpack.c.bf16 %v3061, %v3059
        %v3094 = vpack.c.bf16 %v3066, %v3064
        %v3095 = vpack.c.bf16 %v3071, %v3069
        %s3096 = scalar_lea.vmem %s2, 128
        %v3097 = vld [vmem:[%s3096] sm:$0xf]
        %v3098 = vld [vmem:[%s3096 + $0x4] sm:$0xf]
        %v3099 = vld [vmem:[%s3096 + $0x8] sm:$0xf]
        %v3100 = vld [vmem:[%s3096 + $0xc] sm:$0xf]
        %v3101 = vld [vmem:[%s3096 + $0x10] sm:$0xf]
        %v3102 = vld [vmem:[%s3096 + $0x14] sm:$0xf]
        %v3103 = vld [vmem:[%s3096 + $0x18] sm:$0xf]
        %v3104 = vld [vmem:[%s3096 + $0x1c] sm:$0xf]
        %v3105 = vld [vmem:[%s3096 + $0x20] sm:$0xf]
        %v3106 = vld [vmem:[%s3096 + $0x24] sm:$0xf]
        %v3107 = vld [vmem:[%s3096 + $0x28] sm:$0xf]
        %v3108 = vld [vmem:[%s3096 + $0x2c] sm:$0xf]
        %v3109 = vld [vmem:[%s3096 + $0x30] sm:$0xf]
        %v3110 = vld [vmem:[%s3096 + $0x34] sm:$0xf]
        %v3111 = vld [vmem:[%s3096 + $0x38] sm:$0xf]
        %v3112 = vld [vmem:[%s3096 + $0x3c] sm:$0xf]
        %v3129 = vunpack.c.l.b16 %v3097
        %v3130 = vunpack.c.l.b16 %v3098
        %v3131 = vunpack.c.l.b16 %v3099
        %v3132 = vunpack.c.l.b16 %v3100
        %v3133 = vunpack.c.l.b16 %v3101
        %v3134 = vunpack.c.l.b16 %v3102
        %v3135 = vunpack.c.l.b16 %v3103
        %v3136 = vunpack.c.l.b16 %v3104
        %v3137 = vunpack.c.l.b16 %v3105
        %v3138 = vunpack.c.l.b16 %v3106
        %v3139 = vunpack.c.l.b16 %v3107
        %v3140 = vunpack.c.l.b16 %v3108
        %v3141 = vunpack.c.l.b16 %v3109
        %v3142 = vunpack.c.l.b16 %v3110
        %v3143 = vunpack.c.l.b16 %v3111
        %v3144 = vunpack.c.l.b16 %v3112
        %v3145 = vpack.c.b16 %v3130, %v3129
        %v3146 = vpack.c.b16 %v3132, %v3131
        %v3147 = vpack.c.b16 %v3134, %v3133
        %v3148 = vpack.c.b16 %v3136, %v3135
        %v3149 = vpack.c.b16 %v3138, %v3137
        %v3150 = vpack.c.b16 %v3140, %v3139
        %v3151 = vpack.c.b16 %v3142, %v3141
        %v3152 = vpack.c.b16 %v3144, %v3143
        %3161 = vmatpush.bf16.msra.mxu0 %v3152
        %3162 = vmatpush.bf16.msra.mxu0 %v3151
        %3163 = vmatpush.bf16.msra.mxu0 %v3150
        %3164 = vmatpush.bf16.msra.mxu0 %v3149
        %3165 = vmatpush.bf16.msra.mxu0 %v3148
        %3166 = vmatpush.bf16.msra.mxu0 %v3147
        %3167 = vmatpush.bf16.msra.mxu0 %v3146
        %3168 = vmatpush.bf16.msra.mxu0 %v3145
        %3169 = vmatmul.bf16.gmra.mxu0 %v3088
        %v3170 = vpop.f32.mrf.mxu0
        %v3171 = vadd.f32 0.0, %v3170
        %v3172 = vpop.f32.mrf.mxu0
        %v3173 = vadd.f32 0.0, %v3172
        %3174 = vmatmul.bf16.gmra.mxu0 %v3089
        %v3175 = vpop.f32.mrf.mxu0
        %v3176 = vadd.f32 0.0, %v3175
        %v3177 = vpop.f32.mrf.mxu0
        %v3178 = vadd.f32 0.0, %v3177
        %3179 = vmatmul.bf16.gmra.mxu0 %v3090
        %v3180 = vpop.f32.mrf.mxu0
        %v3181 = vadd.f32 0.0, %v3180
        %v3182 = vpop.f32.mrf.mxu0
        %v3183 = vadd.f32 0.0, %v3182
        %3184 = vmatmul.bf16.gmra.mxu0 %v3091
        %v3185 = vpop.f32.mrf.mxu0
        %v3186 = vadd.f32 0.0, %v3185
        %v3187 = vpop.f32.mrf.mxu0
        %v3188 = vadd.f32 0.0, %v3187
        %3189 = vmatmul.bf16.gmra.mxu0 %v3092
        %v3190 = vpop.f32.mrf.mxu0
        %v3191 = vadd.f32 0.0, %v3190
        %v3192 = vpop.f32.mrf.mxu0
        %v3193 = vadd.f32 0.0, %v3192
        %3194 = vmatmul.bf16.gmra.mxu0 %v3093
        %v3195 = vpop.f32.mrf.mxu0
        %v3196 = vadd.f32 0.0, %v3195
        %v3197 = vpop.f32.mrf.mxu0
        %v3198 = vadd.f32 0.0, %v3197
        %3199 = vmatmul.bf16.gmra.mxu0 %v3094
        %v3200 = vpop.f32.mrf.mxu0
        %v3201 = vadd.f32 0.0, %v3200
        %v3202 = vpop.f32.mrf.mxu0
        %v3203 = vadd.f32 0.0, %v3202
        %3204 = vmatmul.bf16.gmra.mxu0 %v3095
        %v3205 = vpop.f32.mrf.mxu0
        %v3206 = vadd.f32 0.0, %v3205
        %v3207 = vpop.f32.mrf.mxu0
        %v3208 = vadd.f32 0.0, %v3207
        %3209 = vdwg.mxu0
        %v3210 = vadd.f32 %v2969, %v3171
        %v3211 = vadd.f32 %v2971, %v3173
        %v3212 = vadd.f32 %v2974, %v3176
        %v3213 = vadd.f32 %v2976, %v3178
        %v3214 = vadd.f32 %v2979, %v3181
        %v3215 = vadd.f32 %v2981, %v3183
        %v3216 = vadd.f32 %v2984, %v3186
        %v3217 = vadd.f32 %v2986, %v3188
        %v3218 = vadd.f32 %v2989, %v3191
        %v3219 = vadd.f32 %v2991, %v3193
        %v3220 = vadd.f32 %v2994, %v3196
        %v3221 = vadd.f32 %v2996, %v3198
        %v3222 = vadd.f32 %v2999, %v3201
        %v3223 = vadd.f32 %v3001, %v3203
        %v3224 = vadd.f32 %v3004, %v3206
        %v3225 = vadd.f32 %v3006, %v3208
        %v3226 = vpack.c.bf16 %v2690, %v2689
        %v3227 = vpack.c.bf16 %v2693, %v2692
        %v3228 = vpack.c.bf16 %v2696, %v2695
        %v3229 = vpack.c.bf16 %v2699, %v2698
        %v3230 = vpack.c.bf16 %v2702, %v2701
        %v3231 = vpack.c.bf16 %v2705, %v2704
        %v3232 = vpack.c.bf16 %v2708, %v2707
        %v3233 = vpack.c.bf16 %v2711, %v2710
        %s3234 = scalar_lea.vmem %s2, 192
        %v3235 = vld [vmem:[%s3234] sm:$0xf]
        %v3236 = vld [vmem:[%s3234 + $0x4] sm:$0xf]
        %v3237 = vld [vmem:[%s3234 + $0x8] sm:$0xf]
        %v3238 = vld [vmem:[%s3234 + $0xc] sm:$0xf]
        %v3239 = vld [vmem:[%s3234 + $0x10] sm:$0xf]
        %v3240 = vld [vmem:[%s3234 + $0x14] sm:$0xf]
        %v3241 = vld [vmem:[%s3234 + $0x18] sm:$0xf]
        %v3242 = vld [vmem:[%s3234 + $0x1c] sm:$0xf]
        %v3243 = vld [vmem:[%s3234 + $0x20] sm:$0xf]
        %v3244 = vld [vmem:[%s3234 + $0x24] sm:$0xf]
        %v3245 = vld [vmem:[%s3234 + $0x28] sm:$0xf]
        %v3246 = vld [vmem:[%s3234 + $0x2c] sm:$0xf]
        %v3247 = vld [vmem:[%s3234 + $0x30] sm:$0xf]
        %v3248 = vld [vmem:[%s3234 + $0x34] sm:$0xf]
        %v3249 = vld [vmem:[%s3234 + $0x38] sm:$0xf]
        %v3250 = vld [vmem:[%s3234 + $0x3c] sm:$0xf]
        %v3267 = vunpack.c.l.b16 %v3235
        %v3268 = vunpack.c.l.b16 %v3236
        %v3269 = vunpack.c.l.b16 %v3237
        %v3270 = vunpack.c.l.b16 %v3238
        %v3271 = vunpack.c.l.b16 %v3239
        %v3272 = vunpack.c.l.b16 %v3240
        %v3273 = vunpack.c.l.b16 %v3241
        %v3274 = vunpack.c.l.b16 %v3242
        %v3275 = vunpack.c.l.b16 %v3243
        %v3276 = vunpack.c.l.b16 %v3244
        %v3277 = vunpack.c.l.b16 %v3245
        %v3278 = vunpack.c.l.b16 %v3246
        %v3279 = vunpack.c.l.b16 %v3247
        %v3280 = vunpack.c.l.b16 %v3248
        %v3281 = vunpack.c.l.b16 %v3249
        %v3282 = vunpack.c.l.b16 %v3250
        %v3283 = vpack.c.b16 %v3268, %v3267
        %v3284 = vpack.c.b16 %v3270, %v3269
        %v3285 = vpack.c.b16 %v3272, %v3271
        %v3286 = vpack.c.b16 %v3274, %v3273
        %v3287 = vpack.c.b16 %v3276, %v3275
        %v3288 = vpack.c.b16 %v3278, %v3277
        %v3289 = vpack.c.b16 %v3280, %v3279
        %v3290 = vpack.c.b16 %v3282, %v3281
        %3299 = vmatpush.bf16.msra.mxu0 %v3290
        %3300 = vmatpush.bf16.msra.mxu0 %v3289
        %3301 = vmatpush.bf16.msra.mxu0 %v3288
        %3302 = vmatpush.bf16.msra.mxu0 %v3287
        %3303 = vmatpush.bf16.msra.mxu0 %v3286
        %3304 = vmatpush.bf16.msra.mxu0 %v3285
        %3305 = vmatpush.bf16.msra.mxu0 %v3284
        %3306 = vmatpush.bf16.msra.mxu0 %v3283
        %3307 = vmatmul.bf16.gmra.mxu0 %v3226
        %v3308 = vpop.f32.mrf.mxu0
        %v3309 = vadd.f32 0.0, %v3308
        %v3310 = vpop.f32.mrf.mxu0
        %v3311 = vadd.f32 0.0, %v3310
        %3312 = vmatmul.bf16.gmra.mxu0 %v3227
        %v3313 = vpop.f32.mrf.mxu0
        %v3314 = vadd.f32 0.0, %v3313
        %v3315 = vpop.f32.mrf.mxu0
        %v3316 = vadd.f32 0.0, %v3315
        %3317 = vmatmul.bf16.gmra.mxu0 %v3228
        %v3318 = vpop.f32.mrf.mxu0
        %v3319 = vadd.f32 0.0, %v3318
        %v3320 = vpop.f32.mrf.mxu0
        %v3321 = vadd.f32 0.0, %v3320
        %3322 = vmatmul.bf16.gmra.mxu0 %v3229
        %v3323 = vpop.f32.mrf.mxu0
        %v3324 = vadd.f32 0.0, %v3323
        %v3325 = vpop.f32.mrf.mxu0
        %v3326 = vadd.f32 0.0, %v3325
        %3327 = vmatmul.bf16.gmra.mxu0 %v3230
        %v3328 = vpop.f32.mrf.mxu0
        %v3329 = vadd.f32 0.0, %v3328
        %v3330 = vpop.f32.mrf.mxu0
        %v3331 = vadd.f32 0.0, %v3330
        %3332 = vmatmul.bf16.gmra.mxu0 %v3231
        %v3333 = vpop.f32.mrf.mxu0
        %v3334 = vadd.f32 0.0, %v3333
        %v3335 = vpop.f32.mrf.mxu0
        %v3336 = vadd.f32 0.0, %v3335
        %3337 = vmatmul.bf16.gmra.mxu0 %v3232
        %v3338 = vpop.f32.mrf.mxu0
        %v3339 = vadd.f32 0.0, %v3338
        %v3340 = vpop.f32.mrf.mxu0
        %v3341 = vadd.f32 0.0, %v3340
        %3342 = vmatmul.bf16.gmra.mxu0 %v3233
        %v3343 = vpop.f32.mrf.mxu0
        %v3344 = vadd.f32 0.0, %v3343
        %v3345 = vpop.f32.mrf.mxu0
        %v3346 = vadd.f32 0.0, %v3345
        %3347 = vdwg.mxu0
        %v3348 = vadd.f32 %v3210, %v3309
        %v3349 = vadd.f32 %v3211, %v3311
        %v3350 = vadd.f32 %v3212, %v3314
        %v3351 = vadd.f32 %v3213, %v3316
        %v3352 = vadd.f32 %v3214, %v3319
        %v3353 = vadd.f32 %v3215, %v3321
        %v3354 = vadd.f32 %v3216, %v3324
        %v3355 = vadd.f32 %v3217, %v3326
        %v3356 = vadd.f32 %v3218, %v3329
        %v3357 = vadd.f32 %v3219, %v3331
        %v3358 = vadd.f32 %v3220, %v3334
        %v3359 = vadd.f32 %v3221, %v3336
        %v3360 = vadd.f32 %v3222, %v3339
        %v3361 = vadd.f32 %v3223, %v3341
        %v3362 = vadd.f32 %v3224, %v3344
        %v3363 = vadd.f32 %v3225, %v3346
        %v3364 = vpack.c.bf16 %v2750, %v2749
        %v3365 = vpack.c.bf16 %v2752, %v2751
        %v3366 = vpack.c.bf16 %v2754, %v2753
        %v3367 = vpack.c.bf16 %v2756, %v2755
        %v3368 = vpack.c.bf16 %v2758, %v2757
        %v3369 = vpack.c.bf16 %v2760, %v2759
        %v3370 = vpack.c.bf16 %v2762, %v2761
        %v3371 = vpack.c.bf16 %v2764, %v2763
        %s3372 = scalar_lea.vmem %s2, 256
        %v3373 = vld [vmem:[%s3372] sm:$0xf]
        %v3374 = vld [vmem:[%s3372 + $0x4] sm:$0xf]
        %v3375 = vld [vmem:[%s3372 + $0x8] sm:$0xf]
        %v3376 = vld [vmem:[%s3372 + $0xc] sm:$0xf]
        %v3377 = vld [vmem:[%s3372 + $0x10] sm:$0xf]
        %v3378 = vld [vmem:[%s3372 + $0x14] sm:$0xf]
        %v3379 = vld [vmem:[%s3372 + $0x18] sm:$0xf]
        %v3380 = vld [vmem:[%s3372 + $0x1c] sm:$0xf]
        %v3381 = vld [vmem:[%s3372 + $0x20] sm:$0xf]
        %v3382 = vld [vmem:[%s3372 + $0x24] sm:$0xf]
        %v3383 = vld [vmem:[%s3372 + $0x28] sm:$0xf]
        %v3384 = vld [vmem:[%s3372 + $0x2c] sm:$0xf]
        %v3385 = vld [vmem:[%s3372 + $0x30] sm:$0xf]
        %v3386 = vld [vmem:[%s3372 + $0x34] sm:$0xf]
        %v3387 = vld [vmem:[%s3372 + $0x38] sm:$0xf]
        %v3388 = vld [vmem:[%s3372 + $0x3c] sm:$0xf]
        %v3405 = vunpack.c.l.b16 %v3373
        %v3406 = vunpack.c.l.b16 %v3374
        %v3407 = vunpack.c.l.b16 %v3375
        %v3408 = vunpack.c.l.b16 %v3376
        %v3409 = vunpack.c.l.b16 %v3377
        %v3410 = vunpack.c.l.b16 %v3378
        %v3411 = vunpack.c.l.b16 %v3379
        %v3412 = vunpack.c.l.b16 %v3380
        %v3413 = vunpack.c.l.b16 %v3381
        %v3414 = vunpack.c.l.b16 %v3382
        %v3415 = vunpack.c.l.b16 %v3383
        %v3416 = vunpack.c.l.b16 %v3384
        %v3417 = vunpack.c.l.b16 %v3385
        %v3418 = vunpack.c.l.b16 %v3386
        %v3419 = vunpack.c.l.b16 %v3387
        %v3420 = vunpack.c.l.b16 %v3388
        %v3421 = vpack.c.b16 %v3406, %v3405
        %v3422 = vpack.c.b16 %v3408, %v3407
        %v3423 = vpack.c.b16 %v3410, %v3409
        %v3424 = vpack.c.b16 %v3412, %v3411
        %v3425 = vpack.c.b16 %v3414, %v3413
        %v3426 = vpack.c.b16 %v3416, %v3415
        %v3427 = vpack.c.b16 %v3418, %v3417
        %v3428 = vpack.c.b16 %v3420, %v3419
        %3437 = vmatpush.bf16.msra.mxu0 %v3428
        %3438 = vmatpush.bf16.msra.mxu0 %v3427
        %3439 = vmatpush.bf16.msra.mxu0 %v3426
        %3440 = vmatpush.bf16.msra.mxu0 %v3425
        %3441 = vmatpush.bf16.msra.mxu0 %v3424
        %3442 = vmatpush.bf16.msra.mxu0 %v3423
        %3443 = vmatpush.bf16.msra.mxu0 %v3422
        %3444 = vmatpush.bf16.msra.mxu0 %v3421
        %3445 = vmatmul.bf16.gmra.mxu0 %v3364
        %v3446 = vpop.f32.mrf.mxu0
        %v3447 = vadd.f32 0.0, %v3446
        %v3448 = vpop.f32.mrf.mxu0
        %v3449 = vadd.f32 0.0, %v3448
        %3450 = vmatmul.bf16.gmra.mxu0 %v3365
        %v3451 = vpop.f32.mrf.mxu0
        %v3452 = vadd.f32 0.0, %v3451
        %v3453 = vpop.f32.mrf.mxu0
        %v3454 = vadd.f32 0.0, %v3453
        %3455 = vmatmul.bf16.gmra.mxu0 %v3366
        %v3456 = vpop.f32.mrf.mxu0
        %v3457 = vadd.f32 0.0, %v3456
        %v3458 = vpop.f32.mrf.mxu0
        %v3459 = vadd.f32 0.0, %v3458
        %3460 = vmatmul.bf16.gmra.mxu0 %v3367
        %v3461 = vpop.f32.mrf.mxu0
        %v3462 = vadd.f32 0.0, %v3461
        %v3463 = vpop.f32.mrf.mxu0
        %v3464 = vadd.f32 0.0, %v3463
        %3465 = vmatmul.bf16.gmra.mxu0 %v3368
        %v3466 = vpop.f32.mrf.mxu0
        %v3467 = vadd.f32 0.0, %v3466
        %v3468 = vpop.f32.mrf.mxu0
        %v3469 = vadd.f32 0.0, %v3468
        %3470 = vmatmul.bf16.gmra.mxu0 %v3369
        %v3471 = vpop.f32.mrf.mxu0
        %v3472 = vadd.f32 0.0, %v3471
        %v3473 = vpop.f32.mrf.mxu0
        %v3474 = vadd.f32 0.0, %v3473
        %3475 = vmatmul.bf16.gmra.mxu0 %v3370
        %v3476 = vpop.f32.mrf.mxu0
        %v3477 = vadd.f32 0.0, %v3476
        %v3478 = vpop.f32.mrf.mxu0
        %v3479 = vadd.f32 0.0, %v3478
        %3480 = vmatmul.bf16.gmra.mxu0 %v3371
        %v3481 = vpop.f32.mrf.mxu0
        %v3482 = vadd.f32 0.0, %v3481
        %v3483 = vpop.f32.mrf.mxu0
        %v3484 = vadd.f32 0.0, %v3483
        %3485 = vdwg.mxu0
        %v3486 = vadd.f32 %v3348, %v3447
        %v3487 = vadd.f32 %v3349, %v3449
        %v3488 = vadd.f32 %v3350, %v3452
        %v3489 = vadd.f32 %v3351, %v3454
        %v3490 = vadd.f32 %v3352, %v3457
        %v3491 = vadd.f32 %v3353, %v3459
        %v3492 = vadd.f32 %v3354, %v3462
        %v3493 = vadd.f32 %v3355, %v3464
        %v3494 = vadd.f32 %v3356, %v3467
        %v3495 = vadd.f32 %v3357, %v3469
        %v3496 = vadd.f32 %v3358, %v3472
        %v3497 = vadd.f32 %v3359, %v3474
        %v3498 = vadd.f32 %v3360, %v3477
        %v3499 = vadd.f32 %v3361, %v3479
        %v3500 = vadd.f32 %v3362, %v3482
        %v3501 = vadd.f32 %v3363, %v3484
        %v3526 = vrot.slane %v2689, 1
        %v3527 = vrot.slane %v2690, 1
        %v3528 = vsel %vm1088, %v3526, %v3527
        %v3529 = vrot.slane %v2691, 1
        %v3530 = vsel %vm1088, %v3527, %v3529
        %v3531 = vrot.slane %v2692, 1
        %v3532 = vrot.slane %v2693, 1
        %v3533 = vsel %vm1088, %v3531, %v3532
        %v3534 = vrot.slane %v2694, 1
        %v3535 = vsel %vm1088, %v3532, %v3534
        %v3536 = vrot.slane %v2695, 1
        %v3537 = vrot.slane %v2696, 1
        %v3538 = vsel %vm1088, %v3536, %v3537
        %v3539 = vrot.slane %v2697, 1
        %v3540 = vsel %vm1088, %v3537, %v3539
        %v3541 = vrot.slane %v2698, 1
        %v3542 = vrot.slane %v2699, 1
        %v3543 = vsel %vm1088, %v3541, %v3542
        %v3544 = vrot.slane %v2700, 1
        %v3545 = vsel %vm1088, %v3542, %v3544
        %v3546 = vrot.slane %v2701, 1
        %v3547 = vrot.slane %v2702, 1
        %v3548 = vsel %vm1088, %v3546, %v3547
        %v3549 = vrot.slane %v2703, 1
        %v3550 = vsel %vm1088, %v3547, %v3549
        %v3551 = vrot.slane %v2704, 1
        %v3552 = vrot.slane %v2705, 1
        %v3553 = vsel %vm1088, %v3551, %v3552
        %v3554 = vrot.slane %v2706, 1
        %v3555 = vsel %vm1088, %v3552, %v3554
        %v3556 = vrot.slane %v2707, 1
        %v3557 = vrot.slane %v2708, 1
        %v3558 = vsel %vm1088, %v3556, %v3557
        %v3559 = vrot.slane %v2709, 1
        %v3560 = vsel %vm1088, %v3557, %v3559
        %v3561 = vrot.slane %v2710, 1
        %v3562 = vrot.slane %v2711, 1
        %v3563 = vsel %vm1088, %v3561, %v3562
        %v3564 = vrot.slane %v2712, 1
        %v3565 = vsel %vm1088, %v3562, %v3564
        %v3582 = vpack.c.bf16 %v3530, %v3528
        %v3583 = vpack.c.bf16 %v3535, %v3533
        %v3584 = vpack.c.bf16 %v3540, %v3538
        %v3585 = vpack.c.bf16 %v3545, %v3543
        %v3586 = vpack.c.bf16 %v3550, %v3548
        %v3587 = vpack.c.bf16 %v3555, %v3553
        %v3588 = vpack.c.bf16 %v3560, %v3558
        %v3589 = vpack.c.bf16 %v3565, %v3563
        %s3590 = scalar_lea.vmem %s2, 320
        %v3591 = vld [vmem:[%s3590] sm:$0xf]
        %v3592 = vld [vmem:[%s3590 + $0x4] sm:$0xf]
        %v3593 = vld [vmem:[%s3590 + $0x8] sm:$0xf]
        %v3594 = vld [vmem:[%s3590 + $0xc] sm:$0xf]
        %v3595 = vld [vmem:[%s3590 + $0x10] sm:$0xf]
        %v3596 = vld [vmem:[%s3590 + $0x14] sm:$0xf]
        %v3597 = vld [vmem:[%s3590 + $0x18] sm:$0xf]
        %v3598 = vld [vmem:[%s3590 + $0x1c] sm:$0xf]
        %v3599 = vld [vmem:[%s3590 + $0x20] sm:$0xf]
        %v3600 = vld [vmem:[%s3590 + $0x24] sm:$0xf]
        %v3601 = vld [vmem:[%s3590 + $0x28] sm:$0xf]
        %v3602 = vld [vmem:[%s3590 + $0x2c] sm:$0xf]
        %v3603 = vld [vmem:[%s3590 + $0x30] sm:$0xf]
        %v3604 = vld [vmem:[%s3590 + $0x34] sm:$0xf]
        %v3605 = vld [vmem:[%s3590 + $0x38] sm:$0xf]
        %v3606 = vld [vmem:[%s3590 + $0x3c] sm:$0xf]
        %v3623 = vunpack.c.l.b16 %v3591
        %v3624 = vunpack.c.l.b16 %v3592
        %v3625 = vunpack.c.l.b16 %v3593
        %v3626 = vunpack.c.l.b16 %v3594
        %v3627 = vunpack.c.l.b16 %v3595
        %v3628 = vunpack.c.l.b16 %v3596
        %v3629 = vunpack.c.l.b16 %v3597
        %v3630 = vunpack.c.l.b16 %v3598
        %v3631 = vunpack.c.l.b16 %v3599
        %v3632 = vunpack.c.l.b16 %v3600
        %v3633 = vunpack.c.l.b16 %v3601
        %v3634 = vunpack.c.l.b16 %v3602
        %v3635 = vunpack.c.l.b16 %v3603
        %v3636 = vunpack.c.l.b16 %v3604
        %v3637 = vunpack.c.l.b16 %v3605
        %v3638 = vunpack.c.l.b16 %v3606
        %v3639 = vpack.c.b16 %v3624, %v3623
        %v3640 = vpack.c.b16 %v3626, %v3625
        %v3641 = vpack.c.b16 %v3628, %v3627
        %v3642 = vpack.c.b16 %v3630, %v3629
        %v3643 = vpack.c.b16 %v3632, %v3631
        %v3644 = vpack.c.b16 %v3634, %v3633
        %v3645 = vpack.c.b16 %v3636, %v3635
        %v3646 = vpack.c.b16 %v3638, %v3637
        %3655 = vmatpush.bf16.msra.mxu0 %v3646
        %3656 = vmatpush.bf16.msra.mxu0 %v3645
        %3657 = vmatpush.bf16.msra.mxu0 %v3644
        %3658 = vmatpush.bf16.msra.mxu0 %v3643
        %3659 = vmatpush.bf16.msra.mxu0 %v3642
        %3660 = vmatpush.bf16.msra.mxu0 %v3641
        %3661 = vmatpush.bf16.msra.mxu0 %v3640
        %3662 = vmatpush.bf16.msra.mxu0 %v3639
        %3663 = vmatmul.bf16.gmra.mxu0 %v3582
        %v3664 = vpop.f32.mrf.mxu0
        %v3665 = vadd.f32 0.0, %v3664
        %v3666 = vpop.f32.mrf.mxu0
        %v3667 = vadd.f32 0.0, %v3666
        %3668 = vmatmul.bf16.gmra.mxu0 %v3583
        %v3669 = vpop.f32.mrf.mxu0
        %v3670 = vadd.f32 0.0, %v3669
        %v3671 = vpop.f32.mrf.mxu0
        %v3672 = vadd.f32 0.0, %v3671
        %3673 = vmatmul.bf16.gmra.mxu0 %v3584
        %v3674 = vpop.f32.mrf.mxu0
        %v3675 = vadd.f32 0.0, %v3674
        %v3676 = vpop.f32.mrf.mxu0
        %v3677 = vadd.f32 0.0, %v3676
        %3678 = vmatmul.bf16.gmra.mxu0 %v3585
        %v3679 = vpop.f32.mrf.mxu0
        %v3680 = vadd.f32 0.0, %v3679
        %v3681 = vpop.f32.mrf.mxu0
        %v3682 = vadd.f32 0.0, %v3681
        %3683 = vmatmul.bf16.gmra.mxu0 %v3586
        %v3684 = vpop.f32.mrf.mxu0
        %v3685 = vadd.f32 0.0, %v3684
        %v3686 = vpop.f32.mrf.mxu0
        %v3687 = vadd.f32 0.0, %v3686
        %3688 = vmatmul.bf16.gmra.mxu0 %v3587
        %v3689 = vpop.f32.mrf.mxu0
        %v3690 = vadd.f32 0.0, %v3689
        %v3691 = vpop.f32.mrf.mxu0
        %v3692 = vadd.f32 0.0, %v3691
        %3693 = vmatmul.bf16.gmra.mxu0 %v3588
        %v3694 = vpop.f32.mrf.mxu0
        %v3695 = vadd.f32 0.0, %v3694
        %v3696 = vpop.f32.mrf.mxu0
        %v3697 = vadd.f32 0.0, %v3696
        %3698 = vmatmul.bf16.gmra.mxu0 %v3589
        %v3699 = vpop.f32.mrf.mxu0
        %v3700 = vadd.f32 0.0, %v3699
        %v3701 = vpop.f32.mrf.mxu0
        %v3702 = vadd.f32 0.0, %v3701
        %3703 = vdwg.mxu0
        %v3704 = vadd.f32 %v3486, %v3665
        %v3705 = vadd.f32 %v3487, %v3667
        %v3706 = vadd.f32 %v3488, %v3670
        %v3707 = vadd.f32 %v3489, %v3672
        %v3708 = vadd.f32 %v3490, %v3675
        %v3709 = vadd.f32 %v3491, %v3677
        %v3710 = vadd.f32 %v3492, %v3680
        %v3711 = vadd.f32 %v3493, %v3682
        %v3712 = vadd.f32 %v3494, %v3685
        %v3713 = vadd.f32 %v3495, %v3687
        %v3714 = vadd.f32 %v3496, %v3690
        %v3715 = vadd.f32 %v3497, %v3692
        %v3716 = vadd.f32 %v3498, %v3695
        %v3717 = vadd.f32 %v3499, %v3697
        %v3718 = vadd.f32 %v3500, %v3700
        %v3719 = vadd.f32 %v3501, %v3702
        %v3720 = vpack.c.bf16 %v2507, %v2506
        %s3721 = scalar_lea.vmem %s2, 384
        %v3722 = vld [vmem:[%s3721] sm:$0xf]
        %v3723 = vld [vmem:[%s3721 + $0x4] sm:$0xf]
        %v3724 = vld [vmem:[%s3721 + $0x8] sm:$0xf]
        %v3725 = vld [vmem:[%s3721 + $0xc] sm:$0xf]
        %v3726 = vld [vmem:[%s3721 + $0x10] sm:$0xf]
        %v3727 = vld [vmem:[%s3721 + $0x14] sm:$0xf]
        %v3728 = vld [vmem:[%s3721 + $0x18] sm:$0xf]
        %v3729 = vld [vmem:[%s3721 + $0x1c] sm:$0xf]
        %v3730 = vld [vmem:[%s3721 + $0x20] sm:$0xf]
        %v3731 = vld [vmem:[%s3721 + $0x24] sm:$0xf]
        %v3732 = vld [vmem:[%s3721 + $0x28] sm:$0xf]
        %v3733 = vld [vmem:[%s3721 + $0x2c] sm:$0xf]
        %v3734 = vld [vmem:[%s3721 + $0x30] sm:$0xf]
        %v3735 = vld [vmem:[%s3721 + $0x34] sm:$0xf]
        %v3736 = vld [vmem:[%s3721 + $0x38] sm:$0xf]
        %v3737 = vld [vmem:[%s3721 + $0x3c] sm:$0xf]
        %v3754 = vunpack.c.l.b16 %v3722
        %v3755 = vunpack.c.l.b16 %v3723
        %v3756 = vunpack.c.l.b16 %v3724
        %v3757 = vunpack.c.l.b16 %v3725
        %v3758 = vunpack.c.l.b16 %v3726
        %v3759 = vunpack.c.l.b16 %v3727
        %v3760 = vunpack.c.l.b16 %v3728
        %v3761 = vunpack.c.l.b16 %v3729
        %v3762 = vunpack.c.l.b16 %v3730
        %v3763 = vunpack.c.l.b16 %v3731
        %v3764 = vunpack.c.l.b16 %v3732
        %v3765 = vunpack.c.l.b16 %v3733
        %v3766 = vunpack.c.l.b16 %v3734
        %v3767 = vunpack.c.l.b16 %v3735
        %v3768 = vunpack.c.l.b16 %v3736
        %v3769 = vunpack.c.l.b16 %v3737
        %v3770 = vpack.c.b16 %v3755, %v3754
        %v3771 = vpack.c.b16 %v3757, %v3756
        %v3772 = vpack.c.b16 %v3759, %v3758
        %v3773 = vpack.c.b16 %v3761, %v3760
        %v3774 = vpack.c.b16 %v3763, %v3762
        %v3775 = vpack.c.b16 %v3765, %v3764
        %v3776 = vpack.c.b16 %v3767, %v3766
        %v3777 = vpack.c.b16 %v3769, %v3768
        %3786 = vmatpush.bf16.msra.mxu0 %v3777
        %3787 = vmatpush.bf16.msra.mxu0 %v3776
        %3788 = vmatpush.bf16.msra.mxu0 %v3775
        %3789 = vmatpush.bf16.msra.mxu0 %v3774
        %3790 = vmatpush.bf16.msra.mxu0 %v3773
        %3791 = vmatpush.bf16.msra.mxu0 %v3772
        %3792 = vmatpush.bf16.msra.mxu0 %v3771
        %3793 = vmatpush.bf16.msra.mxu0 %v3770
        %3794 = vmatmul.bf16.gmra.mxu0 %v2766
        %v3795 = vpop.f32.mrf.mxu0
        %v3796 = vadd.f32 0.0, %v3795
        %v3797 = vpop.f32.mrf.mxu0
        %v3798 = vadd.f32 0.0, %v3797
        %3799 = vmatmul.bf16.gmra.mxu0 %v2767
        %v3800 = vpop.f32.mrf.mxu0
        %v3801 = vadd.f32 0.0, %v3800
        %v3802 = vpop.f32.mrf.mxu0
        %v3803 = vadd.f32 0.0, %v3802
        %3804 = vmatmul.bf16.gmra.mxu0 %v2768
        %v3805 = vpop.f32.mrf.mxu0
        %v3806 = vadd.f32 0.0, %v3805
        %v3807 = vpop.f32.mrf.mxu0
        %v3808 = vadd.f32 0.0, %v3807
        %3809 = vmatmul.bf16.gmra.mxu0 %v2769
        %v3810 = vpop.f32.mrf.mxu0
        %v3811 = vadd.f32 0.0, %v3810
        %v3812 = vpop.f32.mrf.mxu0
        %v3813 = vadd.f32 0.0, %v3812
        %3814 = vmatmul.bf16.gmra.mxu0 %v2770
        %v3815 = vpop.f32.mrf.mxu0
        %v3816 = vadd.f32 0.0, %v3815
        %v3817 = vpop.f32.mrf.mxu0
        %v3818 = vadd.f32 0.0, %v3817
        %3819 = vmatmul.bf16.gmra.mxu0 %v2771
        %v3820 = vpop.f32.mrf.mxu0
        %v3821 = vadd.f32 0.0, %v3820
        %v3822 = vpop.f32.mrf.mxu0
        %v3823 = vadd.f32 0.0, %v3822
        %3824 = vmatmul.bf16.gmra.mxu0 %v2772
        %v3825 = vpop.f32.mrf.mxu0
        %v3826 = vadd.f32 0.0, %v3825
        %v3827 = vpop.f32.mrf.mxu0
        %v3828 = vadd.f32 0.0, %v3827
        %3829 = vmatmul.bf16.gmra.mxu0 %v3720
        %v3830 = vpop.f32.mrf.mxu0
        %v3831 = vadd.f32 0.0, %v3830
        %v3832 = vpop.f32.mrf.mxu0
        %v3833 = vadd.f32 0.0, %v3832
        %3834 = vdwg.mxu0
        %v3835 = vadd.f32 %v3704, %v3796
        %v3836 = vadd.f32 %v3705, %v3798
        %v3837 = vadd.f32 %v3706, %v3801
        %v3838 = vadd.f32 %v3707, %v3803
        %v3839 = vadd.f32 %v3708, %v3806
        %v3840 = vadd.f32 %v3709, %v3808
        %v3841 = vadd.f32 %v3710, %v3811
        %v3842 = vadd.f32 %v3711, %v3813
        %v3843 = vadd.f32 %v3712, %v3816
        %v3844 = vadd.f32 %v3713, %v3818
        %v3845 = vadd.f32 %v3714, %v3821
        %v3846 = vadd.f32 %v3715, %v3823
        %v3847 = vadd.f32 %v3716, %v3826
        %v3848 = vadd.f32 %v3717, %v3828
        %v3849 = vadd.f32 %v3718, %v3831
        %v3850 = vadd.f32 %v3719, %v3833
        %v3851 = vpack.c.bf16 %v2634, %v2633
        %s3852 = scalar_lea.vmem %s2, 448
        %v3853 = vld [vmem:[%s3852] sm:$0xf]
        %v3854 = vld [vmem:[%s3852 + $0x4] sm:$0xf]
        %v3855 = vld [vmem:[%s3852 + $0x8] sm:$0xf]
        %v3856 = vld [vmem:[%s3852 + $0xc] sm:$0xf]
        %v3857 = vld [vmem:[%s3852 + $0x10] sm:$0xf]
        %v3858 = vld [vmem:[%s3852 + $0x14] sm:$0xf]
        %v3859 = vld [vmem:[%s3852 + $0x18] sm:$0xf]
        %v3860 = vld [vmem:[%s3852 + $0x1c] sm:$0xf]
        %v3861 = vld [vmem:[%s3852 + $0x20] sm:$0xf]
        %v3862 = vld [vmem:[%s3852 + $0x24] sm:$0xf]
        %v3863 = vld [vmem:[%s3852 + $0x28] sm:$0xf]
        %v3864 = vld [vmem:[%s3852 + $0x2c] sm:$0xf]
        %v3865 = vld [vmem:[%s3852 + $0x30] sm:$0xf]
        %v3866 = vld [vmem:[%s3852 + $0x34] sm:$0xf]
        %v3867 = vld [vmem:[%s3852 + $0x38] sm:$0xf]
        %v3868 = vld [vmem:[%s3852 + $0x3c] sm:$0xf]
        %v3885 = vunpack.c.l.b16 %v3853
        %v3886 = vunpack.c.l.b16 %v3854
        %v3887 = vunpack.c.l.b16 %v3855
        %v3888 = vunpack.c.l.b16 %v3856
        %v3889 = vunpack.c.l.b16 %v3857
        %v3890 = vunpack.c.l.b16 %v3858
        %v3891 = vunpack.c.l.b16 %v3859
        %v3892 = vunpack.c.l.b16 %v3860
        %v3893 = vunpack.c.l.b16 %v3861
        %v3894 = vunpack.c.l.b16 %v3862
        %v3895 = vunpack.c.l.b16 %v3863
        %v3896 = vunpack.c.l.b16 %v3864
        %v3897 = vunpack.c.l.b16 %v3865
        %v3898 = vunpack.c.l.b16 %v3866
        %v3899 = vunpack.c.l.b16 %v3867
        %v3900 = vunpack.c.l.b16 %v3868
        %v3901 = vpack.c.b16 %v3886, %v3885
        %v3902 = vpack.c.b16 %v3888, %v3887
        %v3903 = vpack.c.b16 %v3890, %v3889
        %v3904 = vpack.c.b16 %v3892, %v3891
        %v3905 = vpack.c.b16 %v3894, %v3893
        %v3906 = vpack.c.b16 %v3896, %v3895
        %v3907 = vpack.c.b16 %v3898, %v3897
        %v3908 = vpack.c.b16 %v3900, %v3899
        %3917 = vmatpush.bf16.msra.mxu0 %v3908
        %3918 = vmatpush.bf16.msra.mxu0 %v3907
        %3919 = vmatpush.bf16.msra.mxu0 %v3906
        %3920 = vmatpush.bf16.msra.mxu0 %v3905
        %3921 = vmatpush.bf16.msra.mxu0 %v3904
        %3922 = vmatpush.bf16.msra.mxu0 %v3903
        %3923 = vmatpush.bf16.msra.mxu0 %v3902
        %3924 = vmatpush.bf16.msra.mxu0 %v3901
        %3925 = vmatmul.bf16.gmra.mxu0 %v2790
        %v3926 = vpop.f32.mrf.mxu0
        %v3927 = vadd.f32 0.0, %v3926
        %v3928 = vpop.f32.mrf.mxu0
        %v3929 = vadd.f32 0.0, %v3928
        %3930 = vmatmul.bf16.gmra.mxu0 %v2791
        %v3931 = vpop.f32.mrf.mxu0
        %v3932 = vadd.f32 0.0, %v3931
        %v3933 = vpop.f32.mrf.mxu0
        %v3934 = vadd.f32 0.0, %v3933
        %3935 = vmatmul.bf16.gmra.mxu0 %v2792
        %v3936 = vpop.f32.mrf.mxu0
        %v3937 = vadd.f32 0.0, %v3936
        %v3938 = vpop.f32.mrf.mxu0
        %v3939 = vadd.f32 0.0, %v3938
        %3940 = vmatmul.bf16.gmra.mxu0 %v2793
        %v3941 = vpop.f32.mrf.mxu0
        %v3942 = vadd.f32 0.0, %v3941
        %v3943 = vpop.f32.mrf.mxu0
        %v3944 = vadd.f32 0.0, %v3943
        %3945 = vmatmul.bf16.gmra.mxu0 %v2794
        %v3946 = vpop.f32.mrf.mxu0
        %v3947 = vadd.f32 0.0, %v3946
        %v3948 = vpop.f32.mrf.mxu0
        %v3949 = vadd.f32 0.0, %v3948
        %3950 = vmatmul.bf16.gmra.mxu0 %v2795
        %v3951 = vpop.f32.mrf.mxu0
        %v3952 = vadd.f32 0.0, %v3951
        %v3953 = vpop.f32.mrf.mxu0
        %v3954 = vadd.f32 0.0, %v3953
        %3955 = vmatmul.bf16.gmra.mxu0 %v2796
        %v3956 = vpop.f32.mrf.mxu0
        %v3957 = vadd.f32 0.0, %v3956
        %v3958 = vpop.f32.mrf.mxu0
        %v3959 = vadd.f32 0.0, %v3958
        %3960 = vmatmul.bf16.gmra.mxu0 %v3851
        %v3961 = vpop.f32.mrf.mxu0
        %v3962 = vadd.f32 0.0, %v3961
        %v3963 = vpop.f32.mrf.mxu0
        %v3964 = vadd.f32 0.0, %v3963
        %3965 = vdwg.mxu0
        %v3966 = vadd.f32 %v3835, %v3927
        %v3967 = vadd.f32 %v3836, %v3929
        %v3968 = vadd.f32 %v3837, %v3932
        %v3969 = vadd.f32 %v3838, %v3934
        %v3970 = vadd.f32 %v3839, %v3937
        %v3971 = vadd.f32 %v3840, %v3939
        %v3972 = vadd.f32 %v3841, %v3942
        %v3973 = vadd.f32 %v3842, %v3944
        %v3974 = vadd.f32 %v3843, %v3947
        %v3975 = vadd.f32 %v3844, %v3949
        %v3976 = vadd.f32 %v3845, %v3952
        %v3977 = vadd.f32 %v3846, %v3954
        %v3978 = vadd.f32 %v3847, %v3957
        %v3979 = vadd.f32 %v3848, %v3959
        %v3980 = vadd.f32 %v3849, %v3962
        %v3981 = vadd.f32 %v3850, %v3964
        %v3985 = vrot.slane %v2506, 1
        %v3986 = vrot.slane %v2507, 1
        %v3987 = vsel %vm1088, %v3985, %v3986
        %v3988 = vrot.slane %v2508, 1
        %v3989 = vsel %vm1088, %v3986, %v3988
        %v3992 = vpack.c.bf16 %v3989, %v3987
        %s3993 = scalar_lea.vmem %s2, 512
        %v3994 = vld [vmem:[%s3993] sm:$0xf]
        %v3995 = vld [vmem:[%s3993 + $0x4] sm:$0xf]
        %v3996 = vld [vmem:[%s3993 + $0x8] sm:$0xf]
        %v3997 = vld [vmem:[%s3993 + $0xc] sm:$0xf]
        %v3998 = vld [vmem:[%s3993 + $0x10] sm:$0xf]
        %v3999 = vld [vmem:[%s3993 + $0x14] sm:$0xf]
        %v4000 = vld [vmem:[%s3993 + $0x18] sm:$0xf]
        %v4001 = vld [vmem:[%s3993 + $0x1c] sm:$0xf]
        %v4002 = vld [vmem:[%s3993 + $0x20] sm:$0xf]
        %v4003 = vld [vmem:[%s3993 + $0x24] sm:$0xf]
        %v4004 = vld [vmem:[%s3993 + $0x28] sm:$0xf]
        %v4005 = vld [vmem:[%s3993 + $0x2c] sm:$0xf]
        %v4006 = vld [vmem:[%s3993 + $0x30] sm:$0xf]
        %v4007 = vld [vmem:[%s3993 + $0x34] sm:$0xf]
        %v4008 = vld [vmem:[%s3993 + $0x38] sm:$0xf]
        %v4009 = vld [vmem:[%s3993 + $0x3c] sm:$0xf]
        %v4026 = vunpack.c.l.b16 %v3994
        %v4027 = vunpack.c.l.b16 %v3995
        %v4028 = vunpack.c.l.b16 %v3996
        %v4029 = vunpack.c.l.b16 %v3997
        %v4030 = vunpack.c.l.b16 %v3998
        %v4031 = vunpack.c.l.b16 %v3999
        %v4032 = vunpack.c.l.b16 %v4000
        %v4033 = vunpack.c.l.b16 %v4001
        %v4034 = vunpack.c.l.b16 %v4002
        %v4035 = vunpack.c.l.b16 %v4003
        %v4036 = vunpack.c.l.b16 %v4004
        %v4037 = vunpack.c.l.b16 %v4005
        %v4038 = vunpack.c.l.b16 %v4006
        %v4039 = vunpack.c.l.b16 %v4007
        %v4040 = vunpack.c.l.b16 %v4008
        %v4041 = vunpack.c.l.b16 %v4009
        %v4042 = vpack.c.b16 %v4027, %v4026
        %v4043 = vpack.c.b16 %v4029, %v4028
        %v4044 = vpack.c.b16 %v4031, %v4030
        %v4045 = vpack.c.b16 %v4033, %v4032
        %v4046 = vpack.c.b16 %v4035, %v4034
        %v4047 = vpack.c.b16 %v4037, %v4036
        %v4048 = vpack.c.b16 %v4039, %v4038
        %v4049 = vpack.c.b16 %v4041, %v4040
        %4058 = vmatpush.bf16.msra.mxu0 %v4049
        %4059 = vmatpush.bf16.msra.mxu0 %v4048
        %4060 = vmatpush.bf16.msra.mxu0 %v4047
        %4061 = vmatpush.bf16.msra.mxu0 %v4046
        %4062 = vmatpush.bf16.msra.mxu0 %v4045
        %4063 = vmatpush.bf16.msra.mxu0 %v4044
        %4064 = vmatpush.bf16.msra.mxu0 %v4043
        %4065 = vmatpush.bf16.msra.mxu0 %v4042
        %4066 = vmatmul.bf16.gmra.mxu0 %v3089
        %v4067 = vpop.f32.mrf.mxu0
        %v4068 = vadd.f32 0.0, %v4067
        %v4069 = vpop.f32.mrf.mxu0
        %v4070 = vadd.f32 0.0, %v4069
        %4071 = vmatmul.bf16.gmra.mxu0 %v3090
        %v4072 = vpop.f32.mrf.mxu0
        %v4073 = vadd.f32 0.0, %v4072
        %v4074 = vpop.f32.mrf.mxu0
        %v4075 = vadd.f32 0.0, %v4074
        %4076 = vmatmul.bf16.gmra.mxu0 %v3091
        %v4077 = vpop.f32.mrf.mxu0
        %v4078 = vadd.f32 0.0, %v4077
        %v4079 = vpop.f32.mrf.mxu0
        %v4080 = vadd.f32 0.0, %v4079
        %4081 = vmatmul.bf16.gmra.mxu0 %v3092
        %v4082 = vpop.f32.mrf.mxu0
        %v4083 = vadd.f32 0.0, %v4082
        %v4084 = vpop.f32.mrf.mxu0
        %v4085 = vadd.f32 0.0, %v4084
        %4086 = vmatmul.bf16.gmra.mxu0 %v3093
        %v4087 = vpop.f32.mrf.mxu0
        %v4088 = vadd.f32 0.0, %v4087
        %v4089 = vpop.f32.mrf.mxu0
        %v4090 = vadd.f32 0.0, %v4089
        %4091 = vmatmul.bf16.gmra.mxu0 %v3094
        %v4092 = vpop.f32.mrf.mxu0
        %v4093 = vadd.f32 0.0, %v4092
        %v4094 = vpop.f32.mrf.mxu0
        %v4095 = vadd.f32 0.0, %v4094
        %4096 = vmatmul.bf16.gmra.mxu0 %v3095
        %v4097 = vpop.f32.mrf.mxu0
        %v4098 = vadd.f32 0.0, %v4097
        %v4099 = vpop.f32.mrf.mxu0
        %v4100 = vadd.f32 0.0, %v4099
        %4101 = vmatmul.bf16.gmra.mxu0 %v3992
        %v4102 = vpop.f32.mrf.mxu0
        %v4103 = vadd.f32 0.0, %v4102
        %v4104 = vpop.f32.mrf.mxu0
        %v4105 = vadd.f32 0.0, %v4104
        %4106 = vdwg.mxu0
        %v4107 = vadd.f32 %v3966, %v4068
        %v4108 = vadd.f32 %v3967, %v4070
        %v4109 = vadd.f32 %v3968, %v4073
        %v4110 = vadd.f32 %v3969, %v4075
        %v4111 = vadd.f32 %v3970, %v4078
        %v4112 = vadd.f32 %v3971, %v4080
        %v4113 = vadd.f32 %v3972, %v4083
        %v4114 = vadd.f32 %v3973, %v4085
        %v4115 = vadd.f32 %v3974, %v4088
        %v4116 = vadd.f32 %v3975, %v4090
        %v4117 = vadd.f32 %v3976, %v4093
        %v4118 = vadd.f32 %v3977, %v4095
        %v4119 = vadd.f32 %v3978, %v4098
        %v4120 = vadd.f32 %v3979, %v4100
        %v4121 = vadd.f32 %v3980, %v4103
        %v4122 = vadd.f32 %v3981, %v4105
        %v4123 = vmul.f32 %v4107, 0.083333336
        %v4124 = vmul.f32 %v4108, 0.083333336
        %v4125 = vmul.f32 %v4109, 0.083333336
        %v4126 = vmul.f32 %v4110, 0.083333336
        %v4127 = vmul.f32 %v4111, 0.083333336
        %v4128 = vmul.f32 %v4112, 0.083333336
        %v4129 = vmul.f32 %v4113, 0.083333336
        %v4130 = vmul.f32 %v4114, 0.083333336
        %v4131 = vmul.f32 %v4115, 0.083333336
        %v4132 = vmul.f32 %v4116, 0.083333336
        %v4133 = vmul.f32 %v4117, 0.083333336
        %v4134 = vmul.f32 %v4118, 0.083333336
        %v4135 = vmul.f32 %v4119, 0.083333336
        %v4136 = vmul.f32 %v4120, 0.083333336
        %v4137 = vmul.f32 %v4121, 0.083333336
        %v4138 = vmul.f32 %v4122, 0.083333336
        %v4139 = vld [vmem:[%s3] sm:$0x1]
        %v4141 = vperm.slane %v4139, 0
        %v4143 = vadd.f32 %v4123, %v4141
        %v4144 = vadd.f32 %v4124, %v4141
        %v4145 = vadd.f32 %v4125, %v4141
        %v4146 = vadd.f32 %v4126, %v4141
        %v4147 = vadd.f32 %v4127, %v4141
        %v4148 = vadd.f32 %v4128, %v4141
        %v4149 = vadd.f32 %v4129, %v4141
        %v4150 = vadd.f32 %v4130, %v4141
        %v4151 = vadd.f32 %v4131, %v4141
        %v4152 = vadd.f32 %v4132, %v4141
        %v4153 = vadd.f32 %v4133, %v4141
        %v4154 = vadd.f32 %v4134, %v4141
        %v4155 = vadd.f32 %v4135, %v4141
        %v4156 = vadd.f32 %v4136, %v4141
        %v4157 = vadd.f32 %v4137, %v4141
        %v4158 = vadd.f32 %v4138, %v4141
        %vm4159 = vcmp.ge.f32.partialorder %v4143, 0.0
        %vm4160 = vcmp.ge.f32.partialorder %v4144, 0.0
        %vm4161 = vcmp.ge.f32.partialorder %v4145, 0.0
        %vm4162 = vcmp.ge.f32.partialorder %v4146, 0.0
        %vm4163 = vcmp.ge.f32.partialorder %v4147, 0.0
        %vm4164 = vcmp.ge.f32.partialorder %v4148, 0.0
        %vm4165 = vcmp.ge.f32.partialorder %v4149, 0.0
        %vm4166 = vcmp.ge.f32.partialorder %v4150, 0.0
        %vm4167 = vcmp.ge.f32.partialorder %v4151, 0.0
        %vm4168 = vcmp.ge.f32.partialorder %v4152, 0.0
        %vm4169 = vcmp.ge.f32.partialorder %v4153, 0.0
        %vm4170 = vcmp.ge.f32.partialorder %v4154, 0.0
        %vm4171 = vcmp.ge.f32.partialorder %v4155, 0.0
        %vm4172 = vcmp.ge.f32.partialorder %v4156, 0.0
        %vm4173 = vcmp.ge.f32.partialorder %v4157, 0.0
        %vm4174 = vcmp.ge.f32.partialorder %v4158, 0.0
        %v4175 = vmul.f32 %v4143, 0.2
        %v4176 = vmul.f32 %v4144, 0.2
        %v4177 = vmul.f32 %v4145, 0.2
        %v4178 = vmul.f32 %v4146, 0.2
        %v4179 = vmul.f32 %v4147, 0.2
        %v4180 = vmul.f32 %v4148, 0.2
        %v4181 = vmul.f32 %v4149, 0.2
        %v4182 = vmul.f32 %v4150, 0.2
        %v4183 = vmul.f32 %v4151, 0.2
        %v4184 = vmul.f32 %v4152, 0.2
        %v4185 = vmul.f32 %v4153, 0.2
        %v4186 = vmul.f32 %v4154, 0.2
        %v4187 = vmul.f32 %v4155, 0.2
        %v4188 = vmul.f32 %v4156, 0.2
        %v4189 = vmul.f32 %v4157, 0.2
        %v4190 = vmul.f32 %v4158, 0.2
        %v4191 = vsel %vm4159, %v4143, %v4175
        %v4192 = vsel %vm4160, %v4144, %v4176
        %v4193 = vsel %vm4161, %v4145, %v4177
        %v4194 = vsel %vm4162, %v4146, %v4178
        %v4195 = vsel %vm4163, %v4147, %v4179
        %v4196 = vsel %vm4164, %v4148, %v4180
        %v4197 = vsel %vm4165, %v4149, %v4181
        %v4198 = vsel %vm4166, %v4150, %v4182
        %v4199 = vsel %vm4167, %v4151, %v4183
        %v4200 = vsel %vm4168, %v4152, %v4184
        %v4201 = vsel %vm4169, %v4153, %v4185
        %v4202 = vsel %vm4170, %v4154, %v4186
        %v4203 = vsel %vm4171, %v4155, %v4187
        %v4204 = vsel %vm4172, %v4156, %v4188
        %v4205 = vsel %vm4173, %v4157, %v4189
        %v4206 = vsel %vm4174, %v4158, %v4190
        %v4207 = vmul.f32 %v4191, 1.4142135
        %v4208 = vmul.f32 %v4192, 1.4142135
        %v4209 = vmul.f32 %v4193, 1.4142135
        %v4210 = vmul.f32 %v4194, 1.4142135
        %v4211 = vmul.f32 %v4195, 1.4142135
        %v4212 = vmul.f32 %v4196, 1.4142135
        %v4213 = vmul.f32 %v4197, 1.4142135
        %v4214 = vmul.f32 %v4198, 1.4142135
        %v4215 = vmul.f32 %v4199, 1.4142135
        %v4216 = vmul.f32 %v4200, 1.4142135
        %v4217 = vmul.f32 %v4201, 1.4142135
        %v4218 = vmul.f32 %v4202, 1.4142135
        %v4219 = vmul.f32 %v4203, 1.4142135
        %v4220 = vmul.f32 %v4204, 1.4142135
        %v4221 = vmul.f32 %v4205, 1.4142135
        %v4222 = vmul.f32 %v4206, 1.4142135
        %v4223 = vpack.c.bf16 %v4207, %v4207
        %v4224 = vpack.c.bf16 %v4208, %v4208
        %v4225 = vpack.c.bf16 %v4209, %v4209
        %v4226 = vpack.c.bf16 %v4210, %v4210
        %v4227 = vpack.c.bf16 %v4211, %v4211
        %v4228 = vpack.c.bf16 %v4212, %v4212
        %v4229 = vpack.c.bf16 %v4213, %v4213
        %v4230 = vpack.c.bf16 %v4214, %v4214
        %v4231 = vpack.c.bf16 %v4215, %v4215
        %v4232 = vpack.c.bf16 %v4216, %v4216
        %v4233 = vpack.c.bf16 %v4217, %v4217
        %v4234 = vpack.c.bf16 %v4218, %v4218
        %v4235 = vpack.c.bf16 %v4219, %v4219
        %v4236 = vpack.c.bf16 %v4220, %v4220
        %v4237 = vpack.c.bf16 %v4221, %v4221
        %v4238 = vpack.c.bf16 %v4222, %v4222
        %4239 = vst [vmem:[%s690] sm:$0xf] %v4223
        %4240 = vst [vmem:[%s690 + $0x4] sm:$0xf] %v4224
        %4241 = vst [vmem:[%s690 + $0x8] sm:$0xf] %v4225
        %4242 = vst [vmem:[%s690 + $0xc] sm:$0xf] %v4226
        %4243 = vst [vmem:[%s690 + $0x10] sm:$0xf] %v4227
        %4244 = vst [vmem:[%s690 + $0x14] sm:$0xf] %v4228
        %4245 = vst [vmem:[%s690 + $0x18] sm:$0xf] %v4229
        %4246 = vst [vmem:[%s690 + $0x1c] sm:$0xf] %v4230
        %4247 = vst [vmem:[%s690 + $0x20] sm:$0xf] %v4231
        %4248 = vst [vmem:[%s690 + $0x24] sm:$0xf] %v4232
        %4249 = vst [vmem:[%s690 + $0x28] sm:$0xf] %v4233
        %4250 = vst [vmem:[%s690 + $0x2c] sm:$0xf] %v4234
        %4251 = vst [vmem:[%s690 + $0x30] sm:$0xf] %v4235
        %4252 = vst [vmem:[%s690 + $0x34] sm:$0xf] %v4236
        %4253 = vst [vmem:[%s690 + $0x38] sm:$0xf] %v4237
        %4254 = vst [vmem:[%s690 + $0x3c] sm:$0xf] %v4238
        %s4255 = smul.u32 8, %s20
        %p4256 = scmp.lt.s32.totalorder %s19, 1
        %s4257 = scalar_select %p4256, %s19, 1
        %p4258 = scmp.lt.s32.totalorder %s4255, 15
        %s4259 = scalar_select %p4258, %s4255, 15
        %s4260 = smul.addr %s4259, 2
        %s4261 = smul.addr %s4257, 32
        %s4262 = sadd.s32 %s4260, %s4261
        %s4263 = smul.addr %s4262, 4
        %s4264 = scalar_lea.vmem %s4, %s4263
        // Predicated region
        $region140: #{encoder_wiflow_forward.3} parent=130 // pred_check
          %p4265 = pneg %p149
        $region141: #{encoder_wiflow_forward.3} parent=130 // pred_check_branch
          %4267 = sbr.rel (%p4265) target = $region143
        $region142: #{encoder_wiflow_forward.3} parent=130 // pred_region
          %s4268 = smul.u32 8, %s20
        $region143: #{encoder_wiflow_forward.3} parent=130 // pred_fallthru
          _
      $region131: #{encoder_wiflow_forward.3} parent=5 // pred_fallthru
        _
      %p4269 = scmp.le.s32.totalorder 2, %s10
      // Predicated region
      $region144: #{encoder_wiflow_forward.3} parent=5 // pred_check
        %p4270 = pneg %p4269
      $region145: #{encoder_wiflow_forward.3} parent=5 // pred_check_branch
        %4272 = sbr.rel (%p4270) target = $region147
      $region146: #{encoder_wiflow_forward.3} parent=5 // pred_region
        %s4273 = ssub.s32 %s10, 2
        // Predicated region
        $region148: #{encoder_wiflow_forward.3} parent=146 // pred_check
          %p4274 = pneg %p155
        $region149: #{encoder_wiflow_forward.3} parent=146 // pred_check_branch
          %4276 = sbr.rel (%p4274) target = $region151
        $region150: #{encoder_wiflow_forward.3} parent=146 // pred_region
          %s4277 = smul.u32 8, %s22
          %p4278 = scmp.lt.s32.totalorder %s21, 1
          %s4279 = scalar_select %p4278, %s21, 1
          %p4280 = scmp.lt.s32.totalorder %s4277, 15
          %s4281 = scalar_select %p4280, %s4277, 15
          %s4282 = smul.addr %s4281, 2
          %s4283 = smul.addr %s4279, 32
          %s4284 = sadd.s32 %s4282, %s4283
          %s4285 = smul.addr %s4284, 4
          %s4286 = scalar_lea.vmem %s4, %s4285
        $region151: #{encoder_wiflow_forward.3} parent=146 // pred_fallthru
          _
      $region147: #{encoder_wiflow_forward.3} parent=5 // pred_fallthru
        _
    $region6: #{encoder_wiflow_forward.3} parent=1 // loop_footer
      %s14 = sadd.s32 1, %s10
    $region7: #{encoder_wiflow_forward.3} parent=1 // loop_footer_branch
      %9 = sbr.rel target = $region3
    $region8: #{encoder_wiflow_forward.3} parent=1 // loop_exit
      _

</llo_original>
